<compile_context>
chip_gen: v5e
topology: v5e:2x2
jax: 0.10.0
libtpu: 0.0.40
codegen_flags: <defaults>
</compile_context>

<pallas_src>
import functools

import jax
import jax.numpy as jnp
from jax import lax
from jax.experimental import pallas as pl
from jax.experimental.pallas import tpu as pltpu


# ------------------------------- Pallas kernel -------------------------------

def _fused_atari_kernel(x_ref, m1_ref, b1r_ref, m2_ref, b2r_ref,
                        wf1_ref, bf1_ref, whead_ref, bhead_ref, o_ref):
    # conv1 (folded to dense matmul) + ReLU : [bn,1024] @ [1024,900] -> [bn,900]
    c1 = jnp.dot(x_ref[...], m1_ref[...], preferred_element_type=jnp.float32)
    c1 = jnp.maximum(c1 + b1r_ref[...], 0.0)
    # conv2 (folded to dense matmul) + ReLU : [bn,900] @ [900,288] -> [bn,288]
    c2 = jnp.dot(c1, m2_ref[...], preferred_element_type=jnp.float32)
    c2 = jnp.maximum(c2 + b2r_ref[...], 0.0)
    # fc1 + ReLU : [bn,288] @ [288,64] -> [bn,64]
    h = jnp.dot(c2, wf1_ref[...], preferred_element_type=jnp.float32)
    h = jnp.maximum(h + bf1_ref[...], 0.0)
    # fused fcx|fcy head, zero-padded to 128 lanes : [bn,64] @ [64,128] -> [bn,128]
    o_ref[...] = jnp.dot(h, whead_ref[...], preferred_element_type=jnp.float32) + bhead_ref[...]


# --------------------------- one-time weight packing --------------------------

def _round_up(x, m):
    return (x + m - 1) // m * m


def pack_params(params):
    """Pack PyTorch-layout params into matmul-ready, lane-major f32 tiles.

    Done ONCE outside the hot path.  Convolutions are converted to dense
    matrices by pushing an identity basis through the (bias-free) conv, so the
    flatten order of every intermediate matches torch's (C, H, W) .view()."""
    (w1, b1), (w2, b2), (wf1, bf1), (wfx, bfx), (wfy, bfy) = params
    dn = ('NCHW', 'OIHW', 'NCHW')
    hp = lax.Precision.HIGHEST  # exact f32 weight extraction

    # conv1: Conv2d(1, 4, 4, stride=2) on 32x32 -> 4x15x15
    eye1 = jnp.eye(32 * 32, dtype=jnp.float32).reshape(32 * 32, 1, 32, 32)
    m1 = lax.conv_general_dilated(eye1, w1, (2, 2), 'VALID',
                                  dimension_numbers=dn, precision=hp)
    m1 = m1.reshape(32 * 32, 4 * 15 * 15)                     # [1024, 900]
    b1r = jnp.repeat(b1, 15 * 15)[None, :]                    # [1, 900]

    # conv2: Conv2d(4, 8, 4, stride=2) on 4x15x15 -> 8x6x6
    eye2 = jnp.eye(4 * 15 * 15, dtype=jnp.float32).reshape(4 * 15 * 15, 4, 15, 15)
    m2 = lax.conv_general_dilated(eye2, w2, (2, 2), 'VALID',
                                  dimension_numbers=dn, precision=hp)
    m2 = m2.reshape(4 * 15 * 15, 8 * 6 * 6)                   # [900, 288]
    b2r = jnp.repeat(b2, 6 * 6)[None, :]                      # [1, 288]

    # fc1 (input order is torch (C,H,W) flatten == our column order, so no permute)
    wf1m = wf1.T                                              # [288, 64]
    bf1r = bf1[None, :]                                       # [1, 64]

    # fused fcx | fcy head, zero-padded to a lane-dense 128-wide output
    whead = jnp.concatenate([wfx.T, wfy.T], axis=1)           # [64, 64]
    whead = jnp.pad(whead, ((0, 0), (0, 64)))                 # [64, 128]
    bhead = jnp.pad(jnp.concatenate([bfx, bfy])[None, :], ((0, 0), (0, 64)))  # [1, 128]

    return tuple(jnp.asarray(a, jnp.float32)
                 for a in (m1, b1r, m2, b2r, wf1m, bf1r, whead, bhead))


# --------------------------------- forward -----------------------------------

def atari_net_forward(x, packed):
    """x: [N, 1, 32, 32] float32 (NCHW).  Returns [N, 64]."""
    m1, b1r, m2, b2r, wf1m, bf1r, whead, bhead = packed
    N = x.shape[0]
    x_flat = x.reshape(N, 32 * 32)                 # (C=1,H,W) flatten, layout-free

    # Batch blocking: pad N up so the sublane dim is a multiple of 8; large
    # batches are split into 256-sample blocks on a parallel grid axis.
    bn = 256 if N >= 256 else _round_up(max(N, 1), 8)
    n_pad = _round_up(N, bn)
    if n_pad != N:
        x_flat = jnp.pad(x_flat, ((0, n_pad - N), (0, 0)))
    grid = (n_pad // bn,)

    flops = 2 * n_pad * (1024 * 900 + 900 * 288 + 288 * 64 + 64 * 128)
    bytes_accessed = 4 * (n_pad * 1024 + n_pad * 128
                          + 1024 * 900 + 900 + 900 * 288 + 288
                          + 288 * 64 + 64 + 64 * 128 + 128)

    out = pl.pallas_call(
        _fused_atari_kernel,
        out_shape=jax.ShapeDtypeStruct((n_pad, 128), jnp.float32),
        grid=grid,
        in_specs=[
            pl.BlockSpec((bn, 1024), lambda i: (i, 0)),     # x block (batch-tiled)
            pl.BlockSpec((1024, 900), lambda i: (0, 0)),    # conv1 dense matrix
            pl.BlockSpec((1, 900), lambda i: (0, 0)),       # conv1 bias row
            pl.BlockSpec((900, 288), lambda i: (0, 0)),     # conv2 dense matrix
            pl.BlockSpec((1, 288), lambda i: (0, 0)),       # conv2 bias row
            pl.BlockSpec((288, 64), lambda i: (0, 0)),      # fc1 weight
            pl.BlockSpec((1, 64), lambda i: (0, 0)),        # fc1 bias
            pl.BlockSpec((64, 128), lambda i: (0, 0)),      # fused fcx|fcy weight (padded)
            pl.BlockSpec((1, 128), lambda i: (0, 0)),       # fused fcx|fcy bias (padded)
        ],
        out_specs=pl.BlockSpec((bn, 128), lambda i: (i, 0)),
        compiler_params=pltpu.CompilerParams(
            dimension_semantics=("parallel",),
            vmem_limit_bytes=32 * 1024 * 1024,
        ),
        cost_estimate=pl.CostEstimate(flops=flops, transcendentals=0,
                                      bytes_accessed=bytes_accessed),
    )(x_flat, m1, b1r, m2, b2r, wf1m, bf1r, whead, bhead)

    return out[:N, :64]


# ----------------------------- reference (JAX) --------------------------------

def atari_net_reference(x, params):
    (w1, b1), (w2, b2), (wf1, bf1), (wfx, bfx), (wfy, bfy) = params
    dn = ('NCHW', 'OIHW', 'NCHW')
    hp = lax.Precision.HIGHEST
    c1 = lax.conv_general_dilated(x, w1, (2, 2), 'VALID', dimension_numbers=dn, precision=hp)
    c1 = jnp.maximum(c1 + b1[None, :, None, None], 0.0)
    c2 = lax.conv_general_dilated(c1, w2, (2, 2), 'VALID', dimension_numbers=dn, precision=hp)
    c2 = jnp.maximum(c2 + b2[None, :, None, None], 0.0)
    flat = c2.reshape(x.shape[0], -1)
    h = jnp.maximum(jnp.dot(flat, wf1.T, precision=hp) + bf1, 0.0)
    xx = jnp.dot(h, wfx.T, precision=hp) + bfx
    xy = jnp.dot(h, wfy.T, precision=hp) + bfy
    return jnp.concatenate([xx, xy], axis=1)


# ---------------------------------- params ------------------------------------

def init_params(key):
    ks = jax.random.split(key, 10)

    def w(k, shape, fan_in):
        return (jax.random.normal(k, shape, jnp.float32) / jnp.sqrt(fan_in)).astype(jnp.float32)

    return (
        (w(ks[0], (4, 1, 4, 4), 16),   w(ks[1], (4,), 16)),      # conv1
        (w(ks[2], (8, 4, 4, 4), 64),   w(ks[3], (8,), 64)),      # conv2
        (w(ks[4], (64, 288), 288),     w(ks[5], (64,), 288)),    # fc1
        (w(ks[6], (32, 64), 64),       w(ks[7], (32,), 64)),     # fcx
        (w(ks[8], (32, 64), 64),       w(ks[9], (32,), 64)),     # fcy
    )


if __name__ == "__main__":
    key = jax.random.PRNGKey(0)
    kx, kp = jax.random.split(key)
    # AtariNet(dim=32) expects 1-channel 32x32 inputs (NCHW).
    x = jax.random.normal(kx, (2, 1, 32, 32), jnp.float32)
    params = init_params(kp)

    packed = pack_params(params)                  # one-time packing, outside the hot path
    fwd = jax.jit(atari_net_forward)
    out = jax.block_until_ready(fwd(x, packed))

    ref = atari_net_reference(x, params)
    assert out.shape == (2, 64), out.shape
    max_err = float(jnp.max(jnp.abs(out - ref)))
    assert jnp.allclose(out, ref, atol=1e-3, rtol=1e-3), max_err
    print("KERNEL_OK")
</pallas_src>

<mosaic_0001>
module attributes {stable_mosaic.version = 11 : i64} {
  func.func @_fused_atari_kernel(%arg0: i32, %arg1: memref<8x1024xf32, #tpu.memory_space<vmem>>, %arg2: memref<1024x900xf32, #tpu.memory_space<vmem>>, %arg3: memref<1x900xf32, #tpu.memory_space<vmem>>, %arg4: memref<900x288xf32, #tpu.memory_space<vmem>>, %arg5: memref<1x288xf32, #tpu.memory_space<vmem>>, %arg6: memref<288x64xf32, #tpu.memory_space<vmem>>, %arg7: memref<1x64xf32, #tpu.memory_space<vmem>>, %arg8: memref<64x128xf32, #tpu.memory_space<vmem>>, %arg9: memref<1x128xf32, #tpu.memory_space<vmem>>, %arg10: memref<8x128xf32, #tpu.memory_space<vmem>>) attributes {dimension_semantics = [#tpu.dimension_semantics<parallel>], iteration_bounds = array<i64: 1>, scalar_prefetch = 0 : i64, scratch_operands = 0 : i64, tpu.core_type = #tpu.core_type<tc>, window_params = [{transform_indices = @transform_0, window_bounds = array<i64: 8, 1024>}, {pipeline_mode = #tpu.pipeline_mode<synchronous>, transform_indices = @transform_1, window_bounds = array<i64: 1024, 900>}, {pipeline_mode = #tpu.pipeline_mode<synchronous>, transform_indices = @transform_2, window_bounds = array<i64: 1, 900>}, {pipeline_mode = #tpu.pipeline_mode<synchronous>, transform_indices = @transform_3, window_bounds = array<i64: 900, 288>}, {pipeline_mode = #tpu.pipeline_mode<synchronous>, transform_indices = @transform_4, window_bounds = array<i64: 1, 288>}, {pipeline_mode = #tpu.pipeline_mode<synchronous>, transform_indices = @transform_5, window_bounds = array<i64: 288, 64>}, {pipeline_mode = #tpu.pipeline_mode<synchronous>, transform_indices = @transform_6, window_bounds = array<i64: 1, 64>}, {pipeline_mode = #tpu.pipeline_mode<synchronous>, transform_indices = @transform_7, window_bounds = array<i64: 64, 128>}, {pipeline_mode = #tpu.pipeline_mode<synchronous>, transform_indices = @transform_8, window_bounds = array<i64: 1, 128>}, {transform_indices = @transform_9, window_bounds = array<i64: 8, 128>}]} {
    %c0 = arith.constant 0 : index
    %c0_0 = arith.constant 0 : index
    %0 = vector.load %arg1[%c0, %c0_0] : memref<8x1024xf32, #tpu.memory_space<vmem>>, vector<8x1024xf32>
    %c0_1 = arith.constant 0 : index
    %c0_2 = arith.constant 0 : index
    %1 = vector.load %arg2[%c0_1, %c0_2] : memref<1024x900xf32, #tpu.memory_space<vmem>>, vector<1024x900xf32>
    %cst = arith.constant dense<0.000000e+00> : vector<8x900xf32>
    %2 = tpu.matmul %0, %1, %cst {dimension_numbers = #tpu.dot_dimension_numbers<[1], [0], [0], [1], [0, 0, 1, 1], [], []>} : vector<8x1024xf32>, vector<1024x900xf32>, vector<8x900xf32> -> vector<8x900xf32>
    %c0_3 = arith.constant 0 : index
    %c0_4 = arith.constant 0 : index
    %3 = vector.load %arg3[%c0_3, %c0_4] : memref<1x900xf32, #tpu.memory_space<vmem>>, vector<1x900xf32>
    %4 = vector.broadcast %3 : vector<1x900xf32> to vector<8x900xf32>
    %5 = arith.addf %2, %4 : vector<8x900xf32>
    %cst_5 = arith.constant 0.000000e+00 : f32
    %6 = vector.broadcast %cst_5 : f32 to vector<8x900xf32>
    %7 = arith.maximumf %5, %6 : vector<8x900xf32>
    %c0_6 = arith.constant 0 : index
    %c0_7 = arith.constant 0 : index
    %8 = vector.load %arg4[%c0_6, %c0_7] : memref<900x288xf32, #tpu.memory_space<vmem>>, vector<900x288xf32>
    %cst_8 = arith.constant dense<0.000000e+00> : vector<8x288xf32>
    %9 = tpu.matmul %7, %8, %cst_8 {dimension_numbers = #tpu.dot_dimension_numbers<[1], [0], [0], [1], [0, 0, 1, 1], [], []>} : vector<8x900xf32>, vector<900x288xf32>, vector<8x288xf32> -> vector<8x288xf32>
    %c0_9 = arith.constant 0 : index
    %c0_10 = arith.constant 0 : index
    %10 = vector.load %arg5[%c0_9, %c0_10] : memref<1x288xf32, #tpu.memory_space<vmem>>, vector<1x288xf32>
    %11 = vector.broadcast %10 : vector<1x288xf32> to vector<8x288xf32>
    %12 = arith.addf %9, %11 : vector<8x288xf32>
    %cst_11 = arith.constant 0.000000e+00 : f32
    %13 = vector.broadcast %cst_11 : f32 to vector<8x288xf32>
    %14 = arith.maximumf %12, %13 : vector<8x288xf32>
    %c0_12 = arith.constant 0 : index
    %c0_13 = arith.constant 0 : index
    %15 = vector.load %arg6[%c0_12, %c0_13] : memref<288x64xf32, #tpu.memory_space<vmem>>, vector<288x64xf32>
    %cst_14 = arith.constant dense<0.000000e+00> : vector<8x64xf32>
    %16 = tpu.matmul %14, %15, %cst_14 {dimension_numbers = #tpu.dot_dimension_numbers<[1], [0], [0], [1], [0, 0, 1, 1], [], []>} : vector<8x288xf32>, vector<288x64xf32>, vector<8x64xf32> -> vector<8x64xf32>
    %c0_15 = arith.constant 0 : index
    %c0_16 = arith.constant 0 : index
    %17 = vector.load %arg7[%c0_15, %c0_16] : memref<1x64xf32, #tpu.memory_space<vmem>>, vector<1x64xf32>
    %18 = vector.broadcast %17 : vector<1x64xf32> to vector<8x64xf32>
    %19 = arith.addf %16, %18 : vector<8x64xf32>
    %cst_17 = arith.constant 0.000000e+00 : f32
    %20 = vector.broadcast %cst_17 : f32 to vector<8x64xf32>
    %21 = arith.maximumf %19, %20 : vector<8x64xf32>
    %c0_18 = arith.constant 0 : index
    %c0_19 = arith.constant 0 : index
    %22 = vector.load %arg8[%c0_18, %c0_19] : memref<64x128xf32, #tpu.memory_space<vmem>>, vector<64x128xf32>
    %cst_20 = arith.constant dense<0.000000e+00> : vector<8x128xf32>
    %23 = tpu.matmul %21, %22, %cst_20 {dimension_numbers = #tpu.dot_dimension_numbers<[1], [0], [0], [1], [0, 0, 1, 1], [], []>} : vector<8x64xf32>, vector<64x128xf32>, vector<8x128xf32> -> vector<8x128xf32>
    %c0_21 = arith.constant 0 : index
    %c0_22 = arith.constant 0 : index
    %24 = vector.load %arg9[%c0_21, %c0_22] : memref<1x128xf32, #tpu.memory_space<vmem>>, vector<1x128xf32>
    %25 = vector.broadcast %24 : vector<1x128xf32> to vector<8x128xf32>
    %26 = arith.addf %23, %25 : vector<8x128xf32>
    %c0_23 = arith.constant 0 : index
    %c0_24 = arith.constant 0 : index
    %27 = vector.load %arg10[%c0_23, %c0_24] : memref<8x128xf32, #tpu.memory_space<vmem>>, vector<8x128xf32>
    tpu.vector_store %arg10[%c0_23, %c0_24], %26 {strides = array<i32>} : memref<8x128xf32, #tpu.memory_space<vmem>>, vector<8x128xf32>,
    return
  }
  func.func @transform_0(%arg0: i32) -> (i32, i32) {
    %c0_i32 = arith.constant 0 : i32
    %c0_i32_0 = arith.constant 0 : i32
    return %arg0, %c0_i32 : i32, i32
  }
  func.func @transform_1(%arg0: i32) -> (i32, i32) {
    %c0_i32 = arith.constant 0 : i32
    %c0_i32_0 = arith.constant 0 : i32
    %c0_i32_1 = arith.constant 0 : i32
    return %c0_i32, %c0_i32_0 : i32, i32
  }
  func.func @transform_2(%arg0: i32) -> (i32, i32) {
    %c0_i32 = arith.constant 0 : i32
    %c0_i32_0 = arith.constant 0 : i32
    %c0_i32_1 = arith.constant 0 : i32
    return %c0_i32, %c0_i32_0 : i32, i32
  }
  func.func @transform_3(%arg0: i32) -> (i32, i32) {
    %c0_i32 = arith.constant 0 : i32
    %c0_i32_0 = arith.constant 0 : i32
    %c0_i32_1 = arith.constant 0 : i32
    return %c0_i32, %c0_i32_0 : i32, i32
  }
  func.func @transform_4(%arg0: i32) -> (i32, i32) {
    %c0_i32 = arith.constant 0 : i32
    %c0_i32_0 = arith.constant 0 : i32
    %c0_i32_1 = arith.constant 0 : i32
    return %c0_i32, %c0_i32_0 : i32, i32
  }
  func.func @transform_5(%arg0: i32) -> (i32, i32) {
    %c0_i32 = arith.constant 0 : i32
    %c0_i32_0 = arith.constant 0 : i32
    %c0_i32_1 = arith.constant 0 : i32
    return %c0_i32, %c0_i32_0 : i32, i32
  }
  func.func @transform_6(%arg0: i32) -> (i32, i32) {
    %c0_i32 = arith.constant 0 : i32
    %c0_i32_0 = arith.constant 0 : i32
    %c0_i32_1 = arith.constant 0 : i32
    return %c0_i32, %c0_i32_0 : i32, i32
  }
  func.func @transform_7(%arg0: i32) -> (i32, i32) {
    %c0_i32 = arith.constant 0 : i32
    %c0_i32_0 = arith.constant 0 : i32
    %c0_i32_1 = arith.constant 0 : i32
    return %c0_i32, %c0_i32_0 : i32, i32
  }
  func.func @transform_8(%arg0: i32) -> (i32, i32) {
    %c0_i32 = arith.constant 0 : i32
    %c0_i32_0 = arith.constant 0 : i32
    %c0_i32_1 = arith.constant 0 : i32
    return %c0_i32, %c0_i32_0 : i32, i32
  }
  func.func @transform_9(%arg0: i32) -> (i32, i32) {
    %c0_i32 = arith.constant 0 : i32
    %c0_i32_0 = arith.constant 0 : i32
    return %arg0, %c0_i32 : i32, i32
  }
}

</mosaic_0001>

<llo_original>
// kernel: atari_net_forward.1
$region0: #{atari_net_forward.1}
  #allocation0 [shape = 'u32[]', space=smem, size = 0x4, offset = 0x4, fixed_abs, tag = 'smem constant byte address 0x4 - core index']
  #allocation1 [shape = 'u32[72,128]{1,0:T(1,128)}', space=vmem, size = 0x9000, scoped, tag = 'internal scratch']
  %s0 = inlined_call_operand.vmem [shape: f32[8,1024], index: 0, kind: input, shape index: {}]
  %s1 = inlined_call_operand.vmem [shape: f32[1024,900], index: 1, kind: input, shape index: {}]
  %s2 = inlined_call_operand.vmem [shape: f32[1,900], index: 2, kind: input, shape index: {}]
  %s3 = inlined_call_operand.vmem [shape: f32[900,288], index: 3, kind: input, shape index: {}]
  %s4 = inlined_call_operand.vmem [shape: f32[1,288], index: 4, kind: input, shape index: {}]
  %s5 = inlined_call_operand.vmem [shape: f32[288,64], index: 5, kind: input, shape index: {}]
  %s6 = inlined_call_operand.vmem [shape: f32[1,64], index: 6, kind: input, shape index: {}]
  %s7 = inlined_call_operand.vmem [shape: f32[64,128], index: 7, kind: input, shape index: {}]
  %s8 = inlined_call_operand.vmem [shape: f32[1,128], index: 8, kind: input, shape index: {}]
  %s9 = inlined_call_operand.vmem [shape: f32[8,128], index: 9, kind: output, shape index: {}]
  %s10 = sld [smem:[#allocation0]]
  $region46: #{atari_net_forward.1} parent=0
    _
  %s12 = ssub.s32 1, %s10
  %s13 = scalar_select 0, %s12, %s10
  // Predicated region
  $region2: #{atari_net_forward.1} parent=0 // pred_check
    _
  $region3: #{atari_net_forward.1} parent=0 // pred_check_branch
    %15 = sbr.rel (0) target = $region5
  $region4: #{atari_net_forward.1} parent=0 // pred_region
    _
  $region5: #{atari_net_forward.1} parent=0 // pred_fallthru
    _
  // Predicated region
  $region6: #{atari_net_forward.1} parent=0 // pred_check
    _
  $region7: #{atari_net_forward.1} parent=0 // pred_check_branch
    %17 = sbr.rel (0) target = $region9
  $region8: #{atari_net_forward.1} parent=0 // pred_region
    _
  $region9: #{atari_net_forward.1} parent=0 // pred_fallthru
    _
  // Predicated region
  $region10: #{atari_net_forward.1} parent=0 // pred_check
    _
  $region11: #{atari_net_forward.1} parent=0 // pred_check_branch
    %19 = sbr.rel (0) target = $region13
  $region12: #{atari_net_forward.1} parent=0 // pred_region
    _
  $region13: #{atari_net_forward.1} parent=0 // pred_fallthru
    _
  // Predicated region
  $region14: #{atari_net_forward.1} parent=0 // pred_check
    _
  $region15: #{atari_net_forward.1} parent=0 // pred_check_branch
    %21 = sbr.rel (0) target = $region17
  $region16: #{atari_net_forward.1} parent=0 // pred_region
    _
  $region17: #{atari_net_forward.1} parent=0 // pred_fallthru
    _
  // Predicated region
  $region18: #{atari_net_forward.1} parent=0 // pred_check
    _
  $region19: #{atari_net_forward.1} parent=0 // pred_check_branch
    %23 = sbr.rel (0) target = $region21
  $region20: #{atari_net_forward.1} parent=0 // pred_region
    _
  $region21: #{atari_net_forward.1} parent=0 // pred_fallthru
    _
  // Predicated region
  $region22: #{atari_net_forward.1} parent=0 // pred_check
    _
  $region23: #{atari_net_forward.1} parent=0 // pred_check_branch
    %25 = sbr.rel (0) target = $region25
  $region24: #{atari_net_forward.1} parent=0 // pred_region
    _
  $region25: #{atari_net_forward.1} parent=0 // pred_fallthru
    _
  // Predicated region
  $region26: #{atari_net_forward.1} parent=0 // pred_check
    _
  $region27: #{atari_net_forward.1} parent=0 // pred_check_branch
    %27 = sbr.rel (0) target = $region29
  $region28: #{atari_net_forward.1} parent=0 // pred_region
    _
  $region29: #{atari_net_forward.1} parent=0 // pred_fallthru
    _
  // Predicated region
  $region30: #{atari_net_forward.1} parent=0 // pred_check
    _
  $region31: #{atari_net_forward.1} parent=0 // pred_check_branch
    %29 = sbr.rel (0) target = $region33
  $region32: #{atari_net_forward.1} parent=0 // pred_region
    _
  $region33: #{atari_net_forward.1} parent=0 // pred_fallthru
    _
  // Predicated region
  $region34: #{atari_net_forward.1} parent=0 // pred_check
    _
  $region35: #{atari_net_forward.1} parent=0 // pred_check_branch
    %31 = sbr.rel (0) target = $region37
  $region36: #{atari_net_forward.1} parent=0 // pred_region
    _
  $region37: #{atari_net_forward.1} parent=0 // pred_fallthru
    _
  %v32 = vld [vmem:[%s0] sm:$0xff]
  %v33 = vld [vmem:[%s0 + $0x8] sm:$0xff]
  %v34 = vld [vmem:[%s0 + $0x10] sm:$0xff]
  %v35 = vld [vmem:[%s0 + $0x18] sm:$0xff]
  %v36 = vld [vmem:[%s0 + $0x20] sm:$0xff]
  %v37 = vld [vmem:[%s0 + $0x28] sm:$0xff]
  %v38 = vld [vmem:[%s0 + $0x30] sm:$0xff]
  %v39 = vld [vmem:[%s0 + $0x38] sm:$0xff]
  %v40 = vld [vmem:[%s1] sm:$0xff]
  %v41 = vld [vmem:[%s1 + $0x8] sm:$0xff]
  %v42 = vld [vmem:[%s1 + $0x10] sm:$0xff]
  %v43 = vld [vmem:[%s1 + $0x18] sm:$0xff]
  %v44 = vld [vmem:[%s1 + $0x20] sm:$0xff]
  %v45 = vld [vmem:[%s1 + $0x28] sm:$0xff]
  %v46 = vld [vmem:[%s1 + $0x30] sm:$0xff]
  %v47 = vld [vmem:[%s1 + $0x38] sm:$0xff]
  %v48 = vld [vmem:[%s1 + $0x40] sm:$0xff]
  %v49 = vld [vmem:[%s1 + $0x48] sm:$0xff]
  %v50 = vld [vmem:[%s1 + $0x50] sm:$0xff]
  %v51 = vld [vmem:[%s1 + $0x58] sm:$0xff]
  %v52 = vld [vmem:[%s1 + $0x60] sm:$0xff]
  %v53 = vld [vmem:[%s1 + $0x68] sm:$0xff]
  %v54 = vld [vmem:[%s1 + $0x70] sm:$0xff]
  %v55 = vld [vmem:[%s1 + $0x78] sm:$0xff]
  %v56 = vld [vmem:[%s1 + $0x80] sm:$0xff]
  %v57 = vld [vmem:[%s1 + $0x88] sm:$0xff]
  %v58 = vld [vmem:[%s1 + $0x90] sm:$0xff]
  %v59 = vld [vmem:[%s1 + $0x98] sm:$0xff]
  %v60 = vld [vmem:[%s1 + $0xa0] sm:$0xff]
  %v61 = vld [vmem:[%s1 + $0xa8] sm:$0xff]
  %v62 = vld [vmem:[%s1 + $0xb0] sm:$0xff]
  %v63 = vld [vmem:[%s1 + $0xb8] sm:$0xff]
  %v64 = vld [vmem:[%s1 + $0xc0] sm:$0xff]
  %v65 = vld [vmem:[%s1 + $0xc8] sm:$0xff]
  %v66 = vld [vmem:[%s1 + $0xd0] sm:$0xff]
  %v67 = vld [vmem:[%s1 + $0xd8] sm:$0xff]
  %v68 = vld [vmem:[%s1 + $0xe0] sm:$0xff]
  %v69 = vld [vmem:[%s1 + $0xe8] sm:$0xff]
  %v70 = vld [vmem:[%s1 + $0xf0] sm:$0xff]
  %v71 = vld [vmem:[%s1 + $0xf8] sm:$0xff]
  %v72 = vld [vmem:[%s1 + $0x100] sm:$0xff]
  %v73 = vld [vmem:[%s1 + $0x108] sm:$0xff]
  %v74 = vld [vmem:[%s1 + $0x110] sm:$0xff]
  %v75 = vld [vmem:[%s1 + $0x118] sm:$0xff]
  %v76 = vld [vmem:[%s1 + $0x120] sm:$0xff]
  %v77 = vld [vmem:[%s1 + $0x128] sm:$0xff]
  %v78 = vld [vmem:[%s1 + $0x130] sm:$0xff]
  %v79 = vld [vmem:[%s1 + $0x138] sm:$0xff]
  %v80 = vld [vmem:[%s1 + $0x140] sm:$0xff]
  %v81 = vld [vmem:[%s1 + $0x148] sm:$0xff]
  %v82 = vld [vmem:[%s1 + $0x150] sm:$0xff]
  %v83 = vld [vmem:[%s1 + $0x158] sm:$0xff]
  %v84 = vld [vmem:[%s1 + $0x160] sm:$0xff]
  %v85 = vld [vmem:[%s1 + $0x168] sm:$0xff]
  %v86 = vld [vmem:[%s1 + $0x170] sm:$0xff]
  %v87 = vld [vmem:[%s1 + $0x178] sm:$0xff]
  %v88 = vld [vmem:[%s1 + $0x180] sm:$0xff]
  %v89 = vld [vmem:[%s1 + $0x188] sm:$0xff]
  %v90 = vld [vmem:[%s1 + $0x190] sm:$0xff]
  %v91 = vld [vmem:[%s1 + $0x198] sm:$0xff]
  %v92 = vld [vmem:[%s1 + $0x1a0] sm:$0xff]
  %v93 = vld [vmem:[%s1 + $0x1a8] sm:$0xff]
  %v94 = vld [vmem:[%s1 + $0x1b0] sm:$0xff]
  %v95 = vld [vmem:[%s1 + $0x1b8] sm:$0xff]
  %v96 = vld [vmem:[%s1 + $0x1c0] sm:$0xff]
  %v97 = vld [vmem:[%s1 + $0x1c8] sm:$0xff]
  %v98 = vld [vmem:[%s1 + $0x1d0] sm:$0xff]
  %v99 = vld [vmem:[%s1 + $0x1d8] sm:$0xff]
  %v100 = vld [vmem:[%s1 + $0x1e0] sm:$0xff]
  %v101 = vld [vmem:[%s1 + $0x1e8] sm:$0xff]
  %v102 = vld [vmem:[%s1 + $0x1f0] sm:$0xff]
  %v103 = vld [vmem:[%s1 + $0x1f8] sm:$0xff]
  %v104 = vld [vmem:[%s1 + $0x200] sm:$0xff]
  %v105 = vld [vmem:[%s1 + $0x208] sm:$0xff]
  %v106 = vld [vmem:[%s1 + $0x210] sm:$0xff]
  %v107 = vld [vmem:[%s1 + $0x218] sm:$0xff]
  %v108 = vld [vmem:[%s1 + $0x220] sm:$0xff]
  %v109 = vld [vmem:[%s1 + $0x228] sm:$0xff]
  %v110 = vld [vmem:[%s1 + $0x230] sm:$0xff]
  %v111 = vld [vmem:[%s1 + $0x238] sm:$0xff]
  %v112 = vld [vmem:[%s1 + $0x240] sm:$0xff]
  %v113 = vld [vmem:[%s1 + $0x248] sm:$0xff]
  %v114 = vld [vmem:[%s1 + $0x250] sm:$0xff]
  %v115 = vld [vmem:[%s1 + $0x258] sm:$0xff]
  %v116 = vld [vmem:[%s1 + $0x260] sm:$0xff]
  %v117 = vld [vmem:[%s1 + $0x268] sm:$0xff]
  %v118 = vld [vmem:[%s1 + $0x270] sm:$0xff]
  %v119 = vld [vmem:[%s1 + $0x278] sm:$0xff]
  %v120 = vld [vmem:[%s1 + $0x280] sm:$0xff]
  %v121 = vld [vmem:[%s1 + $0x288] sm:$0xff]
  %v122 = vld [vmem:[%s1 + $0x290] sm:$0xff]
  %v123 = vld [vmem:[%s1 + $0x298] sm:$0xff]
  %v124 = vld [vmem:[%s1 + $0x2a0] sm:$0xff]
  %v125 = vld [vmem:[%s1 + $0x2a8] sm:$0xff]
  %v126 = vld [vmem:[%s1 + $0x2b0] sm:$0xff]
  %v127 = vld [vmem:[%s1 + $0x2b8] sm:$0xff]
  %v128 = vld [vmem:[%s1 + $0x2c0] sm:$0xff]
  %v129 = vld [vmem:[%s1 + $0x2c8] sm:$0xff]
  %v130 = vld [vmem:[%s1 + $0x2d0] sm:$0xff]
  %v131 = vld [vmem:[%s1 + $0x2d8] sm:$0xff]
  %v132 = vld [vmem:[%s1 + $0x2e0] sm:$0xff]
  %v133 = vld [vmem:[%s1 + $0x2e8] sm:$0xff]
  %v134 = vld [vmem:[%s1 + $0x2f0] sm:$0xff]
  %v135 = vld [vmem:[%s1 + $0x2f8] sm:$0xff]
  %v136 = vld [vmem:[%s1 + $0x300] sm:$0xff]
  %v137 = vld [vmem:[%s1 + $0x308] sm:$0xff]
  %v138 = vld [vmem:[%s1 + $0x310] sm:$0xff]
  %v139 = vld [vmem:[%s1 + $0x318] sm:$0xff]
  %v140 = vld [vmem:[%s1 + $0x320] sm:$0xff]
  %v141 = vld [vmem:[%s1 + $0x328] sm:$0xff]
  %v142 = vld [vmem:[%s1 + $0x330] sm:$0xff]
  %v143 = vld [vmem:[%s1 + $0x338] sm:$0xff]
  %v144 = vld [vmem:[%s1 + $0x340] sm:$0xff]
  %v145 = vld [vmem:[%s1 + $0x348] sm:$0xff]
  %v146 = vld [vmem:[%s1 + $0x350] sm:$0xff]
  %v147 = vld [vmem:[%s1 + $0x358] sm:$0xff]
  %v148 = vld [vmem:[%s1 + $0x360] sm:$0xff]
  %v149 = vld [vmem:[%s1 + $0x368] sm:$0xff]
  %v150 = vld [vmem:[%s1 + $0x370] sm:$0xff]
  %v151 = vld [vmem:[%s1 + $0x378] sm:$0xff]
  %v152 = vld [vmem:[%s1 + $0x380] sm:$0xff]
  %v153 = vld [vmem:[%s1 + $0x388] sm:$0xff]
  %v154 = vld [vmem:[%s1 + $0x390] sm:$0xff]
  %v155 = vld [vmem:[%s1 + $0x398] sm:$0xff]
  %v156 = vld [vmem:[%s1 + $0x3a0] sm:$0xff]
  %v157 = vld [vmem:[%s1 + $0x3a8] sm:$0xff]
  %v158 = vld [vmem:[%s1 + $0x3b0] sm:$0xff]
  %v159 = vld [vmem:[%s1 + $0x3b8] sm:$0xff]
  %v160 = vld [vmem:[%s1 + $0x3c0] sm:$0xff]
  %v161 = vld [vmem:[%s1 + $0x3c8] sm:$0xff]
  %v162 = vld [vmem:[%s1 + $0x3d0] sm:$0xff]
  %v163 = vld [vmem:[%s1 + $0x3d8] sm:$0xff]
  %v164 = vld [vmem:[%s1 + $0x3e0] sm:$0xff]
  %v165 = vld [vmem:[%s1 + $0x3e8] sm:$0xff]
  %v166 = vld [vmem:[%s1 + $0x3f0] sm:$0xff]
  %v167 = vld [vmem:[%s1 + $0x3f8] sm:$0xff]
  %v168 = vld [vmem:[%s1 + $0x400] sm:$0xff]
  %v169 = vld [vmem:[%s1 + $0x408] sm:$0xff]
  %v170 = vld [vmem:[%s1 + $0x410] sm:$0xff]
  %v171 = vld [vmem:[%s1 + $0x418] sm:$0xff]
  %v172 = vld [vmem:[%s1 + $0x420] sm:$0xff]
  %v173 = vld [vmem:[%s1 + $0x428] sm:$0xff]
  %v174 = vld [vmem:[%s1 + $0x430] sm:$0xff]
  %v175 = vld [vmem:[%s1 + $0x438] sm:$0xff]
  %v176 = vld [vmem:[%s1 + $0x440] sm:$0xff]
  %v177 = vld [vmem:[%s1 + $0x448] sm:$0xff]
  %v178 = vld [vmem:[%s1 + $0x450] sm:$0xff]
  %v179 = vld [vmem:[%s1 + $0x458] sm:$0xff]
  %v180 = vld [vmem:[%s1 + $0x460] sm:$0xff]
  %v181 = vld [vmem:[%s1 + $0x468] sm:$0xff]
  %v182 = vld [vmem:[%s1 + $0x470] sm:$0xff]
  %v183 = vld [vmem:[%s1 + $0x478] sm:$0xff]
  %v184 = vld [vmem:[%s1 + $0x480] sm:$0xff]
  %v185 = vld [vmem:[%s1 + $0x488] sm:$0xff]
  %v186 = vld [vmem:[%s1 + $0x490] sm:$0xff]
  %v187 = vld [vmem:[%s1 + $0x498] sm:$0xff]
  %v188 = vld [vmem:[%s1 + $0x4a0] sm:$0xff]
  %v189 = vld [vmem:[%s1 + $0x4a8] sm:$0xff]
  %v190 = vld [vmem:[%s1 + $0x4b0] sm:$0xff]
  %v191 = vld [vmem:[%s1 + $0x4b8] sm:$0xff]
  %v192 = vld [vmem:[%s1 + $0x4c0] sm:$0xff]
  %v193 = vld [vmem:[%s1 + $0x4c8] sm:$0xff]
  %v194 = vld [vmem:[%s1 + $0x4d0] sm:$0xff]
  %v195 = vld [vmem:[%s1 + $0x4d8] sm:$0xff]
  %v196 = vld [vmem:[%s1 + $0x4e0] sm:$0xff]
  %v197 = vld [vmem:[%s1 + $0x4e8] sm:$0xff]
  %v198 = vld [vmem:[%s1 + $0x4f0] sm:$0xff]
  %v199 = vld [vmem:[%s1 + $0x4f8] sm:$0xff]
  %v200 = vld [vmem:[%s1 + $0x500] sm:$0xff]
  %v201 = vld [vmem:[%s1 + $0x508] sm:$0xff]
  %v202 = vld [vmem:[%s1 + $0x510] sm:$0xff]
  %v203 = vld [vmem:[%s1 + $0x518] sm:$0xff]
  %v204 = vld [vmem:[%s1 + $0x520] sm:$0xff]
  %v205 = vld [vmem:[%s1 + $0x528] sm:$0xff]
  %v206 = vld [vmem:[%s1 + $0x530] sm:$0xff]
  %v207 = vld [vmem:[%s1 + $0x538] sm:$0xff]
  %v208 = vld [vmem:[%s1 + $0x540] sm:$0xff]
  %v209 = vld [vmem:[%s1 + $0x548] sm:$0xff]
  %v210 = vld [vmem:[%s1 + $0x550] sm:$0xff]
  %v211 = vld [vmem:[%s1 + $0x558] sm:$0xff]
  %v212 = vld [vmem:[%s1 + $0x560] sm:$0xff]
  %v213 = vld [vmem:[%s1 + $0x568] sm:$0xff]
  %v214 = vld [vmem:[%s1 + $0x570] sm:$0xff]
  %v215 = vld [vmem:[%s1 + $0x578] sm:$0xff]
  %v216 = vld [vmem:[%s1 + $0x580] sm:$0xff]
  %v217 = vld [vmem:[%s1 + $0x588] sm:$0xff]
  %v218 = vld [vmem:[%s1 + $0x590] sm:$0xff]
  %v219 = vld [vmem:[%s1 + $0x598] sm:$0xff]
  %v220 = vld [vmem:[%s1 + $0x5a0] sm:$0xff]
  %v221 = vld [vmem:[%s1 + $0x5a8] sm:$0xff]
  %v222 = vld [vmem:[%s1 + $0x5b0] sm:$0xff]
  %v223 = vld [vmem:[%s1 + $0x5b8] sm:$0xff]
  %v224 = vld [vmem:[%s1 + $0x5c0] sm:$0xff]
  %v225 = vld [vmem:[%s1 + $0x5c8] sm:$0xff]
  %v226 = vld [vmem:[%s1 + $0x5d0] sm:$0xff]
  %v227 = vld [vmem:[%s1 + $0x5d8] sm:$0xff]
  %v228 = vld [vmem:[%s1 + $0x5e0] sm:$0xff]
  %v229 = vld [vmem:[%s1 + $0x5e8] sm:$0xff]
  %v230 = vld [vmem:[%s1 + $0x5f0] sm:$0xff]
  %v231 = vld [vmem:[%s1 + $0x5f8] sm:$0xff]
  %v232 = vld [vmem:[%s1 + $0x600] sm:$0xff]
  %v233 = vld [vmem:[%s1 + $0x608] sm:$0xff]
  %v234 = vld [vmem:[%s1 + $0x610] sm:$0xff]
  %v235 = vld [vmem:[%s1 + $0x618] sm:$0xff]
  %v236 = vld [vmem:[%s1 + $0x620] sm:$0xff]
  %v237 = vld [vmem:[%s1 + $0x628] sm:$0xff]
  %v238 = vld [vmem:[%s1 + $0x630] sm:$0xff]
  %v239 = vld [vmem:[%s1 + $0x638] sm:$0xff]
  %v240 = vld [vmem:[%s1 + $0x640] sm:$0xff]
  %v241 = vld [vmem:[%s1 + $0x648] sm:$0xff]
  %v242 = vld [vmem:[%s1 + $0x650] sm:$0xff]
  %v243 = vld [vmem:[%s1 + $0x658] sm:$0xff]
  %v244 = vld [vmem:[%s1 + $0x660] sm:$0xff]
  %v245 = vld [vmem:[%s1 + $0x668] sm:$0xff]
  %v246 = vld [vmem:[%s1 + $0x670] sm:$0xff]
  %v247 = vld [vmem:[%s1 + $0x678] sm:$0xff]
  %v248 = vld [vmem:[%s1 + $0x680] sm:$0xff]
  %v249 = vld [vmem:[%s1 + $0x688] sm:$0xff]
  %v250 = vld [vmem:[%s1 + $0x690] sm:$0xff]
  %v251 = vld [vmem:[%s1 + $0x698] sm:$0xff]
  %v252 = vld [vmem:[%s1 + $0x6a0] sm:$0xff]
  %v253 = vld [vmem:[%s1 + $0x6a8] sm:$0xff]
  %v254 = vld [vmem:[%s1 + $0x6b0] sm:$0xff]
  %v255 = vld [vmem:[%s1 + $0x6b8] sm:$0xff]
  %v256 = vld [vmem:[%s1 + $0x6c0] sm:$0xff]
  %v257 = vld [vmem:[%s1 + $0x6c8] sm:$0xff]
  %v258 = vld [vmem:[%s1 + $0x6d0] sm:$0xff]
  %v259 = vld [vmem:[%s1 + $0x6d8] sm:$0xff]
  %v260 = vld [vmem:[%s1 + $0x6e0] sm:$0xff]
  %v261 = vld [vmem:[%s1 + $0x6e8] sm:$0xff]
  %v262 = vld [vmem:[%s1 + $0x6f0] sm:$0xff]
  %v263 = vld [vmem:[%s1 + $0x6f8] sm:$0xff]
  %v264 = vld [vmem:[%s1 + $0x700] sm:$0xff]
  %v265 = vld [vmem:[%s1 + $0x708] sm:$0xff]
  %v266 = vld [vmem:[%s1 + $0x710] sm:$0xff]
  %v267 = vld [vmem:[%s1 + $0x718] sm:$0xff]
  %v268 = vld [vmem:[%s1 + $0x720] sm:$0xff]
  %v269 = vld [vmem:[%s1 + $0x728] sm:$0xff]
  %v270 = vld [vmem:[%s1 + $0x730] sm:$0xff]
  %v271 = vld [vmem:[%s1 + $0x738] sm:$0xff]
  %v272 = vld [vmem:[%s1 + $0x740] sm:$0xff]
  %v273 = vld [vmem:[%s1 + $0x748] sm:$0xff]
  %v274 = vld [vmem:[%s1 + $0x750] sm:$0xff]
  %v275 = vld [vmem:[%s1 + $0x758] sm:$0xff]
  %v276 = vld [vmem:[%s1 + $0x760] sm:$0xff]
  %v277 = vld [vmem:[%s1 + $0x768] sm:$0xff]
  %v278 = vld [vmem:[%s1 + $0x770] sm:$0xff]
  %v279 = vld [vmem:[%s1 + $0x778] sm:$0xff]
  %v280 = vld [vmem:[%s1 + $0x780] sm:$0xff]
  %v281 = vld [vmem:[%s1 + $0x788] sm:$0xff]
  %v282 = vld [vmem:[%s1 + $0x790] sm:$0xff]
  %v283 = vld [vmem:[%s1 + $0x798] sm:$0xff]
  %v284 = vld [vmem:[%s1 + $0x7a0] sm:$0xff]
  %v285 = vld [vmem:[%s1 + $0x7a8] sm:$0xff]
  %v286 = vld [vmem:[%s1 + $0x7b0] sm:$0xff]
  %v287 = vld [vmem:[%s1 + $0x7b8] sm:$0xff]
  %v288 = vld [vmem:[%s1 + $0x7c0] sm:$0xff]
  %v289 = vld [vmem:[%s1 + $0x7c8] sm:$0xff]
  %v290 = vld [vmem:[%s1 + $0x7d0] sm:$0xff]
  %v291 = vld [vmem:[%s1 + $0x7d8] sm:$0xff]
  %v292 = vld [vmem:[%s1 + $0x7e0] sm:$0xff]
  %v293 = vld [vmem:[%s1 + $0x7e8] sm:$0xff]
  %v294 = vld [vmem:[%s1 + $0x7f0] sm:$0xff]
  %v295 = vld [vmem:[%s1 + $0x7f8] sm:$0xff]
  %v296 = vld [vmem:[%s1 + $0x800] sm:$0xff]
  %v297 = vld [vmem:[%s1 + $0x808] sm:$0xff]
  %v298 = vld [vmem:[%s1 + $0x810] sm:$0xff]
  %v299 = vld [vmem:[%s1 + $0x818] sm:$0xff]
  %v300 = vld [vmem:[%s1 + $0x820] sm:$0xff]
  %v301 = vld [vmem:[%s1 + $0x828] sm:$0xff]
  %v302 = vld [vmem:[%s1 + $0x830] sm:$0xff]
  %v303 = vld [vmem:[%s1 + $0x838] sm:$0xff]
  %v304 = vld [vmem:[%s1 + $0x840] sm:$0xff]
  %v305 = vld [vmem:[%s1 + $0x848] sm:$0xff]
  %v306 = vld [vmem:[%s1 + $0x850] sm:$0xff]
  %v307 = vld [vmem:[%s1 + $0x858] sm:$0xff]
  %v308 = vld [vmem:[%s1 + $0x860] sm:$0xff]
  %v309 = vld [vmem:[%s1 + $0x868] sm:$0xff]
  %v310 = vld [vmem:[%s1 + $0x870] sm:$0xff]
  %v311 = vld [vmem:[%s1 + $0x878] sm:$0xff]
  %v312 = vld [vmem:[%s1 + $0x880] sm:$0xff]
  %v313 = vld [vmem:[%s1 + $0x888] sm:$0xff]
  %v314 = vld [vmem:[%s1 + $0x890] sm:$0xff]
  %v315 = vld [vmem:[%s1 + $0x898] sm:$0xff]
  %v316 = vld [vmem:[%s1 + $0x8a0] sm:$0xff]
  %v317 = vld [vmem:[%s1 + $0x8a8] sm:$0xff]
  %v318 = vld [vmem:[%s1 + $0x8b0] sm:$0xff]
  %v319 = vld [vmem:[%s1 + $0x8b8] sm:$0xff]
  %v320 = vld [vmem:[%s1 + $0x8c0] sm:$0xff]
  %v321 = vld [vmem:[%s1 + $0x8c8] sm:$0xff]
  %v322 = vld [vmem:[%s1 + $0x8d0] sm:$0xff]
  %v323 = vld [vmem:[%s1 + $0x8d8] sm:$0xff]
  %v324 = vld [vmem:[%s1 + $0x8e0] sm:$0xff]
  %v325 = vld [vmem:[%s1 + $0x8e8] sm:$0xff]
  %v326 = vld [vmem:[%s1 + $0x8f0] sm:$0xff]
  %v327 = vld [vmem:[%s1 + $0x8f8] sm:$0xff]
  %v328 = vld [vmem:[%s1 + $0x900] sm:$0xff]
  %v329 = vld [vmem:[%s1 + $0x908] sm:$0xff]
  %v330 = vld [vmem:[%s1 + $0x910] sm:$0xff]
  %v331 = vld [vmem:[%s1 + $0x918] sm:$0xff]
  %v332 = vld [vmem:[%s1 + $0x920] sm:$0xff]
  %v333 = vld [vmem:[%s1 + $0x928] sm:$0xff]
  %v334 = vld [vmem:[%s1 + $0x930] sm:$0xff]
  %v335 = vld [vmem:[%s1 + $0x938] sm:$0xff]
  %v336 = vld [vmem:[%s1 + $0x940] sm:$0xff]
  %v337 = vld [vmem:[%s1 + $0x948] sm:$0xff]
  %v338 = vld [vmem:[%s1 + $0x950] sm:$0xff]
  %v339 = vld [vmem:[%s1 + $0x958] sm:$0xff]
  %v340 = vld [vmem:[%s1 + $0x960] sm:$0xff]
  %v341 = vld [vmem:[%s1 + $0x968] sm:$0xff]
  %v342 = vld [vmem:[%s1 + $0x970] sm:$0xff]
  %v343 = vld [vmem:[%s1 + $0x978] sm:$0xff]
  %v344 = vld [vmem:[%s1 + $0x980] sm:$0xff]
  %v345 = vld [vmem:[%s1 + $0x988] sm:$0xff]
  %v346 = vld [vmem:[%s1 + $0x990] sm:$0xff]
  %v347 = vld [vmem:[%s1 + $0x998] sm:$0xff]
  %v348 = vld [vmem:[%s1 + $0x9a0] sm:$0xff]
  %v349 = vld [vmem:[%s1 + $0x9a8] sm:$0xff]
  %v350 = vld [vmem:[%s1 + $0x9b0] sm:$0xff]
  %v351 = vld [vmem:[%s1 + $0x9b8] sm:$0xff]
  %v352 = vld [vmem:[%s1 + $0x9c0] sm:$0xff]
  %v353 = vld [vmem:[%s1 + $0x9c8] sm:$0xff]
  %v354 = vld [vmem:[%s1 + $0x9d0] sm:$0xff]
  %v355 = vld [vmem:[%s1 + $0x9d8] sm:$0xff]
  %v356 = vld [vmem:[%s1 + $0x9e0] sm:$0xff]
  %v357 = vld [vmem:[%s1 + $0x9e8] sm:$0xff]
  %v358 = vld [vmem:[%s1 + $0x9f0] sm:$0xff]
  %v359 = vld [vmem:[%s1 + $0x9f8] sm:$0xff]
  %v360 = vld [vmem:[%s1 + $0xa00] sm:$0xff]
  %v361 = vld [vmem:[%s1 + $0xa08] sm:$0xff]
  %v362 = vld [vmem:[%s1 + $0xa10] sm:$0xff]
  %v363 = vld [vmem:[%s1 + $0xa18] sm:$0xff]
  %v364 = vld [vmem:[%s1 + $0xa20] sm:$0xff]
  %v365 = vld [vmem:[%s1 + $0xa28] sm:$0xff]
  %v366 = vld [vmem:[%s1 + $0xa30] sm:$0xff]
  %v367 = vld [vmem:[%s1 + $0xa38] sm:$0xff]
  %v368 = vld [vmem:[%s1 + $0xa40] sm:$0xff]
  %v369 = vld [vmem:[%s1 + $0xa48] sm:$0xff]
  %v370 = vld [vmem:[%s1 + $0xa50] sm:$0xff]
  %v371 = vld [vmem:[%s1 + $0xa58] sm:$0xff]
  %v372 = vld [vmem:[%s1 + $0xa60] sm:$0xff]
  %v373 = vld [vmem:[%s1 + $0xa68] sm:$0xff]
  %v374 = vld [vmem:[%s1 + $0xa70] sm:$0xff]
  %v375 = vld [vmem:[%s1 + $0xa78] sm:$0xff]
  %v376 = vld [vmem:[%s1 + $0xa80] sm:$0xff]
  %v377 = vld [vmem:[%s1 + $0xa88] sm:$0xff]
  %v378 = vld [vmem:[%s1 + $0xa90] sm:$0xff]
  %v379 = vld [vmem:[%s1 + $0xa98] sm:$0xff]
  %v380 = vld [vmem:[%s1 + $0xaa0] sm:$0xff]
  %v381 = vld [vmem:[%s1 + $0xaa8] sm:$0xff]
  %v382 = vld [vmem:[%s1 + $0xab0] sm:$0xff]
  %v383 = vld [vmem:[%s1 + $0xab8] sm:$0xff]
  %v384 = vld [vmem:[%s1 + $0xac0] sm:$0xff]
  %v385 = vld [vmem:[%s1 + $0xac8] sm:$0xff]
  %v386 = vld [vmem:[%s1 + $0xad0] sm:$0xff]
  %v387 = vld [vmem:[%s1 + $0xad8] sm:$0xff]
  %v388 = vld [vmem:[%s1 + $0xae0] sm:$0xff]
  %v389 = vld [vmem:[%s1 + $0xae8] sm:$0xff]
  %v390 = vld [vmem:[%s1 + $0xaf0] sm:$0xff]
  %v391 = vld [vmem:[%s1 + $0xaf8] sm:$0xff]
  %v392 = vld [vmem:[%s1 + $0xb00] sm:$0xff]
  %v393 = vld [vmem:[%s1 + $0xb08] sm:$0xff]
  %v394 = vld [vmem:[%s1 + $0xb10] sm:$0xff]
  %v395 = vld [vmem:[%s1 + $0xb18] sm:$0xff]
  %v396 = vld [vmem:[%s1 + $0xb20] sm:$0xff]
  %v397 = vld [vmem:[%s1 + $0xb28] sm:$0xff]
  %v398 = vld [vmem:[%s1 + $0xb30] sm:$0xff]
  %v399 = vld [vmem:[%s1 + $0xb38] sm:$0xff]
  %v400 = vld [vmem:[%s1 + $0xb40] sm:$0xff]
  %v401 = vld [vmem:[%s1 + $0xb48] sm:$0xff]
  %v402 = vld [vmem:[%s1 + $0xb50] sm:$0xff]
  %v403 = vld [vmem:[%s1 + $0xb58] sm:$0xff]
  %v404 = vld [vmem:[%s1 + $0xb60] sm:$0xff]
  %v405 = vld [vmem:[%s1 + $0xb68] sm:$0xff]
  %v406 = vld [vmem:[%s1 + $0xb70] sm:$0xff]
  %v407 = vld [vmem:[%s1 + $0xb78] sm:$0xff]
  %v408 = vld [vmem:[%s1 + $0xb80] sm:$0xff]
  %v409 = vld [vmem:[%s1 + $0xb88] sm:$0xff]
  %v410 = vld [vmem:[%s1 + $0xb90] sm:$0xff]
  %v411 = vld [vmem:[%s1 + $0xb98] sm:$0xff]
  %v412 = vld [vmem:[%s1 + $0xba0] sm:$0xff]
  %v413 = vld [vmem:[%s1 + $0xba8] sm:$0xff]
  %v414 = vld [vmem:[%s1 + $0xbb0] sm:$0xff]
  %v415 = vld [vmem:[%s1 + $0xbb8] sm:$0xff]
  %v416 = vld [vmem:[%s1 + $0xbc0] sm:$0xff]
  %v417 = vld [vmem:[%s1 + $0xbc8] sm:$0xff]
  %v418 = vld [vmem:[%s1 + $0xbd0] sm:$0xff]
  %v419 = vld [vmem:[%s1 + $0xbd8] sm:$0xff]
  %v420 = vld [vmem:[%s1 + $0xbe0] sm:$0xff]
  %v421 = vld [vmem:[%s1 + $0xbe8] sm:$0xff]
  %v422 = vld [vmem:[%s1 + $0xbf0] sm:$0xff]
  %v423 = vld [vmem:[%s1 + $0xbf8] sm:$0xff]
  %v424 = vld [vmem:[%s1 + $0xc00] sm:$0xff]
  %v425 = vld [vmem:[%s1 + $0xc08] sm:$0xff]
  %v426 = vld [vmem:[%s1 + $0xc10] sm:$0xff]
  %v427 = vld [vmem:[%s1 + $0xc18] sm:$0xff]
  %v428 = vld [vmem:[%s1 + $0xc20] sm:$0xff]
  %v429 = vld [vmem:[%s1 + $0xc28] sm:$0xff]
  %v430 = vld [vmem:[%s1 + $0xc30] sm:$0xff]
  %v431 = vld [vmem:[%s1 + $0xc38] sm:$0xff]
  %v432 = vld [vmem:[%s1 + $0xc40] sm:$0xff]
  %v433 = vld [vmem:[%s1 + $0xc48] sm:$0xff]
  %v434 = vld [vmem:[%s1 + $0xc50] sm:$0xff]
  %v435 = vld [vmem:[%s1 + $0xc58] sm:$0xff]
  %v436 = vld [vmem:[%s1 + $0xc60] sm:$0xff]
  %v437 = vld [vmem:[%s1 + $0xc68] sm:$0xff]
  %v438 = vld [vmem:[%s1 + $0xc70] sm:$0xff]
  %v439 = vld [vmem:[%s1 + $0xc78] sm:$0xff]
  %v440 = vld [vmem:[%s1 + $0xc80] sm:$0xff]
  %v441 = vld [vmem:[%s1 + $0xc88] sm:$0xff]
  %v442 = vld [vmem:[%s1 + $0xc90] sm:$0xff]
  %v443 = vld [vmem:[%s1 + $0xc98] sm:$0xff]
  %v444 = vld [vmem:[%s1 + $0xca0] sm:$0xff]
  %v445 = vld [vmem:[%s1 + $0xca8] sm:$0xff]
  %v446 = vld [vmem:[%s1 + $0xcb0] sm:$0xff]
  %v447 = vld [vmem:[%s1 + $0xcb8] sm:$0xff]
  %v448 = vld [vmem:[%s1 + $0xcc0] sm:$0xff]
  %v449 = vld [vmem:[%s1 + $0xcc8] sm:$0xff]
  %v450 = vld [vmem:[%s1 + $0xcd0] sm:$0xff]
  %v451 = vld [vmem:[%s1 + $0xcd8] sm:$0xff]
  %v452 = vld [vmem:[%s1 + $0xce0] sm:$0xff]
  %v453 = vld [vmem:[%s1 + $0xce8] sm:$0xff]
  %v454 = vld [vmem:[%s1 + $0xcf0] sm:$0xff]
  %v455 = vld [vmem:[%s1 + $0xcf8] sm:$0xff]
  %v456 = vld [vmem:[%s1 + $0xd00] sm:$0xff]
  %v457 = vld [vmem:[%s1 + $0xd08] sm:$0xff]
  %v458 = vld [vmem:[%s1 + $0xd10] sm:$0xff]
  %v459 = vld [vmem:[%s1 + $0xd18] sm:$0xff]
  %v460 = vld [vmem:[%s1 + $0xd20] sm:$0xff]
  %v461 = vld [vmem:[%s1 + $0xd28] sm:$0xff]
  %v462 = vld [vmem:[%s1 + $0xd30] sm:$0xff]
  %v463 = vld [vmem:[%s1 + $0xd38] sm:$0xff]
  %v464 = vld [vmem:[%s1 + $0xd40] sm:$0xff]
  %v465 = vld [vmem:[%s1 + $0xd48] sm:$0xff]
  %v466 = vld [vmem:[%s1 + $0xd50] sm:$0xff]
  %v467 = vld [vmem:[%s1 + $0xd58] sm:$0xff]
  %v468 = vld [vmem:[%s1 + $0xd60] sm:$0xff]
  %v469 = vld [vmem:[%s1 + $0xd68] sm:$0xff]
  %v470 = vld [vmem:[%s1 + $0xd70] sm:$0xff]
  %v471 = vld [vmem:[%s1 + $0xd78] sm:$0xff]
  %v472 = vld [vmem:[%s1 + $0xd80] sm:$0xff]
  %v473 = vld [vmem:[%s1 + $0xd88] sm:$0xff]
  %v474 = vld [vmem:[%s1 + $0xd90] sm:$0xff]
  %v475 = vld [vmem:[%s1 + $0xd98] sm:$0xff]
  %v476 = vld [vmem:[%s1 + $0xda0] sm:$0xff]
  %v477 = vld [vmem:[%s1 + $0xda8] sm:$0xff]
  %v478 = vld [vmem:[%s1 + $0xdb0] sm:$0xff]
  %v479 = vld [vmem:[%s1 + $0xdb8] sm:$0xff]
  %v480 = vld [vmem:[%s1 + $0xdc0] sm:$0xff]
  %v481 = vld [vmem:[%s1 + $0xdc8] sm:$0xff]
  %v482 = vld [vmem:[%s1 + $0xdd0] sm:$0xff]
  %v483 = vld [vmem:[%s1 + $0xdd8] sm:$0xff]
  %v484 = vld [vmem:[%s1 + $0xde0] sm:$0xff]
  %v485 = vld [vmem:[%s1 + $0xde8] sm:$0xff]
  %v486 = vld [vmem:[%s1 + $0xdf0] sm:$0xff]
  %v487 = vld [vmem:[%s1 + $0xdf8] sm:$0xff]
  %v488 = vld [vmem:[%s1 + $0xe00] sm:$0xff]
  %v489 = vld [vmem:[%s1 + $0xe08] sm:$0xff]
  %v490 = vld [vmem:[%s1 + $0xe10] sm:$0xff]
  %v491 = vld [vmem:[%s1 + $0xe18] sm:$0xff]
  %v492 = vld [vmem:[%s1 + $0xe20] sm:$0xff]
  %v493 = vld [vmem:[%s1 + $0xe28] sm:$0xff]
  %v494 = vld [vmem:[%s1 + $0xe30] sm:$0xff]
  %v495 = vld [vmem:[%s1 + $0xe38] sm:$0xff]
  %v496 = vld [vmem:[%s1 + $0xe40] sm:$0xff]
  %v497 = vld [vmem:[%s1 + $0xe48] sm:$0xff]
  %v498 = vld [vmem:[%s1 + $0xe50] sm:$0xff]
  %v499 = vld [vmem:[%s1 + $0xe58] sm:$0xff]
  %v500 = vld [vmem:[%s1 + $0xe60] sm:$0xff]
  %v501 = vld [vmem:[%s1 + $0xe68] sm:$0xff]
  %v502 = vld [vmem:[%s1 + $0xe70] sm:$0xff]
  %v503 = vld [vmem:[%s1 + $0xe78] sm:$0xff]
  %v504 = vld [vmem:[%s1 + $0xe80] sm:$0xff]
  %v505 = vld [vmem:[%s1 + $0xe88] sm:$0xff]
  %v506 = vld [vmem:[%s1 + $0xe90] sm:$0xff]
  %v507 = vld [vmem:[%s1 + $0xe98] sm:$0xff]
  %v508 = vld [vmem:[%s1 + $0xea0] sm:$0xff]
  %v509 = vld [vmem:[%s1 + $0xea8] sm:$0xff]
  %v510 = vld [vmem:[%s1 + $0xeb0] sm:$0xff]
  %v511 = vld [vmem:[%s1 + $0xeb8] sm:$0xff]
  %v512 = vld [vmem:[%s1 + $0xec0] sm:$0xff]
  %v513 = vld [vmem:[%s1 + $0xec8] sm:$0xff]
  %v514 = vld [vmem:[%s1 + $0xed0] sm:$0xff]
  %v515 = vld [vmem:[%s1 + $0xed8] sm:$0xff]
  %v516 = vld [vmem:[%s1 + $0xee0] sm:$0xff]
  %v517 = vld [vmem:[%s1 + $0xee8] sm:$0xff]
  %v518 = vld [vmem:[%s1 + $0xef0] sm:$0xff]
  %v519 = vld [vmem:[%s1 + $0xef8] sm:$0xff]
  %v520 = vld [vmem:[%s1 + $0xf00] sm:$0xff]
  %v521 = vld [vmem:[%s1 + $0xf08] sm:$0xff]
  %v522 = vld [vmem:[%s1 + $0xf10] sm:$0xff]
  %v523 = vld [vmem:[%s1 + $0xf18] sm:$0xff]
  %v524 = vld [vmem:[%s1 + $0xf20] sm:$0xff]
  %v525 = vld [vmem:[%s1 + $0xf28] sm:$0xff]
  %v526 = vld [vmem:[%s1 + $0xf30] sm:$0xff]
  %v527 = vld [vmem:[%s1 + $0xf38] sm:$0xff]
  %v528 = vld [vmem:[%s1 + $0xf40] sm:$0xff]
  %v529 = vld [vmem:[%s1 + $0xf48] sm:$0xff]
  %v530 = vld [vmem:[%s1 + $0xf50] sm:$0xff]
  %v531 = vld [vmem:[%s1 + $0xf58] sm:$0xff]
  %v532 = vld [vmem:[%s1 + $0xf60] sm:$0xff]
  %v533 = vld [vmem:[%s1 + $0xf68] sm:$0xff]
  %v534 = vld [vmem:[%s1 + $0xf70] sm:$0xff]
  %v535 = vld [vmem:[%s1 + $0xf78] sm:$0xff]
  %v536 = vld [vmem:[%s1 + $0xf80] sm:$0xff]
  %v537 = vld [vmem:[%s1 + $0xf88] sm:$0xff]
  %v538 = vld [vmem:[%s1 + $0xf90] sm:$0xff]
  %v539 = vld [vmem:[%s1 + $0xf98] sm:$0xff]
  %v540 = vld [vmem:[%s1 + $0xfa0] sm:$0xff]
  %v541 = vld [vmem:[%s1 + $0xfa8] sm:$0xff]
  %v542 = vld [vmem:[%s1 + $0xfb0] sm:$0xff]
  %v543 = vld [vmem:[%s1 + $0xfb8] sm:$0xff]
  %v544 = vld [vmem:[%s1 + $0xfc0] sm:$0xff]
  %v545 = vld [vmem:[%s1 + $0xfc8] sm:$0xff]
  %v546 = vld [vmem:[%s1 + $0xfd0] sm:$0xff]
  %v547 = vld [vmem:[%s1 + $0xfd8] sm:$0xff]
  %v548 = vld [vmem:[%s1 + $0xfe0] sm:$0xff]
  %v549 = vld [vmem:[%s1 + $0xfe8] sm:$0xff]
  %v550 = vld [vmem:[%s1 + $0xff0] sm:$0xff]
  %v551 = vld [vmem:[%s1 + $0xff8] sm:$0xff]
  %v552 = vld [vmem:[%s1 + $0x1000] sm:$0xff]
  %v553 = vld [vmem:[%s1 + $0x1008] sm:$0xff]
  %v554 = vld [vmem:[%s1 + $0x1010] sm:$0xff]
  %v555 = vld [vmem:[%s1 + $0x1018] sm:$0xff]
  %v556 = vld [vmem:[%s1 + $0x1020] sm:$0xff]
  %v557 = vld [vmem:[%s1 + $0x1028] sm:$0xff]
  %v558 = vld [vmem:[%s1 + $0x1030] sm:$0xff]
  %v559 = vld [vmem:[%s1 + $0x1038] sm:$0xff]
  %v560 = vld [vmem:[%s1 + $0x1040] sm:$0xff]
  %v561 = vld [vmem:[%s1 + $0x1048] sm:$0xff]
  %v562 = vld [vmem:[%s1 + $0x1050] sm:$0xff]
  %v563 = vld [vmem:[%s1 + $0x1058] sm:$0xff]
  %v564 = vld [vmem:[%s1 + $0x1060] sm:$0xff]
  %v565 = vld [vmem:[%s1 + $0x1068] sm:$0xff]
  %v566 = vld [vmem:[%s1 + $0x1070] sm:$0xff]
  %v567 = vld [vmem:[%s1 + $0x1078] sm:$0xff]
  %v568 = vld [vmem:[%s1 + $0x1080] sm:$0xff]
  %v569 = vld [vmem:[%s1 + $0x1088] sm:$0xff]
  %v570 = vld [vmem:[%s1 + $0x1090] sm:$0xff]
  %v571 = vld [vmem:[%s1 + $0x1098] sm:$0xff]
  %v572 = vld [vmem:[%s1 + $0x10a0] sm:$0xff]
  %v573 = vld [vmem:[%s1 + $0x10a8] sm:$0xff]
  %v574 = vld [vmem:[%s1 + $0x10b0] sm:$0xff]
  %v575 = vld [vmem:[%s1 + $0x10b8] sm:$0xff]
  %v576 = vld [vmem:[%s1 + $0x10c0] sm:$0xff]
  %v577 = vld [vmem:[%s1 + $0x10c8] sm:$0xff]
  %v578 = vld [vmem:[%s1 + $0x10d0] sm:$0xff]
  %v579 = vld [vmem:[%s1 + $0x10d8] sm:$0xff]
  %v580 = vld [vmem:[%s1 + $0x10e0] sm:$0xff]
  %v581 = vld [vmem:[%s1 + $0x10e8] sm:$0xff]
  %v582 = vld [vmem:[%s1 + $0x10f0] sm:$0xff]
  %v583 = vld [vmem:[%s1 + $0x10f8] sm:$0xff]
  %v584 = vld [vmem:[%s1 + $0x1100] sm:$0xff]
  %v585 = vld [vmem:[%s1 + $0x1108] sm:$0xff]
  %v586 = vld [vmem:[%s1 + $0x1110] sm:$0xff]
  %v587 = vld [vmem:[%s1 + $0x1118] sm:$0xff]
  %v588 = vld [vmem:[%s1 + $0x1120] sm:$0xff]
  %v589 = vld [vmem:[%s1 + $0x1128] sm:$0xff]
  %v590 = vld [vmem:[%s1 + $0x1130] sm:$0xff]
  %v591 = vld [vmem:[%s1 + $0x1138] sm:$0xff]
  %v592 = vld [vmem:[%s1 + $0x1140] sm:$0xff]
  %v593 = vld [vmem:[%s1 + $0x1148] sm:$0xff]
  %v594 = vld [vmem:[%s1 + $0x1150] sm:$0xff]
  %v595 = vld [vmem:[%s1 + $0x1158] sm:$0xff]
  %v596 = vld [vmem:[%s1 + $0x1160] sm:$0xff]
  %v597 = vld [vmem:[%s1 + $0x1168] sm:$0xff]
  %v598 = vld [vmem:[%s1 + $0x1170] sm:$0xff]
  %v599 = vld [vmem:[%s1 + $0x1178] sm:$0xff]
  %v600 = vld [vmem:[%s1 + $0x1180] sm:$0xff]
  %v601 = vld [vmem:[%s1 + $0x1188] sm:$0xff]
  %v602 = vld [vmem:[%s1 + $0x1190] sm:$0xff]
  %v603 = vld [vmem:[%s1 + $0x1198] sm:$0xff]
  %v604 = vld [vmem:[%s1 + $0x11a0] sm:$0xff]
  %v605 = vld [vmem:[%s1 + $0x11a8] sm:$0xff]
  %v606 = vld [vmem:[%s1 + $0x11b0] sm:$0xff]
  %v607 = vld [vmem:[%s1 + $0x11b8] sm:$0xff]
  %v608 = vld [vmem:[%s1 + $0x11c0] sm:$0xff]
  %v609 = vld [vmem:[%s1 + $0x11c8] sm:$0xff]
  %v610 = vld [vmem:[%s1 + $0x11d0] sm:$0xff]
  %v611 = vld [vmem:[%s1 + $0x11d8] sm:$0xff]
  %v612 = vld [vmem:[%s1 + $0x11e0] sm:$0xff]
  %v613 = vld [vmem:[%s1 + $0x11e8] sm:$0xff]
  %v614 = vld [vmem:[%s1 + $0x11f0] sm:$0xff]
  %v615 = vld [vmem:[%s1 + $0x11f8] sm:$0xff]
  %v616 = vld [vmem:[%s1 + $0x1200] sm:$0xff]
  %v617 = vld [vmem:[%s1 + $0x1208] sm:$0xff]
  %v618 = vld [vmem:[%s1 + $0x1210] sm:$0xff]
  %v619 = vld [vmem:[%s1 + $0x1218] sm:$0xff]
  %v620 = vld [vmem:[%s1 + $0x1220] sm:$0xff]
  %v621 = vld [vmem:[%s1 + $0x1228] sm:$0xff]
  %v622 = vld [vmem:[%s1 + $0x1230] sm:$0xff]
  %v623 = vld [vmem:[%s1 + $0x1238] sm:$0xff]
  %v624 = vld [vmem:[%s1 + $0x1240] sm:$0xff]
  %v625 = vld [vmem:[%s1 + $0x1248] sm:$0xff]
  %v626 = vld [vmem:[%s1 + $0x1250] sm:$0xff]
  %v627 = vld [vmem:[%s1 + $0x1258] sm:$0xff]
  %v628 = vld [vmem:[%s1 + $0x1260] sm:$0xff]
  %v629 = vld [vmem:[%s1 + $0x1268] sm:$0xff]
  %v630 = vld [vmem:[%s1 + $0x1270] sm:$0xff]
  %v631 = vld [vmem:[%s1 + $0x1278] sm:$0xff]
  %v632 = vld [vmem:[%s1 + $0x1280] sm:$0xff]
  %v633 = vld [vmem:[%s1 + $0x1288] sm:$0xff]
  %v634 = vld [vmem:[%s1 + $0x1290] sm:$0xff]
  %v635 = vld [vmem:[%s1 + $0x1298] sm:$0xff]
  %v636 = vld [vmem:[%s1 + $0x12a0] sm:$0xff]
  %v637 = vld [vmem:[%s1 + $0x12a8] sm:$0xff]
  %v638 = vld [vmem:[%s1 + $0x12b0] sm:$0xff]
  %v639 = vld [vmem:[%s1 + $0x12b8] sm:$0xff]
  %v640 = vld [vmem:[%s1 + $0x12c0] sm:$0xff]
  %v641 = vld [vmem:[%s1 + $0x12c8] sm:$0xff]
  %v642 = vld [vmem:[%s1 + $0x12d0] sm:$0xff]
  %v643 = vld [vmem:[%s1 + $0x12d8] sm:$0xff]
  %v644 = vld [vmem:[%s1 + $0x12e0] sm:$0xff]
  %v645 = vld [vmem:[%s1 + $0x12e8] sm:$0xff]
  %v646 = vld [vmem:[%s1 + $0x12f0] sm:$0xff]
  %v647 = vld [vmem:[%s1 + $0x12f8] sm:$0xff]
  %v648 = vld [vmem:[%s1 + $0x1300] sm:$0xff]
  %v649 = vld [vmem:[%s1 + $0x1308] sm:$0xff]
  %v650 = vld [vmem:[%s1 + $0x1310] sm:$0xff]
  %v651 = vld [vmem:[%s1 + $0x1318] sm:$0xff]
  %v652 = vld [vmem:[%s1 + $0x1320] sm:$0xff]
  %v653 = vld [vmem:[%s1 + $0x1328] sm:$0xff]
  %v654 = vld [vmem:[%s1 + $0x1330] sm:$0xff]
  %v655 = vld [vmem:[%s1 + $0x1338] sm:$0xff]
  %v656 = vld [vmem:[%s1 + $0x1340] sm:$0xff]
  %v657 = vld [vmem:[%s1 + $0x1348] sm:$0xff]
  %v658 = vld [vmem:[%s1 + $0x1350] sm:$0xff]
  %v659 = vld [vmem:[%s1 + $0x1358] sm:$0xff]
  %v660 = vld [vmem:[%s1 + $0x1360] sm:$0xff]
  %v661 = vld [vmem:[%s1 + $0x1368] sm:$0xff]
  %v662 = vld [vmem:[%s1 + $0x1370] sm:$0xff]
  %v663 = vld [vmem:[%s1 + $0x1378] sm:$0xff]
  %v664 = vld [vmem:[%s1 + $0x1380] sm:$0xff]
  %v665 = vld [vmem:[%s1 + $0x1388] sm:$0xff]
  %v666 = vld [vmem:[%s1 + $0x1390] sm:$0xff]
  %v667 = vld [vmem:[%s1 + $0x1398] sm:$0xff]
  %v668 = vld [vmem:[%s1 + $0x13a0] sm:$0xff]
  %v669 = vld [vmem:[%s1 + $0x13a8] sm:$0xff]
  %v670 = vld [vmem:[%s1 + $0x13b0] sm:$0xff]
  %v671 = vld [vmem:[%s1 + $0x13b8] sm:$0xff]
  %v672 = vld [vmem:[%s1 + $0x13c0] sm:$0xff]
  %v673 = vld [vmem:[%s1 + $0x13c8] sm:$0xff]
  %v674 = vld [vmem:[%s1 + $0x13d0] sm:$0xff]
  %v675 = vld [vmem:[%s1 + $0x13d8] sm:$0xff]
  %v676 = vld [vmem:[%s1 + $0x13e0] sm:$0xff]
  %v677 = vld [vmem:[%s1 + $0x13e8] sm:$0xff]
  %v678 = vld [vmem:[%s1 + $0x13f0] sm:$0xff]
  %v679 = vld [vmem:[%s1 + $0x13f8] sm:$0xff]
  %v680 = vld [vmem:[%s1 + $0x1400] sm:$0xff]
  %v681 = vld [vmem:[%s1 + $0x1408] sm:$0xff]
  %v682 = vld [vmem:[%s1 + $0x1410] sm:$0xff]
  %v683 = vld [vmem:[%s1 + $0x1418] sm:$0xff]
  %v684 = vld [vmem:[%s1 + $0x1420] sm:$0xff]
  %v685 = vld [vmem:[%s1 + $0x1428] sm:$0xff]
  %v686 = vld [vmem:[%s1 + $0x1430] sm:$0xff]
  %v687 = vld [vmem:[%s1 + $0x1438] sm:$0xff]
  %v688 = vld [vmem:[%s1 + $0x1440] sm:$0xff]
  %v689 = vld [vmem:[%s1 + $0x1448] sm:$0xff]
  %v690 = vld [vmem:[%s1 + $0x1450] sm:$0xff]
  %v691 = vld [vmem:[%s1 + $0x1458] sm:$0xff]
  %v692 = vld [vmem:[%s1 + $0x1460] sm:$0xff]
  %v693 = vld [vmem:[%s1 + $0x1468] sm:$0xff]
  %v694 = vld [vmem:[%s1 + $0x1470] sm:$0xff]
  %v695 = vld [vmem:[%s1 + $0x1478] sm:$0xff]
  %v696 = vld [vmem:[%s1 + $0x1480] sm:$0xff]
  %v697 = vld [vmem:[%s1 + $0x1488] sm:$0xff]
  %v698 = vld [vmem:[%s1 + $0x1490] sm:$0xff]
  %v699 = vld [vmem:[%s1 + $0x1498] sm:$0xff]
  %v700 = vld [vmem:[%s1 + $0x14a0] sm:$0xff]
  %v701 = vld [vmem:[%s1 + $0x14a8] sm:$0xff]
  %v702 = vld [vmem:[%s1 + $0x14b0] sm:$0xff]
  %v703 = vld [vmem:[%s1 + $0x14b8] sm:$0xff]
  %v704 = vld [vmem:[%s1 + $0x14c0] sm:$0xff]
  %v705 = vld [vmem:[%s1 + $0x14c8] sm:$0xff]
  %v706 = vld [vmem:[%s1 + $0x14d0] sm:$0xff]
  %v707 = vld [vmem:[%s1 + $0x14d8] sm:$0xff]
  %v708 = vld [vmem:[%s1 + $0x14e0] sm:$0xff]
  %v709 = vld [vmem:[%s1 + $0x14e8] sm:$0xff]
  %v710 = vld [vmem:[%s1 + $0x14f0] sm:$0xff]
  %v711 = vld [vmem:[%s1 + $0x14f8] sm:$0xff]
  %v712 = vld [vmem:[%s1 + $0x1500] sm:$0xff]
  %v713 = vld [vmem:[%s1 + $0x1508] sm:$0xff]
  %v714 = vld [vmem:[%s1 + $0x1510] sm:$0xff]
  %v715 = vld [vmem:[%s1 + $0x1518] sm:$0xff]
  %v716 = vld [vmem:[%s1 + $0x1520] sm:$0xff]
  %v717 = vld [vmem:[%s1 + $0x1528] sm:$0xff]
  %v718 = vld [vmem:[%s1 + $0x1530] sm:$0xff]
  %v719 = vld [vmem:[%s1 + $0x1538] sm:$0xff]
  %v720 = vld [vmem:[%s1 + $0x1540] sm:$0xff]
  %v721 = vld [vmem:[%s1 + $0x1548] sm:$0xff]
  %v722 = vld [vmem:[%s1 + $0x1550] sm:$0xff]
  %v723 = vld [vmem:[%s1 + $0x1558] sm:$0xff]
  %v724 = vld [vmem:[%s1 + $0x1560] sm:$0xff]
  %v725 = vld [vmem:[%s1 + $0x1568] sm:$0xff]
  %v726 = vld [vmem:[%s1 + $0x1570] sm:$0xff]
  %v727 = vld [vmem:[%s1 + $0x1578] sm:$0xff]
  %v728 = vld [vmem:[%s1 + $0x1580] sm:$0xff]
  %v729 = vld [vmem:[%s1 + $0x1588] sm:$0xff]
  %v730 = vld [vmem:[%s1 + $0x1590] sm:$0xff]
  %v731 = vld [vmem:[%s1 + $0x1598] sm:$0xff]
  %v732 = vld [vmem:[%s1 + $0x15a0] sm:$0xff]
  %v733 = vld [vmem:[%s1 + $0x15a8] sm:$0xff]
  %v734 = vld [vmem:[%s1 + $0x15b0] sm:$0xff]
  %v735 = vld [vmem:[%s1 + $0x15b8] sm:$0xff]
  %v736 = vld [vmem:[%s1 + $0x15c0] sm:$0xff]
  %v737 = vld [vmem:[%s1 + $0x15c8] sm:$0xff]
  %v738 = vld [vmem:[%s1 + $0x15d0] sm:$0xff]
  %v739 = vld [vmem:[%s1 + $0x15d8] sm:$0xff]
  %v740 = vld [vmem:[%s1 + $0x15e0] sm:$0xff]
  %v741 = vld [vmem:[%s1 + $0x15e8] sm:$0xff]
  %v742 = vld [vmem:[%s1 + $0x15f0] sm:$0xff]
  %v743 = vld [vmem:[%s1 + $0x15f8] sm:$0xff]
  %v744 = vld [vmem:[%s1 + $0x1600] sm:$0xff]
  %v745 = vld [vmem:[%s1 + $0x1608] sm:$0xff]
  %v746 = vld [vmem:[%s1 + $0x1610] sm:$0xff]
  %v747 = vld [vmem:[%s1 + $0x1618] sm:$0xff]
  %v748 = vld [vmem:[%s1 + $0x1620] sm:$0xff]
  %v749 = vld [vmem:[%s1 + $0x1628] sm:$0xff]
  %v750 = vld [vmem:[%s1 + $0x1630] sm:$0xff]
  %v751 = vld [vmem:[%s1 + $0x1638] sm:$0xff]
  %v752 = vld [vmem:[%s1 + $0x1640] sm:$0xff]
  %v753 = vld [vmem:[%s1 + $0x1648] sm:$0xff]
  %v754 = vld [vmem:[%s1 + $0x1650] sm:$0xff]
  %v755 = vld [vmem:[%s1 + $0x1658] sm:$0xff]
  %v756 = vld [vmem:[%s1 + $0x1660] sm:$0xff]
  %v757 = vld [vmem:[%s1 + $0x1668] sm:$0xff]
  %v758 = vld [vmem:[%s1 + $0x1670] sm:$0xff]
  %v759 = vld [vmem:[%s1 + $0x1678] sm:$0xff]
  %v760 = vld [vmem:[%s1 + $0x1680] sm:$0xff]
  %v761 = vld [vmem:[%s1 + $0x1688] sm:$0xff]
  %v762 = vld [vmem:[%s1 + $0x1690] sm:$0xff]
  %v763 = vld [vmem:[%s1 + $0x1698] sm:$0xff]
  %v764 = vld [vmem:[%s1 + $0x16a0] sm:$0xff]
  %v765 = vld [vmem:[%s1 + $0x16a8] sm:$0xff]
  %v766 = vld [vmem:[%s1 + $0x16b0] sm:$0xff]
  %v767 = vld [vmem:[%s1 + $0x16b8] sm:$0xff]
  %v768 = vld [vmem:[%s1 + $0x16c0] sm:$0xff]
  %v769 = vld [vmem:[%s1 + $0x16c8] sm:$0xff]
  %v770 = vld [vmem:[%s1 + $0x16d0] sm:$0xff]
  %v771 = vld [vmem:[%s1 + $0x16d8] sm:$0xff]
  %v772 = vld [vmem:[%s1 + $0x16e0] sm:$0xff]
  %v773 = vld [vmem:[%s1 + $0x16e8] sm:$0xff]
  %v774 = vld [vmem:[%s1 + $0x16f0] sm:$0xff]
  %v775 = vld [vmem:[%s1 + $0x16f8] sm:$0xff]
  %v776 = vld [vmem:[%s1 + $0x1700] sm:$0xff]
  %v777 = vld [vmem:[%s1 + $0x1708] sm:$0xff]
  %v778 = vld [vmem:[%s1 + $0x1710] sm:$0xff]
  %v779 = vld [vmem:[%s1 + $0x1718] sm:$0xff]
  %v780 = vld [vmem:[%s1 + $0x1720] sm:$0xff]
  %v781 = vld [vmem:[%s1 + $0x1728] sm:$0xff]
  %v782 = vld [vmem:[%s1 + $0x1730] sm:$0xff]
  %v783 = vld [vmem:[%s1 + $0x1738] sm:$0xff]
  %v784 = vld [vmem:[%s1 + $0x1740] sm:$0xff]
  %v785 = vld [vmem:[%s1 + $0x1748] sm:$0xff]
  %v786 = vld [vmem:[%s1 + $0x1750] sm:$0xff]
  %v787 = vld [vmem:[%s1 + $0x1758] sm:$0xff]
  %v788 = vld [vmem:[%s1 + $0x1760] sm:$0xff]
  %v789 = vld [vmem:[%s1 + $0x1768] sm:$0xff]
  %v790 = vld [vmem:[%s1 + $0x1770] sm:$0xff]
  %v791 = vld [vmem:[%s1 + $0x1778] sm:$0xff]
  %v792 = vld [vmem:[%s1 + $0x1780] sm:$0xff]
  %v793 = vld [vmem:[%s1 + $0x1788] sm:$0xff]
  %v794 = vld [vmem:[%s1 + $0x1790] sm:$0xff]
  %v795 = vld [vmem:[%s1 + $0x1798] sm:$0xff]
  %v796 = vld [vmem:[%s1 + $0x17a0] sm:$0xff]
  %v797 = vld [vmem:[%s1 + $0x17a8] sm:$0xff]
  %v798 = vld [vmem:[%s1 + $0x17b0] sm:$0xff]
  %v799 = vld [vmem:[%s1 + $0x17b8] sm:$0xff]
  %v800 = vld [vmem:[%s1 + $0x17c0] sm:$0xff]
  %v801 = vld [vmem:[%s1 + $0x17c8] sm:$0xff]
  %v802 = vld [vmem:[%s1 + $0x17d0] sm:$0xff]
  %v803 = vld [vmem:[%s1 + $0x17d8] sm:$0xff]
  %v804 = vld [vmem:[%s1 + $0x17e0] sm:$0xff]
  %v805 = vld [vmem:[%s1 + $0x17e8] sm:$0xff]
  %v806 = vld [vmem:[%s1 + $0x17f0] sm:$0xff]
  %v807 = vld [vmem:[%s1 + $0x17f8] sm:$0xff]
  %v808 = vld [vmem:[%s1 + $0x1800] sm:$0xff]
  %v809 = vld [vmem:[%s1 + $0x1808] sm:$0xff]
  %v810 = vld [vmem:[%s1 + $0x1810] sm:$0xff]
  %v811 = vld [vmem:[%s1 + $0x1818] sm:$0xff]
  %v812 = vld [vmem:[%s1 + $0x1820] sm:$0xff]
  %v813 = vld [vmem:[%s1 + $0x1828] sm:$0xff]
  %v814 = vld [vmem:[%s1 + $0x1830] sm:$0xff]
  %v815 = vld [vmem:[%s1 + $0x1838] sm:$0xff]
  %v816 = vld [vmem:[%s1 + $0x1840] sm:$0xff]
  %v817 = vld [vmem:[%s1 + $0x1848] sm:$0xff]
  %v818 = vld [vmem:[%s1 + $0x1850] sm:$0xff]
  %v819 = vld [vmem:[%s1 + $0x1858] sm:$0xff]
  %v820 = vld [vmem:[%s1 + $0x1860] sm:$0xff]
  %v821 = vld [vmem:[%s1 + $0x1868] sm:$0xff]
  %v822 = vld [vmem:[%s1 + $0x1870] sm:$0xff]
  %v823 = vld [vmem:[%s1 + $0x1878] sm:$0xff]
  %v824 = vld [vmem:[%s1 + $0x1880] sm:$0xff]
  %v825 = vld [vmem:[%s1 + $0x1888] sm:$0xff]
  %v826 = vld [vmem:[%s1 + $0x1890] sm:$0xff]
  %v827 = vld [vmem:[%s1 + $0x1898] sm:$0xff]
  %v828 = vld [vmem:[%s1 + $0x18a0] sm:$0xff]
  %v829 = vld [vmem:[%s1 + $0x18a8] sm:$0xff]
  %v830 = vld [vmem:[%s1 + $0x18b0] sm:$0xff]
  %v831 = vld [vmem:[%s1 + $0x18b8] sm:$0xff]
  %v832 = vld [vmem:[%s1 + $0x18c0] sm:$0xff]
  %v833 = vld [vmem:[%s1 + $0x18c8] sm:$0xff]
  %v834 = vld [vmem:[%s1 + $0x18d0] sm:$0xff]
  %v835 = vld [vmem:[%s1 + $0x18d8] sm:$0xff]
  %v836 = vld [vmem:[%s1 + $0x18e0] sm:$0xff]
  %v837 = vld [vmem:[%s1 + $0x18e8] sm:$0xff]
  %v838 = vld [vmem:[%s1 + $0x18f0] sm:$0xff]
  %v839 = vld [vmem:[%s1 + $0x18f8] sm:$0xff]
  %v840 = vld [vmem:[%s1 + $0x1900] sm:$0xff]
  %v841 = vld [vmem:[%s1 + $0x1908] sm:$0xff]
  %v842 = vld [vmem:[%s1 + $0x1910] sm:$0xff]
  %v843 = vld [vmem:[%s1 + $0x1918] sm:$0xff]
  %v844 = vld [vmem:[%s1 + $0x1920] sm:$0xff]
  %v845 = vld [vmem:[%s1 + $0x1928] sm:$0xff]
  %v846 = vld [vmem:[%s1 + $0x1930] sm:$0xff]
  %v847 = vld [vmem:[%s1 + $0x1938] sm:$0xff]
  %v848 = vld [vmem:[%s1 + $0x1940] sm:$0xff]
  %v849 = vld [vmem:[%s1 + $0x1948] sm:$0xff]
  %v850 = vld [vmem:[%s1 + $0x1950] sm:$0xff]
  %v851 = vld [vmem:[%s1 + $0x1958] sm:$0xff]
  %v852 = vld [vmem:[%s1 + $0x1960] sm:$0xff]
  %v853 = vld [vmem:[%s1 + $0x1968] sm:$0xff]
  %v854 = vld [vmem:[%s1 + $0x1970] sm:$0xff]
  %v855 = vld [vmem:[%s1 + $0x1978] sm:$0xff]
  %v856 = vld [vmem:[%s1 + $0x1980] sm:$0xff]
  %v857 = vld [vmem:[%s1 + $0x1988] sm:$0xff]
  %v858 = vld [vmem:[%s1 + $0x1990] sm:$0xff]
  %v859 = vld [vmem:[%s1 + $0x1998] sm:$0xff]
  %v860 = vld [vmem:[%s1 + $0x19a0] sm:$0xff]
  %v861 = vld [vmem:[%s1 + $0x19a8] sm:$0xff]
  %v862 = vld [vmem:[%s1 + $0x19b0] sm:$0xff]
  %v863 = vld [vmem:[%s1 + $0x19b8] sm:$0xff]
  %v864 = vld [vmem:[%s1 + $0x19c0] sm:$0xff]
  %v865 = vld [vmem:[%s1 + $0x19c8] sm:$0xff]
  %v866 = vld [vmem:[%s1 + $0x19d0] sm:$0xff]
  %v867 = vld [vmem:[%s1 + $0x19d8] sm:$0xff]
  %v868 = vld [vmem:[%s1 + $0x19e0] sm:$0xff]
  %v869 = vld [vmem:[%s1 + $0x19e8] sm:$0xff]
  %v870 = vld [vmem:[%s1 + $0x19f0] sm:$0xff]
  %v871 = vld [vmem:[%s1 + $0x19f8] sm:$0xff]
  %v872 = vld [vmem:[%s1 + $0x1a00] sm:$0xff]
  %v873 = vld [vmem:[%s1 + $0x1a08] sm:$0xff]
  %v874 = vld [vmem:[%s1 + $0x1a10] sm:$0xff]
  %v875 = vld [vmem:[%s1 + $0x1a18] sm:$0xff]
  %v876 = vld [vmem:[%s1 + $0x1a20] sm:$0xff]
  %v877 = vld [vmem:[%s1 + $0x1a28] sm:$0xff]
  %v878 = vld [vmem:[%s1 + $0x1a30] sm:$0xff]
  %v879 = vld [vmem:[%s1 + $0x1a38] sm:$0xff]
  %v880 = vld [vmem:[%s1 + $0x1a40] sm:$0xff]
  %v881 = vld [vmem:[%s1 + $0x1a48] sm:$0xff]
  %v882 = vld [vmem:[%s1 + $0x1a50] sm:$0xff]
  %v883 = vld [vmem:[%s1 + $0x1a58] sm:$0xff]
  %v884 = vld [vmem:[%s1 + $0x1a60] sm:$0xff]
  %v885 = vld [vmem:[%s1 + $0x1a68] sm:$0xff]
  %v886 = vld [vmem:[%s1 + $0x1a70] sm:$0xff]
  %v887 = vld [vmem:[%s1 + $0x1a78] sm:$0xff]
  %v888 = vld [vmem:[%s1 + $0x1a80] sm:$0xff]
  %v889 = vld [vmem:[%s1 + $0x1a88] sm:$0xff]
  %v890 = vld [vmem:[%s1 + $0x1a90] sm:$0xff]
  %v891 = vld [vmem:[%s1 + $0x1a98] sm:$0xff]
  %v892 = vld [vmem:[%s1 + $0x1aa0] sm:$0xff]
  %v893 = vld [vmem:[%s1 + $0x1aa8] sm:$0xff]
  %v894 = vld [vmem:[%s1 + $0x1ab0] sm:$0xff]
  %v895 = vld [vmem:[%s1 + $0x1ab8] sm:$0xff]
  %v896 = vld [vmem:[%s1 + $0x1ac0] sm:$0xff]
  %v897 = vld [vmem:[%s1 + $0x1ac8] sm:$0xff]
  %v898 = vld [vmem:[%s1 + $0x1ad0] sm:$0xff]
  %v899 = vld [vmem:[%s1 + $0x1ad8] sm:$0xff]
  %v900 = vld [vmem:[%s1 + $0x1ae0] sm:$0xff]
  %v901 = vld [vmem:[%s1 + $0x1ae8] sm:$0xff]
  %v902 = vld [vmem:[%s1 + $0x1af0] sm:$0xff]
  %v903 = vld [vmem:[%s1 + $0x1af8] sm:$0xff]
  %v904 = vld [vmem:[%s1 + $0x1b00] sm:$0xff]
  %v905 = vld [vmem:[%s1 + $0x1b08] sm:$0xff]
  %v906 = vld [vmem:[%s1 + $0x1b10] sm:$0xff]
  %v907 = vld [vmem:[%s1 + $0x1b18] sm:$0xff]
  %v908 = vld [vmem:[%s1 + $0x1b20] sm:$0xff]
  %v909 = vld [vmem:[%s1 + $0x1b28] sm:$0xff]
  %v910 = vld [vmem:[%s1 + $0x1b30] sm:$0xff]
  %v911 = vld [vmem:[%s1 + $0x1b38] sm:$0xff]
  %v912 = vld [vmem:[%s1 + $0x1b40] sm:$0xff]
  %v913 = vld [vmem:[%s1 + $0x1b48] sm:$0xff]
  %v914 = vld [vmem:[%s1 + $0x1b50] sm:$0xff]
  %v915 = vld [vmem:[%s1 + $0x1b58] sm:$0xff]
  %v916 = vld [vmem:[%s1 + $0x1b60] sm:$0xff]
  %v917 = vld [vmem:[%s1 + $0x1b68] sm:$0xff]
  %v918 = vld [vmem:[%s1 + $0x1b70] sm:$0xff]
  %v919 = vld [vmem:[%s1 + $0x1b78] sm:$0xff]
  %v920 = vld [vmem:[%s1 + $0x1b80] sm:$0xff]
  %v921 = vld [vmem:[%s1 + $0x1b88] sm:$0xff]
  %v922 = vld [vmem:[%s1 + $0x1b90] sm:$0xff]
  %v923 = vld [vmem:[%s1 + $0x1b98] sm:$0xff]
  %v924 = vld [vmem:[%s1 + $0x1ba0] sm:$0xff]
  %v925 = vld [vmem:[%s1 + $0x1ba8] sm:$0xff]
  %v926 = vld [vmem:[%s1 + $0x1bb0] sm:$0xff]
  %v927 = vld [vmem:[%s1 + $0x1bb8] sm:$0xff]
  %v928 = vld [vmem:[%s1 + $0x1bc0] sm:$0xff]
  %v929 = vld [vmem:[%s1 + $0x1bc8] sm:$0xff]
  %v930 = vld [vmem:[%s1 + $0x1bd0] sm:$0xff]
  %v931 = vld [vmem:[%s1 + $0x1bd8] sm:$0xff]
  %v932 = vld [vmem:[%s1 + $0x1be0] sm:$0xff]
  %v933 = vld [vmem:[%s1 + $0x1be8] sm:$0xff]
  %v934 = vld [vmem:[%s1 + $0x1bf0] sm:$0xff]
  %v935 = vld [vmem:[%s1 + $0x1bf8] sm:$0xff]
  %v936 = vld [vmem:[%s1 + $0x1c00] sm:$0xff]
  %v937 = vld [vmem:[%s1 + $0x1c08] sm:$0xff]
  %v938 = vld [vmem:[%s1 + $0x1c10] sm:$0xff]
  %v939 = vld [vmem:[%s1 + $0x1c18] sm:$0xff]
  %v940 = vld [vmem:[%s1 + $0x1c20] sm:$0xff]
  %v941 = vld [vmem:[%s1 + $0x1c28] sm:$0xff]
  %v942 = vld [vmem:[%s1 + $0x1c30] sm:$0xff]
  %v943 = vld [vmem:[%s1 + $0x1c38] sm:$0xff]
  %v944 = vld [vmem:[%s1 + $0x1c40] sm:$0xff]
  %v945 = vld [vmem:[%s1 + $0x1c48] sm:$0xff]
  %v946 = vld [vmem:[%s1 + $0x1c50] sm:$0xff]
  %v947 = vld [vmem:[%s1 + $0x1c58] sm:$0xff]
  %v948 = vld [vmem:[%s1 + $0x1c60] sm:$0xff]
  %v949 = vld [vmem:[%s1 + $0x1c68] sm:$0xff]
  %v950 = vld [vmem:[%s1 + $0x1c70] sm:$0xff]
  %v951 = vld [vmem:[%s1 + $0x1c78] sm:$0xff]
  %v952 = vld [vmem:[%s1 + $0x1c80] sm:$0xff]
  %v953 = vld [vmem:[%s1 + $0x1c88] sm:$0xff]
  %v954 = vld [vmem:[%s1 + $0x1c90] sm:$0xff]
  %v955 = vld [vmem:[%s1 + $0x1c98] sm:$0xff]
  %v956 = vld [vmem:[%s1 + $0x1ca0] sm:$0xff]
  %v957 = vld [vmem:[%s1 + $0x1ca8] sm:$0xff]
  %v958 = vld [vmem:[%s1 + $0x1cb0] sm:$0xff]
  %v959 = vld [vmem:[%s1 + $0x1cb8] sm:$0xff]
  %v960 = vld [vmem:[%s1 + $0x1cc0] sm:$0xff]
  %v961 = vld [vmem:[%s1 + $0x1cc8] sm:$0xff]
  %v962 = vld [vmem:[%s1 + $0x1cd0] sm:$0xff]
  %v963 = vld [vmem:[%s1 + $0x1cd8] sm:$0xff]
  %v964 = vld [vmem:[%s1 + $0x1ce0] sm:$0xff]
  %v965 = vld [vmem:[%s1 + $0x1ce8] sm:$0xff]
  %v966 = vld [vmem:[%s1 + $0x1cf0] sm:$0xff]
  %v967 = vld [vmem:[%s1 + $0x1cf8] sm:$0xff]
  %v968 = vld [vmem:[%s1 + $0x1d00] sm:$0xff]
  %v969 = vld [vmem:[%s1 + $0x1d08] sm:$0xff]
  %v970 = vld [vmem:[%s1 + $0x1d10] sm:$0xff]
  %v971 = vld [vmem:[%s1 + $0x1d18] sm:$0xff]
  %v972 = vld [vmem:[%s1 + $0x1d20] sm:$0xff]
  %v973 = vld [vmem:[%s1 + $0x1d28] sm:$0xff]
  %v974 = vld [vmem:[%s1 + $0x1d30] sm:$0xff]
  %v975 = vld [vmem:[%s1 + $0x1d38] sm:$0xff]
  %v976 = vld [vmem:[%s1 + $0x1d40] sm:$0xff]
  %v977 = vld [vmem:[%s1 + $0x1d48] sm:$0xff]
  %v978 = vld [vmem:[%s1 + $0x1d50] sm:$0xff]
  %v979 = vld [vmem:[%s1 + $0x1d58] sm:$0xff]
  %v980 = vld [vmem:[%s1 + $0x1d60] sm:$0xff]
  %v981 = vld [vmem:[%s1 + $0x1d68] sm:$0xff]
  %v982 = vld [vmem:[%s1 + $0x1d70] sm:$0xff]
  %v983 = vld [vmem:[%s1 + $0x1d78] sm:$0xff]
  %v984 = vld [vmem:[%s1 + $0x1d80] sm:$0xff]
  %v985 = vld [vmem:[%s1 + $0x1d88] sm:$0xff]
  %v986 = vld [vmem:[%s1 + $0x1d90] sm:$0xff]
  %v987 = vld [vmem:[%s1 + $0x1d98] sm:$0xff]
  %v988 = vld [vmem:[%s1 + $0x1da0] sm:$0xff]
  %v989 = vld [vmem:[%s1 + $0x1da8] sm:$0xff]
  %v990 = vld [vmem:[%s1 + $0x1db0] sm:$0xff]
  %v991 = vld [vmem:[%s1 + $0x1db8] sm:$0xff]
  %v992 = vld [vmem:[%s1 + $0x1dc0] sm:$0xff]
  %v993 = vld [vmem:[%s1 + $0x1dc8] sm:$0xff]
  %v994 = vld [vmem:[%s1 + $0x1dd0] sm:$0xff]
  %v995 = vld [vmem:[%s1 + $0x1dd8] sm:$0xff]
  %v996 = vld [vmem:[%s1 + $0x1de0] sm:$0xff]
  %v997 = vld [vmem:[%s1 + $0x1de8] sm:$0xff]
  %v998 = vld [vmem:[%s1 + $0x1df0] sm:$0xff]
  %v999 = vld [vmem:[%s1 + $0x1df8] sm:$0xff]
  %v1000 = vld [vmem:[%s1 + $0x1e00] sm:$0xff]
  %v1001 = vld [vmem:[%s1 + $0x1e08] sm:$0xff]
  %v1002 = vld [vmem:[%s1 + $0x1e10] sm:$0xff]
  %v1003 = vld [vmem:[%s1 + $0x1e18] sm:$0xff]
  %v1004 = vld [vmem:[%s1 + $0x1e20] sm:$0xff]
  %v1005 = vld [vmem:[%s1 + $0x1e28] sm:$0xff]
  %v1006 = vld [vmem:[%s1 + $0x1e30] sm:$0xff]
  %v1007 = vld [vmem:[%s1 + $0x1e38] sm:$0xff]
  %v1008 = vld [vmem:[%s1 + $0x1e40] sm:$0xff]
  %v1009 = vld [vmem:[%s1 + $0x1e48] sm:$0xff]
  %v1010 = vld [vmem:[%s1 + $0x1e50] sm:$0xff]
  %v1011 = vld [vmem:[%s1 + $0x1e58] sm:$0xff]
  %v1012 = vld [vmem:[%s1 + $0x1e60] sm:$0xff]
  %v1013 = vld [vmem:[%s1 + $0x1e68] sm:$0xff]
  %v1014 = vld [vmem:[%s1 + $0x1e70] sm:$0xff]
  %v1015 = vld [vmem:[%s1 + $0x1e78] sm:$0xff]
  %v1016 = vld [vmem:[%s1 + $0x1e80] sm:$0xff]
  %v1017 = vld [vmem:[%s1 + $0x1e88] sm:$0xff]
  %v1018 = vld [vmem:[%s1 + $0x1e90] sm:$0xff]
  %v1019 = vld [vmem:[%s1 + $0x1e98] sm:$0xff]
  %v1020 = vld [vmem:[%s1 + $0x1ea0] sm:$0xff]
  %v1021 = vld [vmem:[%s1 + $0x1ea8] sm:$0xff]
  %v1022 = vld [vmem:[%s1 + $0x1eb0] sm:$0xff]
  %v1023 = vld [vmem:[%s1 + $0x1eb8] sm:$0xff]
  %v1024 = vld [vmem:[%s1 + $0x1ec0] sm:$0xff]
  %v1025 = vld [vmem:[%s1 + $0x1ec8] sm:$0xff]
  %v1026 = vld [vmem:[%s1 + $0x1ed0] sm:$0xff]
  %v1027 = vld [vmem:[%s1 + $0x1ed8] sm:$0xff]
  %v1028 = vld [vmem:[%s1 + $0x1ee0] sm:$0xff]
  %v1029 = vld [vmem:[%s1 + $0x1ee8] sm:$0xff]
  %v1030 = vld [vmem:[%s1 + $0x1ef0] sm:$0xff]
  %v1031 = vld [vmem:[%s1 + $0x1ef8] sm:$0xff]
  %v1032 = vld [vmem:[%s1 + $0x1f00] sm:$0xff]
  %v1033 = vld [vmem:[%s1 + $0x1f08] sm:$0xff]
  %v1034 = vld [vmem:[%s1 + $0x1f10] sm:$0xff]
  %v1035 = vld [vmem:[%s1 + $0x1f18] sm:$0xff]
  %v1036 = vld [vmem:[%s1 + $0x1f20] sm:$0xff]
  %v1037 = vld [vmem:[%s1 + $0x1f28] sm:$0xff]
  %v1038 = vld [vmem:[%s1 + $0x1f30] sm:$0xff]
  %v1039 = vld [vmem:[%s1 + $0x1f38] sm:$0xff]
  %v1040 = vld [vmem:[%s1 + $0x1f40] sm:$0xff]
  %v1041 = vld [vmem:[%s1 + $0x1f48] sm:$0xff]
  %v1042 = vld [vmem:[%s1 + $0x1f50] sm:$0xff]
  %v1043 = vld [vmem:[%s1 + $0x1f58] sm:$0xff]
  %v1044 = vld [vmem:[%s1 + $0x1f60] sm:$0xff]
  %v1045 = vld [vmem:[%s1 + $0x1f68] sm:$0xff]
  %v1046 = vld [vmem:[%s1 + $0x1f70] sm:$0xff]
  %v1047 = vld [vmem:[%s1 + $0x1f78] sm:$0xff]
  %v1048 = vld [vmem:[%s1 + $0x1f80] sm:$0xff]
  %v1049 = vld [vmem:[%s1 + $0x1f88] sm:$0xff]
  %v1050 = vld [vmem:[%s1 + $0x1f90] sm:$0xff]
  %v1051 = vld [vmem:[%s1 + $0x1f98] sm:$0xff]
  %v1052 = vld [vmem:[%s1 + $0x1fa0] sm:$0xff]
  %v1053 = vld [vmem:[%s1 + $0x1fa8] sm:$0xff]
  %v1054 = vld [vmem:[%s1 + $0x1fb0] sm:$0xff]
  %v1055 = vld [vmem:[%s1 + $0x1fb8] sm:$0xff]
  %v1056 = vld [vmem:[%s1 + $0x1fc0] sm:$0xff]
  %v1057 = vld [vmem:[%s1 + $0x1fc8] sm:$0xff]
  %v1058 = vld [vmem:[%s1 + $0x1fd0] sm:$0xff]
  %v1059 = vld [vmem:[%s1 + $0x1fd8] sm:$0xff]
  %v1060 = vld [vmem:[%s1 + $0x1fe0] sm:$0xff]
  %v1061 = vld [vmem:[%s1 + $0x1fe8] sm:$0xff]
  %v1062 = vld [vmem:[%s1 + $0x1ff0] sm:$0xff]
  %v1063 = vld [vmem:[%s1 + $0x1ff8] sm:$0xff]
  %v1064 = vld [vmem:[%s2] sm:$0xff]
  %v1066 = vperm.slane %v1064, 0
  %v1067 = vperm.slane %v1064, 1
  %v1068 = vperm.slane %v1064, 2
  %v1069 = vperm.slane %v1064, 3
  %v1070 = vperm.slane %v1064, 4
  %v1071 = vperm.slane %v1064, 5
  %v1072 = vperm.slane %v1064, 6
  %v1073 = vperm.slane %v1064, 7
  %1082 = vmatpush.msra.mxu0 %v160
  %1083 = vmatpush.msra.mxu0 %v152
  %1084 = vmatpush.msra.mxu0 %v144
  %1085 = vmatpush.msra.mxu0 %v136
  %1086 = vmatpush.msra.mxu0 %v128
  %1087 = vmatpush.msra.mxu0 %v120
  %1088 = vmatpush.msra.mxu0 %v112
  %1089 = vmatpush.msra.mxu0 %v104
  %1090 = vmatpush.msra.mxu0 %v96
  %1091 = vmatpush.msra.mxu0 %v88
  %1092 = vmatpush.msra.mxu0 %v80
  %1093 = vmatpush.msra.mxu0 %v72
  %1094 = vmatpush.msra.mxu0 %v64
  %1095 = vmatpush.msra.mxu0 %v56
  %1096 = vmatpush.msra.mxu0 %v48
  %1097 = vmatpush.msra.mxu0 %v40
  %1098 = vmatmul.f32.gmra.mxu0 %v32
  %v1099 = vpop.f32.mrf.mxu0
  %v1100 = vadd.f32 %v1066, %v1099
  %1101 = vdwg.mxu0
  %1102 = vmatpush.msra.mxu0 %v288
  %1103 = vmatpush.msra.mxu0 %v280
  %1104 = vmatpush.msra.mxu0 %v272
  %1105 = vmatpush.msra.mxu0 %v264
  %1106 = vmatpush.msra.mxu0 %v256
  %1107 = vmatpush.msra.mxu0 %v248
  %1108 = vmatpush.msra.mxu0 %v240
  %1109 = vmatpush.msra.mxu0 %v232
  %1110 = vmatpush.msra.mxu0 %v224
  %1111 = vmatpush.msra.mxu0 %v216
  %1112 = vmatpush.msra.mxu0 %v208
  %1113 = vmatpush.msra.mxu0 %v200
  %1114 = vmatpush.msra.mxu0 %v192
  %1115 = vmatpush.msra.mxu0 %v184
  %1116 = vmatpush.msra.mxu0 %v176
  %1117 = vmatpush.msra.mxu0 %v168
  %1118 = vmatmul.f32.gmra.mxu0 %v33
  %v1119 = vpop.f32.mrf.mxu0
  %v1120 = vadd.f32 %v1100, %v1119
  %1121 = vdwg.mxu0
  %1122 = vmatpush.msra.mxu0 %v416
  %1123 = vmatpush.msra.mxu0 %v408
  %1124 = vmatpush.msra.mxu0 %v400
  %1125 = vmatpush.msra.mxu0 %v392
  %1126 = vmatpush.msra.mxu0 %v384
  %1127 = vmatpush.msra.mxu0 %v376
  %1128 = vmatpush.msra.mxu0 %v368
  %1129 = vmatpush.msra.mxu0 %v360
  %1130 = vmatpush.msra.mxu0 %v352
  %1131 = vmatpush.msra.mxu0 %v344
  %1132 = vmatpush.msra.mxu0 %v336
  %1133 = vmatpush.msra.mxu0 %v328
  %1134 = vmatpush.msra.mxu0 %v320
  %1135 = vmatpush.msra.mxu0 %v312
  %1136 = vmatpush.msra.mxu0 %v304
  %1137 = vmatpush.msra.mxu0 %v296
  %1138 = vmatmul.f32.gmra.mxu0 %v34
  %v1139 = vpop.f32.mrf.mxu0
  %v1140 = vadd.f32 %v1120, %v1139
  %1141 = vdwg.mxu0
  %1142 = vmatpush.msra.mxu0 %v544
  %1143 = vmatpush.msra.mxu0 %v536
  %1144 = vmatpush.msra.mxu0 %v528
  %1145 = vmatpush.msra.mxu0 %v520
  %1146 = vmatpush.msra.mxu0 %v512
  %1147 = vmatpush.msra.mxu0 %v504
  %1148 = vmatpush.msra.mxu0 %v496
  %1149 = vmatpush.msra.mxu0 %v488
  %1150 = vmatpush.msra.mxu0 %v480
  %1151 = vmatpush.msra.mxu0 %v472
  %1152 = vmatpush.msra.mxu0 %v464
  %1153 = vmatpush.msra.mxu0 %v456
  %1154 = vmatpush.msra.mxu0 %v448
  %1155 = vmatpush.msra.mxu0 %v440
  %1156 = vmatpush.msra.mxu0 %v432
  %1157 = vmatpush.msra.mxu0 %v424
  %1158 = vmatmul.f32.gmra.mxu0 %v35
  %v1159 = vpop.f32.mrf.mxu0
  %v1160 = vadd.f32 %v1140, %v1159
  %1161 = vdwg.mxu0
  %1162 = vmatpush.msra.mxu0 %v672
  %1163 = vmatpush.msra.mxu0 %v664
  %1164 = vmatpush.msra.mxu0 %v656
  %1165 = vmatpush.msra.mxu0 %v648
  %1166 = vmatpush.msra.mxu0 %v640
  %1167 = vmatpush.msra.mxu0 %v632
  %1168 = vmatpush.msra.mxu0 %v624
  %1169 = vmatpush.msra.mxu0 %v616
  %1170 = vmatpush.msra.mxu0 %v608
  %1171 = vmatpush.msra.mxu0 %v600
  %1172 = vmatpush.msra.mxu0 %v592
  %1173 = vmatpush.msra.mxu0 %v584
  %1174 = vmatpush.msra.mxu0 %v576
  %1175 = vmatpush.msra.mxu0 %v568
  %1176 = vmatpush.msra.mxu0 %v560
  %1177 = vmatpush.msra.mxu0 %v552
  %1178 = vmatmul.f32.gmra.mxu0 %v36
  %v1179 = vpop.f32.mrf.mxu0
  %v1180 = vadd.f32 %v1160, %v1179
  %1181 = vdwg.mxu0
  %1182 = vmatpush.msra.mxu0 %v800
  %1183 = vmatpush.msra.mxu0 %v792
  %1184 = vmatpush.msra.mxu0 %v784
  %1185 = vmatpush.msra.mxu0 %v776
  %1186 = vmatpush.msra.mxu0 %v768
  %1187 = vmatpush.msra.mxu0 %v760
  %1188 = vmatpush.msra.mxu0 %v752
  %1189 = vmatpush.msra.mxu0 %v744
  %1190 = vmatpush.msra.mxu0 %v736
  %1191 = vmatpush.msra.mxu0 %v728
  %1192 = vmatpush.msra.mxu0 %v720
  %1193 = vmatpush.msra.mxu0 %v712
  %1194 = vmatpush.msra.mxu0 %v704
  %1195 = vmatpush.msra.mxu0 %v696
  %1196 = vmatpush.msra.mxu0 %v688
  %1197 = vmatpush.msra.mxu0 %v680
  %1198 = vmatmul.f32.gmra.mxu0 %v37
  %v1199 = vpop.f32.mrf.mxu0
  %v1200 = vadd.f32 %v1180, %v1199
  %1201 = vdwg.mxu0
  %1202 = vmatpush.msra.mxu0 %v928
  %1203 = vmatpush.msra.mxu0 %v920
  %1204 = vmatpush.msra.mxu0 %v912
  %1205 = vmatpush.msra.mxu0 %v904
  %1206 = vmatpush.msra.mxu0 %v896
  %1207 = vmatpush.msra.mxu0 %v888
  %1208 = vmatpush.msra.mxu0 %v880
  %1209 = vmatpush.msra.mxu0 %v872
  %1210 = vmatpush.msra.mxu0 %v864
  %1211 = vmatpush.msra.mxu0 %v856
  %1212 = vmatpush.msra.mxu0 %v848
  %1213 = vmatpush.msra.mxu0 %v840
  %1214 = vmatpush.msra.mxu0 %v832
  %1215 = vmatpush.msra.mxu0 %v824
  %1216 = vmatpush.msra.mxu0 %v816
  %1217 = vmatpush.msra.mxu0 %v808
  %1218 = vmatmul.f32.gmra.mxu0 %v38
  %v1219 = vpop.f32.mrf.mxu0
  %v1220 = vadd.f32 %v1200, %v1219
  %1221 = vdwg.mxu0
  %1222 = vmatpush.msra.mxu0 %v1056
  %1223 = vmatpush.msra.mxu0 %v1048
  %1224 = vmatpush.msra.mxu0 %v1040
  %1225 = vmatpush.msra.mxu0 %v1032
  %1226 = vmatpush.msra.mxu0 %v1024
  %1227 = vmatpush.msra.mxu0 %v1016
  %1228 = vmatpush.msra.mxu0 %v1008
  %1229 = vmatpush.msra.mxu0 %v1000
  %1230 = vmatpush.msra.mxu0 %v992
  %1231 = vmatpush.msra.mxu0 %v984
  %1232 = vmatpush.msra.mxu0 %v976
  %1233 = vmatpush.msra.mxu0 %v968
  %1234 = vmatpush.msra.mxu0 %v960
  %1235 = vmatpush.msra.mxu0 %v952
  %1236 = vmatpush.msra.mxu0 %v944
  %1237 = vmatpush.msra.mxu0 %v936
  %1238 = vmatmul.f32.gmra.mxu0 %v39
  %v1239 = vpop.f32.mrf.mxu0
  %v1240 = vadd.f32 %v1220, %v1239
  %1241 = vdwg.mxu0
  %1242 = vmatpush.msra.mxu0 %v161
  %1243 = vmatpush.msra.mxu0 %v153
  %1244 = vmatpush.msra.mxu0 %v145
  %1245 = vmatpush.msra.mxu0 %v137
  %1246 = vmatpush.msra.mxu0 %v129
  %1247 = vmatpush.msra.mxu0 %v121
  %1248 = vmatpush.msra.mxu0 %v113
  %1249 = vmatpush.msra.mxu0 %v105
  %1250 = vmatpush.msra.mxu0 %v97
  %1251 = vmatpush.msra.mxu0 %v89
  %1252 = vmatpush.msra.mxu0 %v81
  %1253 = vmatpush.msra.mxu0 %v73
  %1254 = vmatpush.msra.mxu0 %v65
  %1255 = vmatpush.msra.mxu0 %v57
  %1256 = vmatpush.msra.mxu0 %v49
  %1257 = vmatpush.msra.mxu0 %v41
  %1258 = vmatmul.f32.gmra.mxu0 %v32
  %v1259 = vpop.f32.mrf.mxu0
  %v1260 = vadd.f32 %v1067, %v1259
  %1261 = vdwg.mxu0
  %1262 = vmatpush.msra.mxu0 %v289
  %1263 = vmatpush.msra.mxu0 %v281
  %1264 = vmatpush.msra.mxu0 %v273
  %1265 = vmatpush.msra.mxu0 %v265
  %1266 = vmatpush.msra.mxu0 %v257
  %1267 = vmatpush.msra.mxu0 %v249
  %1268 = vmatpush.msra.mxu0 %v241
  %1269 = vmatpush.msra.mxu0 %v233
  %1270 = vmatpush.msra.mxu0 %v225
  %1271 = vmatpush.msra.mxu0 %v217
  %1272 = vmatpush.msra.mxu0 %v209
  %1273 = vmatpush.msra.mxu0 %v201
  %1274 = vmatpush.msra.mxu0 %v193
  %1275 = vmatpush.msra.mxu0 %v185
  %1276 = vmatpush.msra.mxu0 %v177
  %1277 = vmatpush.msra.mxu0 %v169
  %1278 = vmatmul.f32.gmra.mxu0 %v33
  %v1279 = vpop.f32.mrf.mxu0
  %v1280 = vadd.f32 %v1260, %v1279
  %1281 = vdwg.mxu0
  %1282 = vmatpush.msra.mxu0 %v417
  %1283 = vmatpush.msra.mxu0 %v409
  %1284 = vmatpush.msra.mxu0 %v401
  %1285 = vmatpush.msra.mxu0 %v393
  %1286 = vmatpush.msra.mxu0 %v385
  %1287 = vmatpush.msra.mxu0 %v377
  %1288 = vmatpush.msra.mxu0 %v369
  %1289 = vmatpush.msra.mxu0 %v361
  %1290 = vmatpush.msra.mxu0 %v353
  %1291 = vmatpush.msra.mxu0 %v345
  %1292 = vmatpush.msra.mxu0 %v337
  %1293 = vmatpush.msra.mxu0 %v329
  %1294 = vmatpush.msra.mxu0 %v321
  %1295 = vmatpush.msra.mxu0 %v313
  %1296 = vmatpush.msra.mxu0 %v305
  %1297 = vmatpush.msra.mxu0 %v297
  %1298 = vmatmul.f32.gmra.mxu0 %v34
  %v1299 = vpop.f32.mrf.mxu0
  %v1300 = vadd.f32 %v1280, %v1299
  %1301 = vdwg.mxu0
  %1302 = vmatpush.msra.mxu0 %v545
  %1303 = vmatpush.msra.mxu0 %v537
  %1304 = vmatpush.msra.mxu0 %v529
  %1305 = vmatpush.msra.mxu0 %v521
  %1306 = vmatpush.msra.mxu0 %v513
  %1307 = vmatpush.msra.mxu0 %v505
  %1308 = vmatpush.msra.mxu0 %v497
  %1309 = vmatpush.msra.mxu0 %v489
  %1310 = vmatpush.msra.mxu0 %v481
  %1311 = vmatpush.msra.mxu0 %v473
  %1312 = vmatpush.msra.mxu0 %v465
  %1313 = vmatpush.msra.mxu0 %v457
  %1314 = vmatpush.msra.mxu0 %v449
  %1315 = vmatpush.msra.mxu0 %v441
  %1316 = vmatpush.msra.mxu0 %v433
  %1317 = vmatpush.msra.mxu0 %v425
  %1318 = vmatmul.f32.gmra.mxu0 %v35
  %v1319 = vpop.f32.mrf.mxu0
  %v1320 = vadd.f32 %v1300, %v1319
  %1321 = vdwg.mxu0
  %1322 = vmatpush.msra.mxu0 %v673
  %1323 = vmatpush.msra.mxu0 %v665
  %1324 = vmatpush.msra.mxu0 %v657
  %1325 = vmatpush.msra.mxu0 %v649
  %1326 = vmatpush.msra.mxu0 %v641
  %1327 = vmatpush.msra.mxu0 %v633
  %1328 = vmatpush.msra.mxu0 %v625
  %1329 = vmatpush.msra.mxu0 %v617
  %1330 = vmatpush.msra.mxu0 %v609
  %1331 = vmatpush.msra.mxu0 %v601
  %1332 = vmatpush.msra.mxu0 %v593
  %1333 = vmatpush.msra.mxu0 %v585
  %1334 = vmatpush.msra.mxu0 %v577
  %1335 = vmatpush.msra.mxu0 %v569
  %1336 = vmatpush.msra.mxu0 %v561
  %1337 = vmatpush.msra.mxu0 %v553
  %1338 = vmatmul.f32.gmra.mxu0 %v36
  %v1339 = vpop.f32.mrf.mxu0
  %v1340 = vadd.f32 %v1320, %v1339
  %1341 = vdwg.mxu0
  %1342 = vmatpush.msra.mxu0 %v801
  %1343 = vmatpush.msra.mxu0 %v793
  %1344 = vmatpush.msra.mxu0 %v785
  %1345 = vmatpush.msra.mxu0 %v777
  %1346 = vmatpush.msra.mxu0 %v769
  %1347 = vmatpush.msra.mxu0 %v761
  %1348 = vmatpush.msra.mxu0 %v753
  %1349 = vmatpush.msra.mxu0 %v745
  %1350 = vmatpush.msra.mxu0 %v737
  %1351 = vmatpush.msra.mxu0 %v729
  %1352 = vmatpush.msra.mxu0 %v721
  %1353 = vmatpush.msra.mxu0 %v713
  %1354 = vmatpush.msra.mxu0 %v705
  %1355 = vmatpush.msra.mxu0 %v697
  %1356 = vmatpush.msra.mxu0 %v689
  %1357 = vmatpush.msra.mxu0 %v681
  %1358 = vmatmul.f32.gmra.mxu0 %v37
  %v1359 = vpop.f32.mrf.mxu0
  %v1360 = vadd.f32 %v1340, %v1359
  %1361 = vdwg.mxu0
  %1362 = vmatpush.msra.mxu0 %v929
  %1363 = vmatpush.msra.mxu0 %v921
  %1364 = vmatpush.msra.mxu0 %v913
  %1365 = vmatpush.msra.mxu0 %v905
  %1366 = vmatpush.msra.mxu0 %v897
  %1367 = vmatpush.msra.mxu0 %v889
  %1368 = vmatpush.msra.mxu0 %v881
  %1369 = vmatpush.msra.mxu0 %v873
  %1370 = vmatpush.msra.mxu0 %v865
  %1371 = vmatpush.msra.mxu0 %v857
  %1372 = vmatpush.msra.mxu0 %v849
  %1373 = vmatpush.msra.mxu0 %v841
  %1374 = vmatpush.msra.mxu0 %v833
  %1375 = vmatpush.msra.mxu0 %v825
  %1376 = vmatpush.msra.mxu0 %v817
  %1377 = vmatpush.msra.mxu0 %v809
  %1378 = vmatmul.f32.gmra.mxu0 %v38
  %v1379 = vpop.f32.mrf.mxu0
  %v1380 = vadd.f32 %v1360, %v1379
  %1381 = vdwg.mxu0
  %1382 = vmatpush.msra.mxu0 %v1057
  %1383 = vmatpush.msra.mxu0 %v1049
  %1384 = vmatpush.msra.mxu0 %v1041
  %1385 = vmatpush.msra.mxu0 %v1033
  %1386 = vmatpush.msra.mxu0 %v1025
  %1387 = vmatpush.msra.mxu0 %v1017
  %1388 = vmatpush.msra.mxu0 %v1009
  %1389 = vmatpush.msra.mxu0 %v1001
  %1390 = vmatpush.msra.mxu0 %v993
  %1391 = vmatpush.msra.mxu0 %v985
  %1392 = vmatpush.msra.mxu0 %v977
  %1393 = vmatpush.msra.mxu0 %v969
  %1394 = vmatpush.msra.mxu0 %v961
  %1395 = vmatpush.msra.mxu0 %v953
  %1396 = vmatpush.msra.mxu0 %v945
  %1397 = vmatpush.msra.mxu0 %v937
  %1398 = vmatmul.f32.gmra.mxu0 %v39
  %v1399 = vpop.f32.mrf.mxu0
  %v1400 = vadd.f32 %v1380, %v1399
  %1401 = vdwg.mxu0
  %1402 = vmatpush.msra.mxu0 %v162
  %1403 = vmatpush.msra.mxu0 %v154
  %1404 = vmatpush.msra.mxu0 %v146
  %1405 = vmatpush.msra.mxu0 %v138
  %1406 = vmatpush.msra.mxu0 %v130
  %1407 = vmatpush.msra.mxu0 %v122
  %1408 = vmatpush.msra.mxu0 %v114
  %1409 = vmatpush.msra.mxu0 %v106
  %1410 = vmatpush.msra.mxu0 %v98
  %1411 = vmatpush.msra.mxu0 %v90
  %1412 = vmatpush.msra.mxu0 %v82
  %1413 = vmatpush.msra.mxu0 %v74
  %1414 = vmatpush.msra.mxu0 %v66
  %1415 = vmatpush.msra.mxu0 %v58
  %1416 = vmatpush.msra.mxu0 %v50
  %1417 = vmatpush.msra.mxu0 %v42
  %1418 = vmatmul.f32.gmra.mxu0 %v32
  %v1419 = vpop.f32.mrf.mxu0
  %v1420 = vadd.f32 %v1068, %v1419
  %1421 = vdwg.mxu0
  %1422 = vmatpush.msra.mxu0 %v290
  %1423 = vmatpush.msra.mxu0 %v282
  %1424 = vmatpush.msra.mxu0 %v274
  %1425 = vmatpush.msra.mxu0 %v266
  %1426 = vmatpush.msra.mxu0 %v258
  %1427 = vmatpush.msra.mxu0 %v250
  %1428 = vmatpush.msra.mxu0 %v242
  %1429 = vmatpush.msra.mxu0 %v234
  %1430 = vmatpush.msra.mxu0 %v226
  %1431 = vmatpush.msra.mxu0 %v218
  %1432 = vmatpush.msra.mxu0 %v210
  %1433 = vmatpush.msra.mxu0 %v202
  %1434 = vmatpush.msra.mxu0 %v194
  %1435 = vmatpush.msra.mxu0 %v186
  %1436 = vmatpush.msra.mxu0 %v178
  %1437 = vmatpush.msra.mxu0 %v170
  %1438 = vmatmul.f32.gmra.mxu0 %v33
  %v1439 = vpop.f32.mrf.mxu0
  %v1440 = vadd.f32 %v1420, %v1439
  %1441 = vdwg.mxu0
  %1442 = vmatpush.msra.mxu0 %v418
  %1443 = vmatpush.msra.mxu0 %v410
  %1444 = vmatpush.msra.mxu0 %v402
  %1445 = vmatpush.msra.mxu0 %v394
  %1446 = vmatpush.msra.mxu0 %v386
  %1447 = vmatpush.msra.mxu0 %v378
  %1448 = vmatpush.msra.mxu0 %v370
  %1449 = vmatpush.msra.mxu0 %v362
  %1450 = vmatpush.msra.mxu0 %v354
  %1451 = vmatpush.msra.mxu0 %v346
  %1452 = vmatpush.msra.mxu0 %v338
  %1453 = vmatpush.msra.mxu0 %v330
  %1454 = vmatpush.msra.mxu0 %v322
  %1455 = vmatpush.msra.mxu0 %v314
  %1456 = vmatpush.msra.mxu0 %v306
  %1457 = vmatpush.msra.mxu0 %v298
  %1458 = vmatmul.f32.gmra.mxu0 %v34
  %v1459 = vpop.f32.mrf.mxu0
  %v1460 = vadd.f32 %v1440, %v1459
  %1461 = vdwg.mxu0
  %1462 = vmatpush.msra.mxu0 %v546
  %1463 = vmatpush.msra.mxu0 %v538
  %1464 = vmatpush.msra.mxu0 %v530
  %1465 = vmatpush.msra.mxu0 %v522
  %1466 = vmatpush.msra.mxu0 %v514
  %1467 = vmatpush.msra.mxu0 %v506
  %1468 = vmatpush.msra.mxu0 %v498
  %1469 = vmatpush.msra.mxu0 %v490
  %1470 = vmatpush.msra.mxu0 %v482
  %1471 = vmatpush.msra.mxu0 %v474
  %1472 = vmatpush.msra.mxu0 %v466
  %1473 = vmatpush.msra.mxu0 %v458
  %1474 = vmatpush.msra.mxu0 %v450
  %1475 = vmatpush.msra.mxu0 %v442
  %1476 = vmatpush.msra.mxu0 %v434
  %1477 = vmatpush.msra.mxu0 %v426
  %1478 = vmatmul.f32.gmra.mxu0 %v35
  %v1479 = vpop.f32.mrf.mxu0
  %v1480 = vadd.f32 %v1460, %v1479
  %1481 = vdwg.mxu0
  %1482 = vmatpush.msra.mxu0 %v674
  %1483 = vmatpush.msra.mxu0 %v666
  %1484 = vmatpush.msra.mxu0 %v658
  %1485 = vmatpush.msra.mxu0 %v650
  %1486 = vmatpush.msra.mxu0 %v642
  %1487 = vmatpush.msra.mxu0 %v634
  %1488 = vmatpush.msra.mxu0 %v626
  %1489 = vmatpush.msra.mxu0 %v618
  %1490 = vmatpush.msra.mxu0 %v610
  %1491 = vmatpush.msra.mxu0 %v602
  %1492 = vmatpush.msra.mxu0 %v594
  %1493 = vmatpush.msra.mxu0 %v586
  %1494 = vmatpush.msra.mxu0 %v578
  %1495 = vmatpush.msra.mxu0 %v570
  %1496 = vmatpush.msra.mxu0 %v562
  %1497 = vmatpush.msra.mxu0 %v554
  %1498 = vmatmul.f32.gmra.mxu0 %v36
  %v1499 = vpop.f32.mrf.mxu0
  %v1500 = vadd.f32 %v1480, %v1499
  %1501 = vdwg.mxu0
  %1502 = vmatpush.msra.mxu0 %v802
  %1503 = vmatpush.msra.mxu0 %v794
  %1504 = vmatpush.msra.mxu0 %v786
  %1505 = vmatpush.msra.mxu0 %v778
  %1506 = vmatpush.msra.mxu0 %v770
  %1507 = vmatpush.msra.mxu0 %v762
  %1508 = vmatpush.msra.mxu0 %v754
  %1509 = vmatpush.msra.mxu0 %v746
  %1510 = vmatpush.msra.mxu0 %v738
  %1511 = vmatpush.msra.mxu0 %v730
  %1512 = vmatpush.msra.mxu0 %v722
  %1513 = vmatpush.msra.mxu0 %v714
  %1514 = vmatpush.msra.mxu0 %v706
  %1515 = vmatpush.msra.mxu0 %v698
  %1516 = vmatpush.msra.mxu0 %v690
  %1517 = vmatpush.msra.mxu0 %v682
  %1518 = vmatmul.f32.gmra.mxu0 %v37
  %v1519 = vpop.f32.mrf.mxu0
  %v1520 = vadd.f32 %v1500, %v1519
  %1521 = vdwg.mxu0
  %1522 = vmatpush.msra.mxu0 %v930
  %1523 = vmatpush.msra.mxu0 %v922
  %1524 = vmatpush.msra.mxu0 %v914
  %1525 = vmatpush.msra.mxu0 %v906
  %1526 = vmatpush.msra.mxu0 %v898
  %1527 = vmatpush.msra.mxu0 %v890
  %1528 = vmatpush.msra.mxu0 %v882
  %1529 = vmatpush.msra.mxu0 %v874
  %1530 = vmatpush.msra.mxu0 %v866
  %1531 = vmatpush.msra.mxu0 %v858
  %1532 = vmatpush.msra.mxu0 %v850
  %1533 = vmatpush.msra.mxu0 %v842
  %1534 = vmatpush.msra.mxu0 %v834
  %1535 = vmatpush.msra.mxu0 %v826
  %1536 = vmatpush.msra.mxu0 %v818
  %1537 = vmatpush.msra.mxu0 %v810
  %1538 = vmatmul.f32.gmra.mxu0 %v38
  %v1539 = vpop.f32.mrf.mxu0
  %v1540 = vadd.f32 %v1520, %v1539
  %1541 = vdwg.mxu0
  %1542 = vmatpush.msra.mxu0 %v1058
  %1543 = vmatpush.msra.mxu0 %v1050
  %1544 = vmatpush.msra.mxu0 %v1042
  %1545 = vmatpush.msra.mxu0 %v1034
  %1546 = vmatpush.msra.mxu0 %v1026
  %1547 = vmatpush.msra.mxu0 %v1018
  %1548 = vmatpush.msra.mxu0 %v1010
  %1549 = vmatpush.msra.mxu0 %v1002
  %1550 = vmatpush.msra.mxu0 %v994
  %1551 = vmatpush.msra.mxu0 %v986
  %1552 = vmatpush.msra.mxu0 %v978
  %1553 = vmatpush.msra.mxu0 %v970
  %1554 = vmatpush.msra.mxu0 %v962
  %1555 = vmatpush.msra.mxu0 %v954
  %1556 = vmatpush.msra.mxu0 %v946
  %1557 = vmatpush.msra.mxu0 %v938
  %1558 = vmatmul.f32.gmra.mxu0 %v39
  %v1559 = vpop.f32.mrf.mxu0
  %v1560 = vadd.f32 %v1540, %v1559
  %1561 = vdwg.mxu0
  %1562 = vmatpush.msra.mxu0 %v163
  %1563 = vmatpush.msra.mxu0 %v155
  %1564 = vmatpush.msra.mxu0 %v147
  %1565 = vmatpush.msra.mxu0 %v139
  %1566 = vmatpush.msra.mxu0 %v131
  %1567 = vmatpush.msra.mxu0 %v123
  %1568 = vmatpush.msra.mxu0 %v115
  %1569 = vmatpush.msra.mxu0 %v107
  %1570 = vmatpush.msra.mxu0 %v99
  %1571 = vmatpush.msra.mxu0 %v91
  %1572 = vmatpush.msra.mxu0 %v83
  %1573 = vmatpush.msra.mxu0 %v75
  %1574 = vmatpush.msra.mxu0 %v67
  %1575 = vmatpush.msra.mxu0 %v59
  %1576 = vmatpush.msra.mxu0 %v51
  %1577 = vmatpush.msra.mxu0 %v43
  %1578 = vmatmul.f32.gmra.mxu0 %v32
  %v1579 = vpop.f32.mrf.mxu0
  %v1580 = vadd.f32 %v1069, %v1579
  %1581 = vdwg.mxu0
  %1582 = vmatpush.msra.mxu0 %v291
  %1583 = vmatpush.msra.mxu0 %v283
  %1584 = vmatpush.msra.mxu0 %v275
  %1585 = vmatpush.msra.mxu0 %v267
  %1586 = vmatpush.msra.mxu0 %v259
  %1587 = vmatpush.msra.mxu0 %v251
  %1588 = vmatpush.msra.mxu0 %v243
  %1589 = vmatpush.msra.mxu0 %v235
  %1590 = vmatpush.msra.mxu0 %v227
  %1591 = vmatpush.msra.mxu0 %v219
  %1592 = vmatpush.msra.mxu0 %v211
  %1593 = vmatpush.msra.mxu0 %v203
  %1594 = vmatpush.msra.mxu0 %v195
  %1595 = vmatpush.msra.mxu0 %v187
  %1596 = vmatpush.msra.mxu0 %v179
  %1597 = vmatpush.msra.mxu0 %v171
  %1598 = vmatmul.f32.gmra.mxu0 %v33
  %v1599 = vpop.f32.mrf.mxu0
  %v1600 = vadd.f32 %v1580, %v1599
  %1601 = vdwg.mxu0
  %1602 = vmatpush.msra.mxu0 %v419
  %1603 = vmatpush.msra.mxu0 %v411
  %1604 = vmatpush.msra.mxu0 %v403
  %1605 = vmatpush.msra.mxu0 %v395
  %1606 = vmatpush.msra.mxu0 %v387
  %1607 = vmatpush.msra.mxu0 %v379
  %1608 = vmatpush.msra.mxu0 %v371
  %1609 = vmatpush.msra.mxu0 %v363
  %1610 = vmatpush.msra.mxu0 %v355
  %1611 = vmatpush.msra.mxu0 %v347
  %1612 = vmatpush.msra.mxu0 %v339
  %1613 = vmatpush.msra.mxu0 %v331
  %1614 = vmatpush.msra.mxu0 %v323
  %1615 = vmatpush.msra.mxu0 %v315
  %1616 = vmatpush.msra.mxu0 %v307
  %1617 = vmatpush.msra.mxu0 %v299
  %1618 = vmatmul.f32.gmra.mxu0 %v34
  %v1619 = vpop.f32.mrf.mxu0
  %v1620 = vadd.f32 %v1600, %v1619
  %1621 = vdwg.mxu0
  %1622 = vmatpush.msra.mxu0 %v547
  %1623 = vmatpush.msra.mxu0 %v539
  %1624 = vmatpush.msra.mxu0 %v531
  %1625 = vmatpush.msra.mxu0 %v523
  %1626 = vmatpush.msra.mxu0 %v515
  %1627 = vmatpush.msra.mxu0 %v507
  %1628 = vmatpush.msra.mxu0 %v499
  %1629 = vmatpush.msra.mxu0 %v491
  %1630 = vmatpush.msra.mxu0 %v483
  %1631 = vmatpush.msra.mxu0 %v475
  %1632 = vmatpush.msra.mxu0 %v467
  %1633 = vmatpush.msra.mxu0 %v459
  %1634 = vmatpush.msra.mxu0 %v451
  %1635 = vmatpush.msra.mxu0 %v443
  %1636 = vmatpush.msra.mxu0 %v435
  %1637 = vmatpush.msra.mxu0 %v427
  %1638 = vmatmul.f32.gmra.mxu0 %v35
  %v1639 = vpop.f32.mrf.mxu0
  %v1640 = vadd.f32 %v1620, %v1639
  %1641 = vdwg.mxu0
  %1642 = vmatpush.msra.mxu0 %v675
  %1643 = vmatpush.msra.mxu0 %v667
  %1644 = vmatpush.msra.mxu0 %v659
  %1645 = vmatpush.msra.mxu0 %v651
  %1646 = vmatpush.msra.mxu0 %v643
  %1647 = vmatpush.msra.mxu0 %v635
  %1648 = vmatpush.msra.mxu0 %v627
  %1649 = vmatpush.msra.mxu0 %v619
  %1650 = vmatpush.msra.mxu0 %v611
  %1651 = vmatpush.msra.mxu0 %v603
  %1652 = vmatpush.msra.mxu0 %v595
  %1653 = vmatpush.msra.mxu0 %v587
  %1654 = vmatpush.msra.mxu0 %v579
  %1655 = vmatpush.msra.mxu0 %v571
  %1656 = vmatpush.msra.mxu0 %v563
  %1657 = vmatpush.msra.mxu0 %v555
  %1658 = vmatmul.f32.gmra.mxu0 %v36
  %v1659 = vpop.f32.mrf.mxu0
  %v1660 = vadd.f32 %v1640, %v1659
  %1661 = vdwg.mxu0
  %1662 = vmatpush.msra.mxu0 %v803
  %1663 = vmatpush.msra.mxu0 %v795
  %1664 = vmatpush.msra.mxu0 %v787
  %1665 = vmatpush.msra.mxu0 %v779
  %1666 = vmatpush.msra.mxu0 %v771
  %1667 = vmatpush.msra.mxu0 %v763
  %1668 = vmatpush.msra.mxu0 %v755
  %1669 = vmatpush.msra.mxu0 %v747
  %1670 = vmatpush.msra.mxu0 %v739
  %1671 = vmatpush.msra.mxu0 %v731
  %1672 = vmatpush.msra.mxu0 %v723
  %1673 = vmatpush.msra.mxu0 %v715
  %1674 = vmatpush.msra.mxu0 %v707
  %1675 = vmatpush.msra.mxu0 %v699
  %1676 = vmatpush.msra.mxu0 %v691
  %1677 = vmatpush.msra.mxu0 %v683
  %1678 = vmatmul.f32.gmra.mxu0 %v37
  %v1679 = vpop.f32.mrf.mxu0
  %v1680 = vadd.f32 %v1660, %v1679
  %1681 = vdwg.mxu0
  %1682 = vmatpush.msra.mxu0 %v931
  %1683 = vmatpush.msra.mxu0 %v923
  %1684 = vmatpush.msra.mxu0 %v915
  %1685 = vmatpush.msra.mxu0 %v907
  %1686 = vmatpush.msra.mxu0 %v899
  %1687 = vmatpush.msra.mxu0 %v891
  %1688 = vmatpush.msra.mxu0 %v883
  %1689 = vmatpush.msra.mxu0 %v875
  %1690 = vmatpush.msra.mxu0 %v867
  %1691 = vmatpush.msra.mxu0 %v859
  %1692 = vmatpush.msra.mxu0 %v851
  %1693 = vmatpush.msra.mxu0 %v843
  %1694 = vmatpush.msra.mxu0 %v835
  %1695 = vmatpush.msra.mxu0 %v827
  %1696 = vmatpush.msra.mxu0 %v819
  %1697 = vmatpush.msra.mxu0 %v811
  %1698 = vmatmul.f32.gmra.mxu0 %v38
  %v1699 = vpop.f32.mrf.mxu0
  %v1700 = vadd.f32 %v1680, %v1699
  %1701 = vdwg.mxu0
  %1702 = vmatpush.msra.mxu0 %v1059
  %1703 = vmatpush.msra.mxu0 %v1051
  %1704 = vmatpush.msra.mxu0 %v1043
  %1705 = vmatpush.msra.mxu0 %v1035
  %1706 = vmatpush.msra.mxu0 %v1027
  %1707 = vmatpush.msra.mxu0 %v1019
  %1708 = vmatpush.msra.mxu0 %v1011
  %1709 = vmatpush.msra.mxu0 %v1003
  %1710 = vmatpush.msra.mxu0 %v995
  %1711 = vmatpush.msra.mxu0 %v987
  %1712 = vmatpush.msra.mxu0 %v979
  %1713 = vmatpush.msra.mxu0 %v971
  %1714 = vmatpush.msra.mxu0 %v963
  %1715 = vmatpush.msra.mxu0 %v955
  %1716 = vmatpush.msra.mxu0 %v947
  %1717 = vmatpush.msra.mxu0 %v939
  %1718 = vmatmul.f32.gmra.mxu0 %v39
  %v1719 = vpop.f32.mrf.mxu0
  %v1720 = vadd.f32 %v1700, %v1719
  %1721 = vdwg.mxu0
  %1722 = vmatpush.msra.mxu0 %v164
  %1723 = vmatpush.msra.mxu0 %v156
  %1724 = vmatpush.msra.mxu0 %v148
  %1725 = vmatpush.msra.mxu0 %v140
  %1726 = vmatpush.msra.mxu0 %v132
  %1727 = vmatpush.msra.mxu0 %v124
  %1728 = vmatpush.msra.mxu0 %v116
  %1729 = vmatpush.msra.mxu0 %v108
  %1730 = vmatpush.msra.mxu0 %v100
  %1731 = vmatpush.msra.mxu0 %v92
  %1732 = vmatpush.msra.mxu0 %v84
  %1733 = vmatpush.msra.mxu0 %v76
  %1734 = vmatpush.msra.mxu0 %v68
  %1735 = vmatpush.msra.mxu0 %v60
  %1736 = vmatpush.msra.mxu0 %v52
  %1737 = vmatpush.msra.mxu0 %v44
  %1738 = vmatmul.f32.gmra.mxu0 %v32
  %v1739 = vpop.f32.mrf.mxu0
  %v1740 = vadd.f32 %v1070, %v1739
  %1741 = vdwg.mxu0
  %1742 = vmatpush.msra.mxu0 %v292
  %1743 = vmatpush.msra.mxu0 %v284
  %1744 = vmatpush.msra.mxu0 %v276
  %1745 = vmatpush.msra.mxu0 %v268
  %1746 = vmatpush.msra.mxu0 %v260
  %1747 = vmatpush.msra.mxu0 %v252
  %1748 = vmatpush.msra.mxu0 %v244
  %1749 = vmatpush.msra.mxu0 %v236
  %1750 = vmatpush.msra.mxu0 %v228
  %1751 = vmatpush.msra.mxu0 %v220
  %1752 = vmatpush.msra.mxu0 %v212
  %1753 = vmatpush.msra.mxu0 %v204
  %1754 = vmatpush.msra.mxu0 %v196
  %1755 = vmatpush.msra.mxu0 %v188
  %1756 = vmatpush.msra.mxu0 %v180
  %1757 = vmatpush.msra.mxu0 %v172
  %1758 = vmatmul.f32.gmra.mxu0 %v33
  %v1759 = vpop.f32.mrf.mxu0
  %v1760 = vadd.f32 %v1740, %v1759
  %1761 = vdwg.mxu0
  %1762 = vmatpush.msra.mxu0 %v420
  %1763 = vmatpush.msra.mxu0 %v412
  %1764 = vmatpush.msra.mxu0 %v404
  %1765 = vmatpush.msra.mxu0 %v396
  %1766 = vmatpush.msra.mxu0 %v388
  %1767 = vmatpush.msra.mxu0 %v380
  %1768 = vmatpush.msra.mxu0 %v372
  %1769 = vmatpush.msra.mxu0 %v364
  %1770 = vmatpush.msra.mxu0 %v356
  %1771 = vmatpush.msra.mxu0 %v348
  %1772 = vmatpush.msra.mxu0 %v340
  %1773 = vmatpush.msra.mxu0 %v332
  %1774 = vmatpush.msra.mxu0 %v324
  %1775 = vmatpush.msra.mxu0 %v316
  %1776 = vmatpush.msra.mxu0 %v308
  %1777 = vmatpush.msra.mxu0 %v300
  %1778 = vmatmul.f32.gmra.mxu0 %v34
  %v1779 = vpop.f32.mrf.mxu0
  %v1780 = vadd.f32 %v1760, %v1779
  %1781 = vdwg.mxu0
  %1782 = vmatpush.msra.mxu0 %v548
  %1783 = vmatpush.msra.mxu0 %v540
  %1784 = vmatpush.msra.mxu0 %v532
  %1785 = vmatpush.msra.mxu0 %v524
  %1786 = vmatpush.msra.mxu0 %v516
  %1787 = vmatpush.msra.mxu0 %v508
  %1788 = vmatpush.msra.mxu0 %v500
  %1789 = vmatpush.msra.mxu0 %v492
  %1790 = vmatpush.msra.mxu0 %v484
  %1791 = vmatpush.msra.mxu0 %v476
  %1792 = vmatpush.msra.mxu0 %v468
  %1793 = vmatpush.msra.mxu0 %v460
  %1794 = vmatpush.msra.mxu0 %v452
  %1795 = vmatpush.msra.mxu0 %v444
  %1796 = vmatpush.msra.mxu0 %v436
  %1797 = vmatpush.msra.mxu0 %v428
  %1798 = vmatmul.f32.gmra.mxu0 %v35
  %v1799 = vpop.f32.mrf.mxu0
  %v1800 = vadd.f32 %v1780, %v1799
  %1801 = vdwg.mxu0
  %1802 = vmatpush.msra.mxu0 %v676
  %1803 = vmatpush.msra.mxu0 %v668
  %1804 = vmatpush.msra.mxu0 %v660
  %1805 = vmatpush.msra.mxu0 %v652
  %1806 = vmatpush.msra.mxu0 %v644
  %1807 = vmatpush.msra.mxu0 %v636
  %1808 = vmatpush.msra.mxu0 %v628
  %1809 = vmatpush.msra.mxu0 %v620
  %1810 = vmatpush.msra.mxu0 %v612
  %1811 = vmatpush.msra.mxu0 %v604
  %1812 = vmatpush.msra.mxu0 %v596
  %1813 = vmatpush.msra.mxu0 %v588
  %1814 = vmatpush.msra.mxu0 %v580
  %1815 = vmatpush.msra.mxu0 %v572
  %1816 = vmatpush.msra.mxu0 %v564
  %1817 = vmatpush.msra.mxu0 %v556
  %1818 = vmatmul.f32.gmra.mxu0 %v36
  %v1819 = vpop.f32.mrf.mxu0
  %v1820 = vadd.f32 %v1800, %v1819
  %1821 = vdwg.mxu0
  %1822 = vmatpush.msra.mxu0 %v804
  %1823 = vmatpush.msra.mxu0 %v796
  %1824 = vmatpush.msra.mxu0 %v788
  %1825 = vmatpush.msra.mxu0 %v780
  %1826 = vmatpush.msra.mxu0 %v772
  %1827 = vmatpush.msra.mxu0 %v764
  %1828 = vmatpush.msra.mxu0 %v756
  %1829 = vmatpush.msra.mxu0 %v748
  %1830 = vmatpush.msra.mxu0 %v740
  %1831 = vmatpush.msra.mxu0 %v732
  %1832 = vmatpush.msra.mxu0 %v724
  %1833 = vmatpush.msra.mxu0 %v716
  %1834 = vmatpush.msra.mxu0 %v708
  %1835 = vmatpush.msra.mxu0 %v700
  %1836 = vmatpush.msra.mxu0 %v692
  %1837 = vmatpush.msra.mxu0 %v684
  %1838 = vmatmul.f32.gmra.mxu0 %v37
  %v1839 = vpop.f32.mrf.mxu0
  %v1840 = vadd.f32 %v1820, %v1839
  %1841 = vdwg.mxu0
  %1842 = vmatpush.msra.mxu0 %v932
  %1843 = vmatpush.msra.mxu0 %v924
  %1844 = vmatpush.msra.mxu0 %v916
  %1845 = vmatpush.msra.mxu0 %v908
  %1846 = vmatpush.msra.mxu0 %v900
  %1847 = vmatpush.msra.mxu0 %v892
  %1848 = vmatpush.msra.mxu0 %v884
  %1849 = vmatpush.msra.mxu0 %v876
  %1850 = vmatpush.msra.mxu0 %v868
  %1851 = vmatpush.msra.mxu0 %v860
  %1852 = vmatpush.msra.mxu0 %v852
  %1853 = vmatpush.msra.mxu0 %v844
  %1854 = vmatpush.msra.mxu0 %v836
  %1855 = vmatpush.msra.mxu0 %v828
  %1856 = vmatpush.msra.mxu0 %v820
  %1857 = vmatpush.msra.mxu0 %v812
  %1858 = vmatmul.f32.gmra.mxu0 %v38
  %v1859 = vpop.f32.mrf.mxu0
  %v1860 = vadd.f32 %v1840, %v1859
  %1861 = vdwg.mxu0
  %1862 = vmatpush.msra.mxu0 %v1060
  %1863 = vmatpush.msra.mxu0 %v1052
  %1864 = vmatpush.msra.mxu0 %v1044
  %1865 = vmatpush.msra.mxu0 %v1036
  %1866 = vmatpush.msra.mxu0 %v1028
  %1867 = vmatpush.msra.mxu0 %v1020
  %1868 = vmatpush.msra.mxu0 %v1012
  %1869 = vmatpush.msra.mxu0 %v1004
  %1870 = vmatpush.msra.mxu0 %v996
  %1871 = vmatpush.msra.mxu0 %v988
  %1872 = vmatpush.msra.mxu0 %v980
  %1873 = vmatpush.msra.mxu0 %v972
  %1874 = vmatpush.msra.mxu0 %v964
  %1875 = vmatpush.msra.mxu0 %v956
  %1876 = vmatpush.msra.mxu0 %v948
  %1877 = vmatpush.msra.mxu0 %v940
  %1878 = vmatmul.f32.gmra.mxu0 %v39
  %v1879 = vpop.f32.mrf.mxu0
  %v1880 = vadd.f32 %v1860, %v1879
  %1881 = vdwg.mxu0
  %1882 = vmatpush.msra.mxu0 %v165
  %1883 = vmatpush.msra.mxu0 %v157
  %1884 = vmatpush.msra.mxu0 %v149
  %1885 = vmatpush.msra.mxu0 %v141
  %1886 = vmatpush.msra.mxu0 %v133
  %1887 = vmatpush.msra.mxu0 %v125
  %1888 = vmatpush.msra.mxu0 %v117
  %1889 = vmatpush.msra.mxu0 %v109
  %1890 = vmatpush.msra.mxu0 %v101
  %1891 = vmatpush.msra.mxu0 %v93
  %1892 = vmatpush.msra.mxu0 %v85
  %1893 = vmatpush.msra.mxu0 %v77
  %1894 = vmatpush.msra.mxu0 %v69
  %1895 = vmatpush.msra.mxu0 %v61
  %1896 = vmatpush.msra.mxu0 %v53
  %1897 = vmatpush.msra.mxu0 %v45
  %1898 = vmatmul.f32.gmra.mxu0 %v32
  %v1899 = vpop.f32.mrf.mxu0
  %v1900 = vadd.f32 %v1071, %v1899
  %1901 = vdwg.mxu0
  %1902 = vmatpush.msra.mxu0 %v293
  %1903 = vmatpush.msra.mxu0 %v285
  %1904 = vmatpush.msra.mxu0 %v277
  %1905 = vmatpush.msra.mxu0 %v269
  %1906 = vmatpush.msra.mxu0 %v261
  %1907 = vmatpush.msra.mxu0 %v253
  %1908 = vmatpush.msra.mxu0 %v245
  %1909 = vmatpush.msra.mxu0 %v237
  %1910 = vmatpush.msra.mxu0 %v229
  %1911 = vmatpush.msra.mxu0 %v221
  %1912 = vmatpush.msra.mxu0 %v213
  %1913 = vmatpush.msra.mxu0 %v205
  %1914 = vmatpush.msra.mxu0 %v197
  %1915 = vmatpush.msra.mxu0 %v189
  %1916 = vmatpush.msra.mxu0 %v181
  %1917 = vmatpush.msra.mxu0 %v173
  %1918 = vmatmul.f32.gmra.mxu0 %v33
  %v1919 = vpop.f32.mrf.mxu0
  %v1920 = vadd.f32 %v1900, %v1919
  %1921 = vdwg.mxu0
  %1922 = vmatpush.msra.mxu0 %v421
  %1923 = vmatpush.msra.mxu0 %v413
  %1924 = vmatpush.msra.mxu0 %v405
  %1925 = vmatpush.msra.mxu0 %v397
  %1926 = vmatpush.msra.mxu0 %v389
  %1927 = vmatpush.msra.mxu0 %v381
  %1928 = vmatpush.msra.mxu0 %v373
  %1929 = vmatpush.msra.mxu0 %v365
  %1930 = vmatpush.msra.mxu0 %v357
  %1931 = vmatpush.msra.mxu0 %v349
  %1932 = vmatpush.msra.mxu0 %v341
  %1933 = vmatpush.msra.mxu0 %v333
  %1934 = vmatpush.msra.mxu0 %v325
  %1935 = vmatpush.msra.mxu0 %v317
  %1936 = vmatpush.msra.mxu0 %v309
  %1937 = vmatpush.msra.mxu0 %v301
  %1938 = vmatmul.f32.gmra.mxu0 %v34
  %v1939 = vpop.f32.mrf.mxu0
  %v1940 = vadd.f32 %v1920, %v1939
  %1941 = vdwg.mxu0
  %1942 = vmatpush.msra.mxu0 %v549
  %1943 = vmatpush.msra.mxu0 %v541
  %1944 = vmatpush.msra.mxu0 %v533
  %1945 = vmatpush.msra.mxu0 %v525
  %1946 = vmatpush.msra.mxu0 %v517
  %1947 = vmatpush.msra.mxu0 %v509
  %1948 = vmatpush.msra.mxu0 %v501
  %1949 = vmatpush.msra.mxu0 %v493
  %1950 = vmatpush.msra.mxu0 %v485
  %1951 = vmatpush.msra.mxu0 %v477
  %1952 = vmatpush.msra.mxu0 %v469
  %1953 = vmatpush.msra.mxu0 %v461
  %1954 = vmatpush.msra.mxu0 %v453
  %1955 = vmatpush.msra.mxu0 %v445
  %1956 = vmatpush.msra.mxu0 %v437
  %1957 = vmatpush.msra.mxu0 %v429
  %1958 = vmatmul.f32.gmra.mxu0 %v35
  %v1959 = vpop.f32.mrf.mxu0
  %v1960 = vadd.f32 %v1940, %v1959
  %1961 = vdwg.mxu0
  %1962 = vmatpush.msra.mxu0 %v677
  %1963 = vmatpush.msra.mxu0 %v669
  %1964 = vmatpush.msra.mxu0 %v661
  %1965 = vmatpush.msra.mxu0 %v653
  %1966 = vmatpush.msra.mxu0 %v645
  %1967 = vmatpush.msra.mxu0 %v637
  %1968 = vmatpush.msra.mxu0 %v629
  %1969 = vmatpush.msra.mxu0 %v621
  %1970 = vmatpush.msra.mxu0 %v613
  %1971 = vmatpush.msra.mxu0 %v605
  %1972 = vmatpush.msra.mxu0 %v597
  %1973 = vmatpush.msra.mxu0 %v589
  %1974 = vmatpush.msra.mxu0 %v581
  %1975 = vmatpush.msra.mxu0 %v573
  %1976 = vmatpush.msra.mxu0 %v565
  %1977 = vmatpush.msra.mxu0 %v557
  %1978 = vmatmul.f32.gmra.mxu0 %v36
  %v1979 = vpop.f32.mrf.mxu0
  %v1980 = vadd.f32 %v1960, %v1979
  %1981 = vdwg.mxu0
  %1982 = vmatpush.msra.mxu0 %v805
  %1983 = vmatpush.msra.mxu0 %v797
  %1984 = vmatpush.msra.mxu0 %v789
  %1985 = vmatpush.msra.mxu0 %v781
  %1986 = vmatpush.msra.mxu0 %v773
  %1987 = vmatpush.msra.mxu0 %v765
  %1988 = vmatpush.msra.mxu0 %v757
  %1989 = vmatpush.msra.mxu0 %v749
  %1990 = vmatpush.msra.mxu0 %v741
  %1991 = vmatpush.msra.mxu0 %v733
  %1992 = vmatpush.msra.mxu0 %v725
  %1993 = vmatpush.msra.mxu0 %v717
  %1994 = vmatpush.msra.mxu0 %v709
  %1995 = vmatpush.msra.mxu0 %v701
  %1996 = vmatpush.msra.mxu0 %v693
  %1997 = vmatpush.msra.mxu0 %v685
  %1998 = vmatmul.f32.gmra.mxu0 %v37
  %v1999 = vpop.f32.mrf.mxu0
  %v2000 = vadd.f32 %v1980, %v1999
  %2001 = vdwg.mxu0
  %2002 = vmatpush.msra.mxu0 %v933
  %2003 = vmatpush.msra.mxu0 %v925
  %2004 = vmatpush.msra.mxu0 %v917
  %2005 = vmatpush.msra.mxu0 %v909
  %2006 = vmatpush.msra.mxu0 %v901
  %2007 = vmatpush.msra.mxu0 %v893
  %2008 = vmatpush.msra.mxu0 %v885
  %2009 = vmatpush.msra.mxu0 %v877
  %2010 = vmatpush.msra.mxu0 %v869
  %2011 = vmatpush.msra.mxu0 %v861
  %2012 = vmatpush.msra.mxu0 %v853
  %2013 = vmatpush.msra.mxu0 %v845
  %2014 = vmatpush.msra.mxu0 %v837
  %2015 = vmatpush.msra.mxu0 %v829
  %2016 = vmatpush.msra.mxu0 %v821
  %2017 = vmatpush.msra.mxu0 %v813
  %2018 = vmatmul.f32.gmra.mxu0 %v38
  %v2019 = vpop.f32.mrf.mxu0
  %v2020 = vadd.f32 %v2000, %v2019
  %2021 = vdwg.mxu0
  %2022 = vmatpush.msra.mxu0 %v1061
  %2023 = vmatpush.msra.mxu0 %v1053
  %2024 = vmatpush.msra.mxu0 %v1045
  %2025 = vmatpush.msra.mxu0 %v1037
  %2026 = vmatpush.msra.mxu0 %v1029
  %2027 = vmatpush.msra.mxu0 %v1021
  %2028 = vmatpush.msra.mxu0 %v1013
  %2029 = vmatpush.msra.mxu0 %v1005
  %2030 = vmatpush.msra.mxu0 %v997
  %2031 = vmatpush.msra.mxu0 %v989
  %2032 = vmatpush.msra.mxu0 %v981
  %2033 = vmatpush.msra.mxu0 %v973
  %2034 = vmatpush.msra.mxu0 %v965
  %2035 = vmatpush.msra.mxu0 %v957
  %2036 = vmatpush.msra.mxu0 %v949
  %2037 = vmatpush.msra.mxu0 %v941
  %2038 = vmatmul.f32.gmra.mxu0 %v39
  %v2039 = vpop.f32.mrf.mxu0
  %v2040 = vadd.f32 %v2020, %v2039
  %2041 = vdwg.mxu0
  %2042 = vmatpush.msra.mxu0 %v166
  %2043 = vmatpush.msra.mxu0 %v158
  %2044 = vmatpush.msra.mxu0 %v150
  %2045 = vmatpush.msra.mxu0 %v142
  %2046 = vmatpush.msra.mxu0 %v134
  %2047 = vmatpush.msra.mxu0 %v126
  %2048 = vmatpush.msra.mxu0 %v118
  %2049 = vmatpush.msra.mxu0 %v110
  %2050 = vmatpush.msra.mxu0 %v102
  %2051 = vmatpush.msra.mxu0 %v94
  %2052 = vmatpush.msra.mxu0 %v86
  %2053 = vmatpush.msra.mxu0 %v78
  %2054 = vmatpush.msra.mxu0 %v70
  %2055 = vmatpush.msra.mxu0 %v62
  %2056 = vmatpush.msra.mxu0 %v54
  %2057 = vmatpush.msra.mxu0 %v46
  %2058 = vmatmul.f32.gmra.mxu0 %v32
  %v2059 = vpop.f32.mrf.mxu0
  %v2060 = vadd.f32 %v1072, %v2059
  %2061 = vdwg.mxu0
  %2062 = vmatpush.msra.mxu0 %v294
  %2063 = vmatpush.msra.mxu0 %v286
  %2064 = vmatpush.msra.mxu0 %v278
  %2065 = vmatpush.msra.mxu0 %v270
  %2066 = vmatpush.msra.mxu0 %v262
  %2067 = vmatpush.msra.mxu0 %v254
  %2068 = vmatpush.msra.mxu0 %v246
  %2069 = vmatpush.msra.mxu0 %v238
  %2070 = vmatpush.msra.mxu0 %v230
  %2071 = vmatpush.msra.mxu0 %v222
  %2072 = vmatpush.msra.mxu0 %v214
  %2073 = vmatpush.msra.mxu0 %v206
  %2074 = vmatpush.msra.mxu0 %v198
  %2075 = vmatpush.msra.mxu0 %v190
  %2076 = vmatpush.msra.mxu0 %v182
  %2077 = vmatpush.msra.mxu0 %v174
  %2078 = vmatmul.f32.gmra.mxu0 %v33
  %v2079 = vpop.f32.mrf.mxu0
  %v2080 = vadd.f32 %v2060, %v2079
  %2081 = vdwg.mxu0
  %2082 = vmatpush.msra.mxu0 %v422
  %2083 = vmatpush.msra.mxu0 %v414
  %2084 = vmatpush.msra.mxu0 %v406
  %2085 = vmatpush.msra.mxu0 %v398
  %2086 = vmatpush.msra.mxu0 %v390
  %2087 = vmatpush.msra.mxu0 %v382
  %2088 = vmatpush.msra.mxu0 %v374
  %2089 = vmatpush.msra.mxu0 %v366
  %2090 = vmatpush.msra.mxu0 %v358
  %2091 = vmatpush.msra.mxu0 %v350
  %2092 = vmatpush.msra.mxu0 %v342
  %2093 = vmatpush.msra.mxu0 %v334
  %2094 = vmatpush.msra.mxu0 %v326
  %2095 = vmatpush.msra.mxu0 %v318
  %2096 = vmatpush.msra.mxu0 %v310
  %2097 = vmatpush.msra.mxu0 %v302
  %2098 = vmatmul.f32.gmra.mxu0 %v34
  %v2099 = vpop.f32.mrf.mxu0
  %v2100 = vadd.f32 %v2080, %v2099
  %2101 = vdwg.mxu0
  %2102 = vmatpush.msra.mxu0 %v550
  %2103 = vmatpush.msra.mxu0 %v542
  %2104 = vmatpush.msra.mxu0 %v534
  %2105 = vmatpush.msra.mxu0 %v526
  %2106 = vmatpush.msra.mxu0 %v518
  %2107 = vmatpush.msra.mxu0 %v510
  %2108 = vmatpush.msra.mxu0 %v502
  %2109 = vmatpush.msra.mxu0 %v494
  %2110 = vmatpush.msra.mxu0 %v486
  %2111 = vmatpush.msra.mxu0 %v478
  %2112 = vmatpush.msra.mxu0 %v470
  %2113 = vmatpush.msra.mxu0 %v462
  %2114 = vmatpush.msra.mxu0 %v454
  %2115 = vmatpush.msra.mxu0 %v446
  %2116 = vmatpush.msra.mxu0 %v438
  %2117 = vmatpush.msra.mxu0 %v430
  %2118 = vmatmul.f32.gmra.mxu0 %v35
  %v2119 = vpop.f32.mrf.mxu0
  %v2120 = vadd.f32 %v2100, %v2119
  %2121 = vdwg.mxu0
  %2122 = vmatpush.msra.mxu0 %v678
  %2123 = vmatpush.msra.mxu0 %v670
  %2124 = vmatpush.msra.mxu0 %v662
  %2125 = vmatpush.msra.mxu0 %v654
  %2126 = vmatpush.msra.mxu0 %v646
  %2127 = vmatpush.msra.mxu0 %v638
  %2128 = vmatpush.msra.mxu0 %v630
  %2129 = vmatpush.msra.mxu0 %v622
  %2130 = vmatpush.msra.mxu0 %v614
  %2131 = vmatpush.msra.mxu0 %v606
  %2132 = vmatpush.msra.mxu0 %v598
  %2133 = vmatpush.msra.mxu0 %v590
  %2134 = vmatpush.msra.mxu0 %v582
  %2135 = vmatpush.msra.mxu0 %v574
  %2136 = vmatpush.msra.mxu0 %v566
  %2137 = vmatpush.msra.mxu0 %v558
  %2138 = vmatmul.f32.gmra.mxu0 %v36
  %v2139 = vpop.f32.mrf.mxu0
  %v2140 = vadd.f32 %v2120, %v2139
  %2141 = vdwg.mxu0
  %2142 = vmatpush.msra.mxu0 %v806
  %2143 = vmatpush.msra.mxu0 %v798
  %2144 = vmatpush.msra.mxu0 %v790
  %2145 = vmatpush.msra.mxu0 %v782
  %2146 = vmatpush.msra.mxu0 %v774
  %2147 = vmatpush.msra.mxu0 %v766
  %2148 = vmatpush.msra.mxu0 %v758
  %2149 = vmatpush.msra.mxu0 %v750
  %2150 = vmatpush.msra.mxu0 %v742
  %2151 = vmatpush.msra.mxu0 %v734
  %2152 = vmatpush.msra.mxu0 %v726
  %2153 = vmatpush.msra.mxu0 %v718
  %2154 = vmatpush.msra.mxu0 %v710
  %2155 = vmatpush.msra.mxu0 %v702
  %2156 = vmatpush.msra.mxu0 %v694
  %2157 = vmatpush.msra.mxu0 %v686
  %2158 = vmatmul.f32.gmra.mxu0 %v37
  %v2159 = vpop.f32.mrf.mxu0
  %v2160 = vadd.f32 %v2140, %v2159
  %2161 = vdwg.mxu0
  %2162 = vmatpush.msra.mxu0 %v934
  %2163 = vmatpush.msra.mxu0 %v926
  %2164 = vmatpush.msra.mxu0 %v918
  %2165 = vmatpush.msra.mxu0 %v910
  %2166 = vmatpush.msra.mxu0 %v902
  %2167 = vmatpush.msra.mxu0 %v894
  %2168 = vmatpush.msra.mxu0 %v886
  %2169 = vmatpush.msra.mxu0 %v878
  %2170 = vmatpush.msra.mxu0 %v870
  %2171 = vmatpush.msra.mxu0 %v862
  %2172 = vmatpush.msra.mxu0 %v854
  %2173 = vmatpush.msra.mxu0 %v846
  %2174 = vmatpush.msra.mxu0 %v838
  %2175 = vmatpush.msra.mxu0 %v830
  %2176 = vmatpush.msra.mxu0 %v822
  %2177 = vmatpush.msra.mxu0 %v814
  %2178 = vmatmul.f32.gmra.mxu0 %v38
  %v2179 = vpop.f32.mrf.mxu0
  %v2180 = vadd.f32 %v2160, %v2179
  %2181 = vdwg.mxu0
  %2182 = vmatpush.msra.mxu0 %v1062
  %2183 = vmatpush.msra.mxu0 %v1054
  %2184 = vmatpush.msra.mxu0 %v1046
  %2185 = vmatpush.msra.mxu0 %v1038
  %2186 = vmatpush.msra.mxu0 %v1030
  %2187 = vmatpush.msra.mxu0 %v1022
  %2188 = vmatpush.msra.mxu0 %v1014
  %2189 = vmatpush.msra.mxu0 %v1006
  %2190 = vmatpush.msra.mxu0 %v998
  %2191 = vmatpush.msra.mxu0 %v990
  %2192 = vmatpush.msra.mxu0 %v982
  %2193 = vmatpush.msra.mxu0 %v974
  %2194 = vmatpush.msra.mxu0 %v966
  %2195 = vmatpush.msra.mxu0 %v958
  %2196 = vmatpush.msra.mxu0 %v950
  %2197 = vmatpush.msra.mxu0 %v942
  %2198 = vmatmul.f32.gmra.mxu0 %v39
  %v2199 = vpop.f32.mrf.mxu0
  %v2200 = vadd.f32 %v2180, %v2199
  %2201 = vdwg.mxu0
  %2202 = vmatpush.msra.mxu0 %v167
  %2203 = vmatpush.msra.mxu0 %v159
  %2204 = vmatpush.msra.mxu0 %v151
  %2205 = vmatpush.msra.mxu0 %v143
  %2206 = vmatpush.msra.mxu0 %v135
  %2207 = vmatpush.msra.mxu0 %v127
  %2208 = vmatpush.msra.mxu0 %v119
  %2209 = vmatpush.msra.mxu0 %v111
  %2210 = vmatpush.msra.mxu0 %v103
  %2211 = vmatpush.msra.mxu0 %v95
  %2212 = vmatpush.msra.mxu0 %v87
  %2213 = vmatpush.msra.mxu0 %v79
  %2214 = vmatpush.msra.mxu0 %v71
  %2215 = vmatpush.msra.mxu0 %v63
  %2216 = vmatpush.msra.mxu0 %v55
  %2217 = vmatpush.msra.mxu0 %v47
  %2218 = vmatmul.f32.gmra.mxu0 %v32
  %v2219 = vpop.f32.mrf.mxu0
  %v2220 = vadd.f32 %v1073, %v2219
  %2221 = vdwg.mxu0
  %2222 = vmatpush.msra.mxu0 %v295
  %2223 = vmatpush.msra.mxu0 %v287
  %2224 = vmatpush.msra.mxu0 %v279
  %2225 = vmatpush.msra.mxu0 %v271
  %2226 = vmatpush.msra.mxu0 %v263
  %2227 = vmatpush.msra.mxu0 %v255
  %2228 = vmatpush.msra.mxu0 %v247
  %2229 = vmatpush.msra.mxu0 %v239
  %2230 = vmatpush.msra.mxu0 %v231
  %2231 = vmatpush.msra.mxu0 %v223
  %2232 = vmatpush.msra.mxu0 %v215
  %2233 = vmatpush.msra.mxu0 %v207
  %2234 = vmatpush.msra.mxu0 %v199
  %2235 = vmatpush.msra.mxu0 %v191
  %2236 = vmatpush.msra.mxu0 %v183
  %2237 = vmatpush.msra.mxu0 %v175
  %2238 = vmatmul.f32.gmra.mxu0 %v33
  %v2239 = vpop.f32.mrf.mxu0
  %v2240 = vadd.f32 %v2220, %v2239
  %2241 = vdwg.mxu0
  %2242 = vmatpush.msra.mxu0 %v423
  %2243 = vmatpush.msra.mxu0 %v415
  %2244 = vmatpush.msra.mxu0 %v407
  %2245 = vmatpush.msra.mxu0 %v399
  %2246 = vmatpush.msra.mxu0 %v391
  %2247 = vmatpush.msra.mxu0 %v383
  %2248 = vmatpush.msra.mxu0 %v375
  %2249 = vmatpush.msra.mxu0 %v367
  %2250 = vmatpush.msra.mxu0 %v359
  %2251 = vmatpush.msra.mxu0 %v351
  %2252 = vmatpush.msra.mxu0 %v343
  %2253 = vmatpush.msra.mxu0 %v335
  %2254 = vmatpush.msra.mxu0 %v327
  %2255 = vmatpush.msra.mxu0 %v319
  %2256 = vmatpush.msra.mxu0 %v311
  %2257 = vmatpush.msra.mxu0 %v303
  %2258 = vmatmul.f32.gmra.mxu0 %v34
  %v2259 = vpop.f32.mrf.mxu0
  %v2260 = vadd.f32 %v2240, %v2259
  %2261 = vdwg.mxu0
  %2262 = vmatpush.msra.mxu0 %v551
  %2263 = vmatpush.msra.mxu0 %v543
  %2264 = vmatpush.msra.mxu0 %v535
  %2265 = vmatpush.msra.mxu0 %v527
  %2266 = vmatpush.msra.mxu0 %v519
  %2267 = vmatpush.msra.mxu0 %v511
  %2268 = vmatpush.msra.mxu0 %v503
  %2269 = vmatpush.msra.mxu0 %v495
  %2270 = vmatpush.msra.mxu0 %v487
  %2271 = vmatpush.msra.mxu0 %v479
  %2272 = vmatpush.msra.mxu0 %v471
  %2273 = vmatpush.msra.mxu0 %v463
  %2274 = vmatpush.msra.mxu0 %v455
  %2275 = vmatpush.msra.mxu0 %v447
  %2276 = vmatpush.msra.mxu0 %v439
  %2277 = vmatpush.msra.mxu0 %v431
  %2278 = vmatmul.f32.gmra.mxu0 %v35
  %v2279 = vpop.f32.mrf.mxu0
  %v2280 = vadd.f32 %v2260, %v2279
  %2281 = vdwg.mxu0
  %2282 = vmatpush.msra.mxu0 %v679
  %2283 = vmatpush.msra.mxu0 %v671
  %2284 = vmatpush.msra.mxu0 %v663
  %2285 = vmatpush.msra.mxu0 %v655
  %2286 = vmatpush.msra.mxu0 %v647
  %2287 = vmatpush.msra.mxu0 %v639
  %2288 = vmatpush.msra.mxu0 %v631
  %2289 = vmatpush.msra.mxu0 %v623
  %2290 = vmatpush.msra.mxu0 %v615
  %2291 = vmatpush.msra.mxu0 %v607
  %2292 = vmatpush.msra.mxu0 %v599
  %2293 = vmatpush.msra.mxu0 %v591
  %2294 = vmatpush.msra.mxu0 %v583
  %2295 = vmatpush.msra.mxu0 %v575
  %2296 = vmatpush.msra.mxu0 %v567
  %2297 = vmatpush.msra.mxu0 %v559
  %2298 = vmatmul.f32.gmra.mxu0 %v36
  %v2299 = vpop.f32.mrf.mxu0
  %v2300 = vadd.f32 %v2280, %v2299
  %2301 = vdwg.mxu0
  %2302 = vmatpush.msra.mxu0 %v807
  %2303 = vmatpush.msra.mxu0 %v799
  %2304 = vmatpush.msra.mxu0 %v791
  %2305 = vmatpush.msra.mxu0 %v783
  %2306 = vmatpush.msra.mxu0 %v775
  %2307 = vmatpush.msra.mxu0 %v767
  %2308 = vmatpush.msra.mxu0 %v759
  %2309 = vmatpush.msra.mxu0 %v751
  %2310 = vmatpush.msra.mxu0 %v743
  %2311 = vmatpush.msra.mxu0 %v735
  %2312 = vmatpush.msra.mxu0 %v727
  %2313 = vmatpush.msra.mxu0 %v719
  %2314 = vmatpush.msra.mxu0 %v711
  %2315 = vmatpush.msra.mxu0 %v703
  %2316 = vmatpush.msra.mxu0 %v695
  %2317 = vmatpush.msra.mxu0 %v687
  %2318 = vmatmul.f32.gmra.mxu0 %v37
  %v2319 = vpop.f32.mrf.mxu0
  %v2320 = vadd.f32 %v2300, %v2319
  %2321 = vdwg.mxu0
  %2322 = vmatpush.msra.mxu0 %v935
  %2323 = vmatpush.msra.mxu0 %v927
  %2324 = vmatpush.msra.mxu0 %v919
  %2325 = vmatpush.msra.mxu0 %v911
  %2326 = vmatpush.msra.mxu0 %v903
  %2327 = vmatpush.msra.mxu0 %v895
  %2328 = vmatpush.msra.mxu0 %v887
  %2329 = vmatpush.msra.mxu0 %v879
  %2330 = vmatpush.msra.mxu0 %v871
  %2331 = vmatpush.msra.mxu0 %v863
  %2332 = vmatpush.msra.mxu0 %v855
  %2333 = vmatpush.msra.mxu0 %v847
  %2334 = vmatpush.msra.mxu0 %v839
  %2335 = vmatpush.msra.mxu0 %v831
  %2336 = vmatpush.msra.mxu0 %v823
  %2337 = vmatpush.msra.mxu0 %v815
  %2338 = vmatmul.f32.gmra.mxu0 %v38
  %v2339 = vpop.f32.mrf.mxu0
  %v2340 = vadd.f32 %v2320, %v2339
  %2341 = vdwg.mxu0
  %2342 = vmatpush.msra.mxu0 %v1063
  %2343 = vmatpush.msra.mxu0 %v1055
  %2344 = vmatpush.msra.mxu0 %v1047
  %2345 = vmatpush.msra.mxu0 %v1039
  %2346 = vmatpush.msra.mxu0 %v1031
  %2347 = vmatpush.msra.mxu0 %v1023
  %2348 = vmatpush.msra.mxu0 %v1015
  %2349 = vmatpush.msra.mxu0 %v1007
  %2350 = vmatpush.msra.mxu0 %v999
  %2351 = vmatpush.msra.mxu0 %v991
  %2352 = vmatpush.msra.mxu0 %v983
  %2353 = vmatpush.msra.mxu0 %v975
  %2354 = vmatpush.msra.mxu0 %v967
  %2355 = vmatpush.msra.mxu0 %v959
  %2356 = vmatpush.msra.mxu0 %v951
  %2357 = vmatpush.msra.mxu0 %v943
  %2358 = vmatmul.f32.gmra.mxu0 %v39
  %v2359 = vpop.f32.mrf.mxu0
  %v2360 = vadd.f32 %v2340, %v2359
  %2361 = vdwg.mxu0
  %v2362 = vmax.f32 %v1240, 0.0
  %v2363 = vmax.f32 %v1400, 0.0
  %v2364 = vmax.f32 %v1560, 0.0
  %v2365 = vmax.f32 %v1720, 0.0
  %v2366 = vmax.f32 %v1880, 0.0
  %v2367 = vmax.f32 %v2040, 0.0
  %v2368 = vmax.f32 %v2200, 0.0
  %v2369 = vmax.f32 %v2360, 0.0
  %v2370 = vld [vmem:[%s3] sm:$0xff]
  %v2371 = vld [vmem:[%s3 + $0x8] sm:$0xff]
  %v2372 = vld [vmem:[%s3 + $0x10] sm:$0xff]
  %v2373 = vld [vmem:[%s3 + $0x18] sm:$0xff]
  %v2374 = vld [vmem:[%s3 + $0x20] sm:$0xff]
  %v2375 = vld [vmem:[%s3 + $0x28] sm:$0xff]
  %v2376 = vld [vmem:[%s3 + $0x30] sm:$0xff]
  %v2377 = vld [vmem:[%s3 + $0x38] sm:$0xff]
  %v2378 = vld [vmem:[%s3 + $0x40] sm:$0xff]
  %v2379 = vld [vmem:[%s3 + $0x48] sm:$0xff]
  %v2380 = vld [vmem:[%s3 + $0x50] sm:$0xff]
  %v2381 = vld [vmem:[%s3 + $0x58] sm:$0xff]
  %v2382 = vld [vmem:[%s3 + $0x60] sm:$0xff]
  %v2383 = vld [vmem:[%s3 + $0x68] sm:$0xff]
  %v2384 = vld [vmem:[%s3 + $0x70] sm:$0xff]
  %v2385 = vld [vmem:[%s3 + $0x78] sm:$0xff]
  %v2386 = vld [vmem:[%s3 + $0x80] sm:$0xff]
  %v2387 = vld [vmem:[%s3 + $0x88] sm:$0xff]
  %v2388 = vld [vmem:[%s3 + $0x90] sm:$0xff]
  %v2389 = vld [vmem:[%s3 + $0x98] sm:$0xff]
  %v2390 = vld [vmem:[%s3 + $0xa0] sm:$0xff]
  %v2391 = vld [vmem:[%s3 + $0xa8] sm:$0xff]
  %v2392 = vld [vmem:[%s3 + $0xb0] sm:$0xff]
  %v2393 = vld [vmem:[%s3 + $0xb8] sm:$0xff]
  %v2394 = vld [vmem:[%s3 + $0xc0] sm:$0xff]
  %v2395 = vld [vmem:[%s3 + $0xc8] sm:$0xff]
  %v2396 = vld [vmem:[%s3 + $0xd0] sm:$0xff]
  %v2397 = vld [vmem:[%s3 + $0xd8] sm:$0xff]
  %v2398 = vld [vmem:[%s3 + $0xe0] sm:$0xff]
  %v2399 = vld [vmem:[%s3 + $0xe8] sm:$0xff]
  %v2400 = vld [vmem:[%s3 + $0xf0] sm:$0xff]
  %v2401 = vld [vmem:[%s3 + $0xf8] sm:$0xff]
  %v2402 = vld [vmem:[%s3 + $0x100] sm:$0xff]
  %v2403 = vld [vmem:[%s3 + $0x108] sm:$0xff]
  %v2404 = vld [vmem:[%s3 + $0x110] sm:$0xff]
  %v2405 = vld [vmem:[%s3 + $0x118] sm:$0xff]
  %v2406 = vld [vmem:[%s3 + $0x120] sm:$0xff]
  %v2407 = vld [vmem:[%s3 + $0x128] sm:$0xff]
  %v2408 = vld [vmem:[%s3 + $0x130] sm:$0xff]
  %v2409 = vld [vmem:[%s3 + $0x138] sm:$0xff]
  %v2410 = vld [vmem:[%s3 + $0x140] sm:$0xff]
  %v2411 = vld [vmem:[%s3 + $0x148] sm:$0xff]
  %v2412 = vld [vmem:[%s3 + $0x150] sm:$0xff]
  %v2413 = vld [vmem:[%s3 + $0x158] sm:$0xff]
  %v2414 = vld [vmem:[%s3 + $0x160] sm:$0xff]
  %v2415 = vld [vmem:[%s3 + $0x168] sm:$0xff]
  %v2416 = vld [vmem:[%s3 + $0x170] sm:$0xff]
  %v2417 = vld [vmem:[%s3 + $0x178] sm:$0xff]
  %v2418 = vld [vmem:[%s3 + $0x180] sm:$0xff]
  %v2419 = vld [vmem:[%s3 + $0x188] sm:$0xff]
  %v2420 = vld [vmem:[%s3 + $0x190] sm:$0xff]
  %v2421 = vld [vmem:[%s3 + $0x198] sm:$0xff]
  %v2422 = vld [vmem:[%s3 + $0x1a0] sm:$0xff]
  %v2423 = vld [vmem:[%s3 + $0x1a8] sm:$0xff]
  %v2424 = vld [vmem:[%s3 + $0x1b0] sm:$0xff]
  %v2425 = vld [vmem:[%s3 + $0x1b8] sm:$0xff]
  %v2426 = vld [vmem:[%s3 + $0x1c0] sm:$0xff]
  %v2427 = vld [vmem:[%s3 + $0x1c8] sm:$0xff]
  %v2428 = vld [vmem:[%s3 + $0x1d0] sm:$0xff]
  %v2429 = vld [vmem:[%s3 + $0x1d8] sm:$0xff]
  %v2430 = vld [vmem:[%s3 + $0x1e0] sm:$0xff]
  %v2431 = vld [vmem:[%s3 + $0x1e8] sm:$0xff]
  %v2432 = vld [vmem:[%s3 + $0x1f0] sm:$0xff]
  %v2433 = vld [vmem:[%s3 + $0x1f8] sm:$0xff]
  %v2434 = vld [vmem:[%s3 + $0x200] sm:$0xff]
  %v2435 = vld [vmem:[%s3 + $0x208] sm:$0xff]
  %v2436 = vld [vmem:[%s3 + $0x210] sm:$0xff]
  %v2437 = vld [vmem:[%s3 + $0x218] sm:$0xff]
  %v2438 = vld [vmem:[%s3 + $0x220] sm:$0xff]
  %v2439 = vld [vmem:[%s3 + $0x228] sm:$0xff]
  %v2440 = vld [vmem:[%s3 + $0x230] sm:$0xff]
  %v2441 = vld [vmem:[%s3 + $0x238] sm:$0xff]
  %v2442 = vld [vmem:[%s3 + $0x240] sm:$0xff]
  %v2443 = vld [vmem:[%s3 + $0x248] sm:$0xff]
  %v2444 = vld [vmem:[%s3 + $0x250] sm:$0xff]
  %v2445 = vld [vmem:[%s3 + $0x258] sm:$0xff]
  %v2446 = vld [vmem:[%s3 + $0x260] sm:$0xff]
  %v2447 = vld [vmem:[%s3 + $0x268] sm:$0xff]
  %v2448 = vld [vmem:[%s3 + $0x270] sm:$0xff]
  %v2449 = vld [vmem:[%s3 + $0x278] sm:$0xff]
  %v2450 = vld [vmem:[%s3 + $0x280] sm:$0xff]
  %v2451 = vld [vmem:[%s3 + $0x288] sm:$0xff]
  %v2452 = vld [vmem:[%s3 + $0x290] sm:$0xff]
  %v2453 = vld [vmem:[%s3 + $0x298] sm:$0xff]
  %v2454 = vld [vmem:[%s3 + $0x2a0] sm:$0xff]
  %v2455 = vld [vmem:[%s3 + $0x2a8] sm:$0xff]
  %v2456 = vld [vmem:[%s3 + $0x2b0] sm:$0xff]
  %v2457 = vld [vmem:[%s3 + $0x2b8] sm:$0xff]
  %v2458 = vld [vmem:[%s3 + $0x2c0] sm:$0xff]
  %v2459 = vld [vmem:[%s3 + $0x2c8] sm:$0xff]
  %v2460 = vld [vmem:[%s3 + $0x2d0] sm:$0xff]
  %v2461 = vld [vmem:[%s3 + $0x2d8] sm:$0xff]
  %v2462 = vld [vmem:[%s3 + $0x2e0] sm:$0xff]
  %v2463 = vld [vmem:[%s3 + $0x2e8] sm:$0xff]
  %v2464 = vld [vmem:[%s3 + $0x2f0] sm:$0xff]
  %v2465 = vld [vmem:[%s3 + $0x2f8] sm:$0xff]
  %v2466 = vld [vmem:[%s3 + $0x300] sm:$0xff]
  %v2467 = vld [vmem:[%s3 + $0x308] sm:$0xff]
  %v2468 = vld [vmem:[%s3 + $0x310] sm:$0xff]
  %v2469 = vld [vmem:[%s3 + $0x318] sm:$0xff]
  %v2470 = vld [vmem:[%s3 + $0x320] sm:$0xff]
  %v2471 = vld [vmem:[%s3 + $0x328] sm:$0xff]
  %v2472 = vld [vmem:[%s3 + $0x330] sm:$0xff]
  %v2473 = vld [vmem:[%s3 + $0x338] sm:$0xff]
  %v2474 = vld [vmem:[%s3 + $0x340] sm:$0xff]
  %v2475 = vld [vmem:[%s3 + $0x348] sm:$0xff]
  %v2476 = vld [vmem:[%s3 + $0x350] sm:$0xff]
  %v2477 = vld [vmem:[%s3 + $0x358] sm:$0xff]
  %v2478 = vld [vmem:[%s3 + $0x360] sm:$0xff]
  %v2479 = vld [vmem:[%s3 + $0x368] sm:$0xff]
  %v2480 = vld [vmem:[%s3 + $0x370] sm:$0xff]
  %v2481 = vld [vmem:[%s3 + $0x378] sm:$0xff]
  %v2482 = vld [vmem:[%s3 + $0x380] sm:$0xff]
  %v2483 = vld [vmem:[%s3 + $0x388] sm:$0xff]
  %v2484 = vld [vmem:[%s3 + $0x390] sm:$0xff]
  %v2485 = vld [vmem:[%s3 + $0x398] sm:$0xff]
  %v2486 = vld [vmem:[%s3 + $0x3a0] sm:$0xff]
  %v2487 = vld [vmem:[%s3 + $0x3a8] sm:$0xff]
  %v2488 = vld [vmem:[%s3 + $0x3b0] sm:$0xff]
  %v2489 = vld [vmem:[%s3 + $0x3b8] sm:$0xff]
  %v2490 = vld [vmem:[%s3 + $0x3c0] sm:$0xff]
  %v2491 = vld [vmem:[%s3 + $0x3c8] sm:$0xff]
  %v2492 = vld [vmem:[%s3 + $0x3d0] sm:$0xff]
  %v2493 = vld [vmem:[%s3 + $0x3d8] sm:$0xff]
  %v2494 = vld [vmem:[%s3 + $0x3e0] sm:$0xff]
  %v2495 = vld [vmem:[%s3 + $0x3e8] sm:$0xff]
  %v2496 = vld [vmem:[%s3 + $0x3f0] sm:$0xff]
  %v2497 = vld [vmem:[%s3 + $0x3f8] sm:$0xff]
  %v2498 = vld [vmem:[%s3 + $0x400] sm:$0xff]
  %v2499 = vld [vmem:[%s3 + $0x408] sm:$0xff]
  %v2500 = vld [vmem:[%s3 + $0x410] sm:$0xff]
  %v2501 = vld [vmem:[%s3 + $0x418] sm:$0xff]
  %v2502 = vld [vmem:[%s3 + $0x420] sm:$0xff]
  %v2503 = vld [vmem:[%s3 + $0x428] sm:$0xff]
  %v2504 = vld [vmem:[%s3 + $0x430] sm:$0xff]
  %v2505 = vld [vmem:[%s3 + $0x438] sm:$0xff]
  %v2506 = vld [vmem:[%s3 + $0x440] sm:$0xff]
  %v2507 = vld [vmem:[%s3 + $0x448] sm:$0xff]
  %v2508 = vld [vmem:[%s3 + $0x450] sm:$0xff]
  %v2509 = vld [vmem:[%s3 + $0x458] sm:$0xff]
  %v2510 = vld [vmem:[%s3 + $0x460] sm:$0xff]
  %v2511 = vld [vmem:[%s3 + $0x468] sm:$0xff]
  %v2512 = vld [vmem:[%s3 + $0x470] sm:$0xff]
  %v2513 = vld [vmem:[%s3 + $0x478] sm:$0xff]
  %v2514 = vld [vmem:[%s3 + $0x480] sm:$0xff]
  %v2515 = vld [vmem:[%s3 + $0x488] sm:$0xff]
  %v2516 = vld [vmem:[%s3 + $0x490] sm:$0xff]
  %v2517 = vld [vmem:[%s3 + $0x498] sm:$0xff]
  %v2518 = vld [vmem:[%s3 + $0x4a0] sm:$0xff]
  %v2519 = vld [vmem:[%s3 + $0x4a8] sm:$0xff]
  %v2520 = vld [vmem:[%s3 + $0x4b0] sm:$0xff]
  %v2521 = vld [vmem:[%s3 + $0x4b8] sm:$0xff]
  %v2522 = vld [vmem:[%s3 + $0x4c0] sm:$0xff]
  %v2523 = vld [vmem:[%s3 + $0x4c8] sm:$0xff]
  %v2524 = vld [vmem:[%s3 + $0x4d0] sm:$0xff]
  %v2525 = vld [vmem:[%s3 + $0x4d8] sm:$0xff]
  %v2526 = vld [vmem:[%s3 + $0x4e0] sm:$0xff]
  %v2527 = vld [vmem:[%s3 + $0x4e8] sm:$0xff]
  %v2528 = vld [vmem:[%s3 + $0x4f0] sm:$0xff]
  %v2529 = vld [vmem:[%s3 + $0x4f8] sm:$0xff]
  %v2530 = vld [vmem:[%s3 + $0x500] sm:$0xff]
  %v2531 = vld [vmem:[%s3 + $0x508] sm:$0xff]
  %v2532 = vld [vmem:[%s3 + $0x510] sm:$0xff]
  %v2533 = vld [vmem:[%s3 + $0x518] sm:$0xff]
  %v2534 = vld [vmem:[%s3 + $0x520] sm:$0xff]
  %v2535 = vld [vmem:[%s3 + $0x528] sm:$0xff]
  %v2536 = vld [vmem:[%s3 + $0x530] sm:$0xff]
  %v2537 = vld [vmem:[%s3 + $0x538] sm:$0xff]
  %v2538 = vld [vmem:[%s3 + $0x540] sm:$0xff]
  %v2539 = vld [vmem:[%s3 + $0x548] sm:$0xff]
  %v2540 = vld [vmem:[%s3 + $0x550] sm:$0xff]
  %v2541 = vld [vmem:[%s3 + $0x558] sm:$0xff]
  %v2542 = vld [vmem:[%s3 + $0x560] sm:$0xff]
  %v2543 = vld [vmem:[%s3 + $0x568] sm:$0xff]
  %v2544 = vld [vmem:[%s3 + $0x570] sm:$0xff]
  %v2545 = vld [vmem:[%s3 + $0x578] sm:$0xff]
  %v2546 = vld [vmem:[%s3 + $0x580] sm:$0xff]
  %v2547 = vld [vmem:[%s3 + $0x588] sm:$0xff]
  %v2548 = vld [vmem:[%s3 + $0x590] sm:$0xff]
  %v2549 = vld [vmem:[%s3 + $0x598] sm:$0xff]
  %v2550 = vld [vmem:[%s3 + $0x5a0] sm:$0xff]
  %v2551 = vld [vmem:[%s3 + $0x5a8] sm:$0xff]
  %v2552 = vld [vmem:[%s3 + $0x5b0] sm:$0xff]
  %v2553 = vld [vmem:[%s3 + $0x5b8] sm:$0xff]
  %v2554 = vld [vmem:[%s3 + $0x5c0] sm:$0xff]
  %v2555 = vld [vmem:[%s3 + $0x5c8] sm:$0xff]
  %v2556 = vld [vmem:[%s3 + $0x5d0] sm:$0xff]
  %v2557 = vld [vmem:[%s3 + $0x5d8] sm:$0xff]
  %v2558 = vld [vmem:[%s3 + $0x5e0] sm:$0xff]
  %v2559 = vld [vmem:[%s3 + $0x5e8] sm:$0xff]
  %v2560 = vld [vmem:[%s3 + $0x5f0] sm:$0xff]
  %v2561 = vld [vmem:[%s3 + $0x5f8] sm:$0xff]
  %v2562 = vld [vmem:[%s3 + $0x600] sm:$0xff]
  %v2563 = vld [vmem:[%s3 + $0x608] sm:$0xff]
  %v2564 = vld [vmem:[%s3 + $0x610] sm:$0xff]
  %v2565 = vld [vmem:[%s3 + $0x618] sm:$0xff]
  %v2566 = vld [vmem:[%s3 + $0x620] sm:$0xff]
  %v2567 = vld [vmem:[%s3 + $0x628] sm:$0xff]
  %v2568 = vld [vmem:[%s3 + $0x630] sm:$0xff]
  %v2569 = vld [vmem:[%s3 + $0x638] sm:$0xff]
  %v2570 = vld [vmem:[%s3 + $0x640] sm:$0xff]
  %v2571 = vld [vmem:[%s3 + $0x648] sm:$0xff]
  %v2572 = vld [vmem:[%s3 + $0x650] sm:$0xff]
  %v2573 = vld [vmem:[%s3 + $0x658] sm:$0xff]
  %v2574 = vld [vmem:[%s3 + $0x660] sm:$0xff]
  %v2575 = vld [vmem:[%s3 + $0x668] sm:$0xff]
  %v2576 = vld [vmem:[%s3 + $0x670] sm:$0xff]
  %v2577 = vld [vmem:[%s3 + $0x678] sm:$0xff]
  %v2578 = vld [vmem:[%s3 + $0x680] sm:$0xff]
  %v2579 = vld [vmem:[%s3 + $0x688] sm:$0xff]
  %v2580 = vld [vmem:[%s3 + $0x690] sm:$0xff]
  %v2581 = vld [vmem:[%s3 + $0x698] sm:$0xff]
  %v2582 = vld [vmem:[%s3 + $0x6a0] sm:$0xff]
  %v2583 = vld [vmem:[%s3 + $0x6a8] sm:$0xff]
  %v2584 = vld [vmem:[%s3 + $0x6b0] sm:$0xff]
  %v2585 = vld [vmem:[%s3 + $0x6b8] sm:$0xff]
  %v2586 = vld [vmem:[%s3 + $0x6c0] sm:$0xff]
  %v2587 = vld [vmem:[%s3 + $0x6c8] sm:$0xff]
  %v2588 = vld [vmem:[%s3 + $0x6d0] sm:$0xff]
  %v2589 = vld [vmem:[%s3 + $0x6d8] sm:$0xff]
  %v2590 = vld [vmem:[%s3 + $0x6e0] sm:$0xff]
  %v2591 = vld [vmem:[%s3 + $0x6e8] sm:$0xff]
  %v2592 = vld [vmem:[%s3 + $0x6f0] sm:$0xff]
  %v2593 = vld [vmem:[%s3 + $0x6f8] sm:$0xff]
  %v2594 = vld [vmem:[%s3 + $0x700] sm:$0xff]
  %v2595 = vld [vmem:[%s3 + $0x708] sm:$0xff]
  %v2596 = vld [vmem:[%s3 + $0x710] sm:$0xff]
  %v2597 = vld [vmem:[%s3 + $0x718] sm:$0xff]
  %v2598 = vld [vmem:[%s3 + $0x720] sm:$0xff]
  %v2599 = vld [vmem:[%s3 + $0x728] sm:$0xff]
  %v2600 = vld [vmem:[%s3 + $0x730] sm:$0xff]
  %v2601 = vld [vmem:[%s3 + $0x738] sm:$0xff]
  %v2602 = vld [vmem:[%s3 + $0x740] sm:$0xff]
  %v2603 = vld [vmem:[%s3 + $0x748] sm:$0xff]
  %v2604 = vld [vmem:[%s3 + $0x750] sm:$0xff]
  %v2605 = vld [vmem:[%s3 + $0x758] sm:$0xff]
  %v2606 = vld [vmem:[%s3 + $0x760] sm:$0xff]
  %v2607 = vld [vmem:[%s3 + $0x768] sm:$0xff]
  %v2608 = vld [vmem:[%s3 + $0x770] sm:$0xff]
  %v2609 = vld [vmem:[%s3 + $0x778] sm:$0xff]
  %v2610 = vld [vmem:[%s3 + $0x780] sm:$0xff]
  %v2611 = vld [vmem:[%s3 + $0x788] sm:$0xff]
  %v2612 = vld [vmem:[%s3 + $0x790] sm:$0xff]
  %v2613 = vld [vmem:[%s3 + $0x798] sm:$0xff]
  %v2614 = vld [vmem:[%s3 + $0x7a0] sm:$0xff]
  %v2615 = vld [vmem:[%s3 + $0x7a8] sm:$0xff]
  %v2616 = vld [vmem:[%s3 + $0x7b0] sm:$0xff]
  %v2617 = vld [vmem:[%s3 + $0x7b8] sm:$0xff]
  %v2618 = vld [vmem:[%s3 + $0x7c0] sm:$0xff]
  %v2619 = vld [vmem:[%s3 + $0x7c8] sm:$0xff]
  %v2620 = vld [vmem:[%s3 + $0x7d0] sm:$0xff]
  %v2621 = vld [vmem:[%s3 + $0x7d8] sm:$0xff]
  %v2622 = vld [vmem:[%s3 + $0x7e0] sm:$0xff]
  %v2623 = vld [vmem:[%s3 + $0x7e8] sm:$0xff]
  %v2624 = vld [vmem:[%s3 + $0x7f0] sm:$0xff]
  %v2625 = vld [vmem:[%s3 + $0x7f8] sm:$0xff]
  %v2626 = vld [vmem:[%s3 + $0x800] sm:$0xff]
  %v2627 = vld [vmem:[%s3 + $0x808] sm:$0xff]
  %v2628 = vld [vmem:[%s3 + $0x810] sm:$0xff]
  %v2629 = vld [vmem:[%s3 + $0x818] sm:$0xff]
  %v2630 = vld [vmem:[%s3 + $0x820] sm:$0xff]
  %v2631 = vld [vmem:[%s3 + $0x828] sm:$0xff]
  %v2632 = vld [vmem:[%s3 + $0x830] sm:$0xff]
  %v2633 = vld [vmem:[%s3 + $0x838] sm:$0xff]
  %v2634 = vld [vmem:[%s3 + $0x840] sm:$0xff]
  %v2635 = vld [vmem:[%s3 + $0x848] sm:$0xff]
  %v2636 = vld [vmem:[%s3 + $0x850] sm:$0xff]
  %v2637 = vld [vmem:[%s3 + $0x858] sm:$0xff]
  %v2638 = vld [vmem:[%s3 + $0x860] sm:$0xff]
  %v2639 = vld [vmem:[%s3 + $0x868] sm:$0xff]
  %v2640 = vld [vmem:[%s3 + $0x870] sm:$0xff]
  %v2641 = vld [vmem:[%s3 + $0x878] sm:$0xff]
  %v2642 = vld [vmem:[%s3 + $0x880] sm:$0xff]
  %v2643 = vld [vmem:[%s3 + $0x888] sm:$0xff]
  %v2644 = vld [vmem:[%s3 + $0x890] sm:$0xff]
  %v2645 = vld [vmem:[%s3 + $0x898] sm:$0xff]
  %v2646 = vld [vmem:[%s3 + $0x8a0] sm:$0xff]
  %v2647 = vld [vmem:[%s3 + $0x8a8] sm:$0xff]
  %v2648 = vld [vmem:[%s3 + $0x8b0] sm:$0xff]
  %v2649 = vld [vmem:[%s3 + $0x8b8] sm:$0xff]
  %v2650 = vld [vmem:[%s3 + $0x8c0] sm:$0xff]
  %v2651 = vld [vmem:[%s3 + $0x8c8] sm:$0xff]
  %v2652 = vld [vmem:[%s3 + $0x8d0] sm:$0xff]
  %v2653 = vld [vmem:[%s3 + $0x8d8] sm:$0xff]
  %v2654 = vld [vmem:[%s3 + $0x8e0] sm:$0xff]
  %v2655 = vld [vmem:[%s3 + $0x8e8] sm:$0xff]
  %v2656 = vld [vmem:[%s3 + $0x8f0] sm:$0xff]
  %v2657 = vld [vmem:[%s3 + $0x8f8] sm:$0xff]
  %v2658 = vld [vmem:[%s3 + $0x900] sm:$0xff]
  %v2659 = vld [vmem:[%s3 + $0x908] sm:$0xff]
  %v2660 = vld [vmem:[%s3 + $0x910] sm:$0xff]
  %v2661 = vld [vmem:[%s3 + $0x918] sm:$0xff]
  %v2662 = vld [vmem:[%s3 + $0x920] sm:$0xff]
  %v2663 = vld [vmem:[%s3 + $0x928] sm:$0xff]
  %v2664 = vld [vmem:[%s3 + $0x930] sm:$0xff]
  %v2665 = vld [vmem:[%s3 + $0x938] sm:$0xff]
  %v2666 = vld [vmem:[%s3 + $0x940] sm:$0xff]
  %v2667 = vld [vmem:[%s3 + $0x948] sm:$0xff]
  %v2668 = vld [vmem:[%s3 + $0x950] sm:$0xff]
  %v2669 = vld [vmem:[%s3 + $0x958] sm:$0xff]
  %v2670 = vld [vmem:[%s3 + $0x960] sm:$0xff]
  %v2671 = vld [vmem:[%s3 + $0x968] sm:$0xff]
  %v2672 = vld [vmem:[%s3 + $0x970] sm:$0xff]
  %v2673 = vld [vmem:[%s3 + $0x978] sm:$0xff]
  %v2674 = vld [vmem:[%s3 + $0x980] sm:$0xff]
  %v2675 = vld [vmem:[%s3 + $0x988] sm:$0xff]
  %v2676 = vld [vmem:[%s3 + $0x990] sm:$0xff]
  %v2677 = vld [vmem:[%s3 + $0x998] sm:$0xff]
  %v2678 = vld [vmem:[%s3 + $0x9a0] sm:$0xff]
  %v2679 = vld [vmem:[%s3 + $0x9a8] sm:$0xff]
  %v2680 = vld [vmem:[%s3 + $0x9b0] sm:$0xff]
  %v2681 = vld [vmem:[%s3 + $0x9b8] sm:$0xff]
  %v2682 = vld [vmem:[%s3 + $0x9c0] sm:$0xff]
  %v2683 = vld [vmem:[%s3 + $0x9c8] sm:$0xff]
  %v2684 = vld [vmem:[%s3 + $0x9d0] sm:$0xff]
  %v2685 = vld [vmem:[%s3 + $0x9d8] sm:$0xff]
  %v2686 = vld [vmem:[%s3 + $0x9e0] sm:$0xff]
  %v2687 = vld [vmem:[%s3 + $0x9e8] sm:$0xff]
  %v2688 = vld [vmem:[%s3 + $0x9f0] sm:$0xff]
  %v2689 = vld [vmem:[%s3 + $0x9f8] sm:$0xff]
  %v2690 = vld [vmem:[%s3 + $0xa00] sm:$0xff]
  %v2691 = vld [vmem:[%s3 + $0xa08] sm:$0xff]
  %v2692 = vld [vmem:[%s3 + $0xa10] sm:$0xff]
  %v2693 = vld [vmem:[%s3 + $0xa18] sm:$0xff]
  %v2694 = vld [vmem:[%s3 + $0xa20] sm:$0xff]
  %v2695 = vld [vmem:[%s3 + $0xa28] sm:$0xff]
  %v2696 = vld [vmem:[%s3 + $0xa30] sm:$0xff]
  %v2697 = vld [vmem:[%s3 + $0xa38] sm:$0xff]
  %v2698 = vld [vmem:[%s3 + $0xa40] sm:$0xff]
  %v2699 = vld [vmem:[%s3 + $0xa48] sm:$0xff]
  %v2700 = vld [vmem:[%s3 + $0xa50] sm:$0xff]
  %v2701 = vld [vmem:[%s3 + $0xa58] sm:$0xff]
  %v2702 = vld [vmem:[%s3 + $0xa60] sm:$0xff]
  %v2703 = vld [vmem:[%s3 + $0xa68] sm:$0xff]
  %v2704 = vld [vmem:[%s3 + $0xa70] sm:$0xff]
  %v2705 = vld [vmem:[%s3 + $0xa78] sm:$0xff]
  %v2706 = vld [vmem:[%s3 + $0xa80] sm:$0xf]
  %v2707 = vld [vmem:[%s3 + $0xa88] sm:$0xf]
  %v2708 = vld [vmem:[%s3 + $0xa90] sm:$0xf]
  %v2709 = vld [vmem:[%s4] sm:$0x7]
  %v2711 = vperm.slane %v2709, 0
  %v2712 = vperm.slane %v2709, 1
  %v2713 = vperm.slane %v2709, 2
  %vm2717 = vcmask 31744
  %v2719 = vsel %vm2717, %v2369, 0
  %vm2721 = vcmask 1043456
  %v2723 = vsel %vm2721, %v2706, 0
  %v2726 = vsel %vm2721, %v2707, 0
  %v2729 = vsel %vm2721, %v2708, 0
  %2731 = vmatpush.msra.mxu0 %v2415
  %2732 = vmatpush.msra.mxu0 %v2412
  %2733 = vmatpush.msra.mxu0 %v2409
  %2734 = vmatpush.msra.mxu0 %v2406
  %2735 = vmatpush.msra.mxu0 %v2403
  %2736 = vmatpush.msra.mxu0 %v2400
  %2737 = vmatpush.msra.mxu0 %v2397
  %2738 = vmatpush.msra.mxu0 %v2394
  %2739 = vmatpush.msra.mxu0 %v2391
  %2740 = vmatpush.msra.mxu0 %v2388
  %2741 = vmatpush.msra.mxu0 %v2385
  %2742 = vmatpush.msra.mxu0 %v2382
  %2743 = vmatpush.msra.mxu0 %v2379
  %2744 = vmatpush.msra.mxu0 %v2376
  %2745 = vmatpush.msra.mxu0 %v2373
  %2746 = vmatpush.msra.mxu0 %v2370
  %2747 = vmatmul.f32.gmra.mxu0 %v2362
  %v2748 = vpop.f32.mrf.mxu0
  %v2749 = vadd.f32 %v2711, %v2748
  %2750 = vdwg.mxu0
  %2751 = vmatpush.msra.mxu0 %v2463
  %2752 = vmatpush.msra.mxu0 %v2460
  %2753 = vmatpush.msra.mxu0 %v2457
  %2754 = vmatpush.msra.mxu0 %v2454
  %2755 = vmatpush.msra.mxu0 %v2451
  %2756 = vmatpush.msra.mxu0 %v2448
  %2757 = vmatpush.msra.mxu0 %v2445
  %2758 = vmatpush.msra.mxu0 %v2442
  %2759 = vmatpush.msra.mxu0 %v2439
  %2760 = vmatpush.msra.mxu0 %v2436
  %2761 = vmatpush.msra.mxu0 %v2433
  %2762 = vmatpush.msra.mxu0 %v2430
  %2763 = vmatpush.msra.mxu0 %v2427
  %2764 = vmatpush.msra.mxu0 %v2424
  %2765 = vmatpush.msra.mxu0 %v2421
  %2766 = vmatpush.msra.mxu0 %v2418
  %2767 = vmatmul.f32.gmra.mxu0 %v2363
  %v2768 = vpop.f32.mrf.mxu0
  %v2769 = vadd.f32 %v2749, %v2768
  %2770 = vdwg.mxu0
  %2771 = vmatpush.msra.mxu0 %v2511
  %2772 = vmatpush.msra.mxu0 %v2508
  %2773 = vmatpush.msra.mxu0 %v2505
  %2774 = vmatpush.msra.mxu0 %v2502
  %2775 = vmatpush.msra.mxu0 %v2499
  %2776 = vmatpush.msra.mxu0 %v2496
  %2777 = vmatpush.msra.mxu0 %v2493
  %2778 = vmatpush.msra.mxu0 %v2490
  %2779 = vmatpush.msra.mxu0 %v2487
  %2780 = vmatpush.msra.mxu0 %v2484
  %2781 = vmatpush.msra.mxu0 %v2481
  %2782 = vmatpush.msra.mxu0 %v2478
  %2783 = vmatpush.msra.mxu0 %v2475
  %2784 = vmatpush.msra.mxu0 %v2472
  %2785 = vmatpush.msra.mxu0 %v2469
  %2786 = vmatpush.msra.mxu0 %v2466
  %2787 = vmatmul.f32.gmra.mxu0 %v2364
  %v2788 = vpop.f32.mrf.mxu0
  %v2789 = vadd.f32 %v2769, %v2788
  %2790 = vdwg.mxu0
  %2791 = vmatpush.msra.mxu0 %v2559
  %2792 = vmatpush.msra.mxu0 %v2556
  %2793 = vmatpush.msra.mxu0 %v2553
  %2794 = vmatpush.msra.mxu0 %v2550
  %2795 = vmatpush.msra.mxu0 %v2547
  %2796 = vmatpush.msra.mxu0 %v2544
  %2797 = vmatpush.msra.mxu0 %v2541
  %2798 = vmatpush.msra.mxu0 %v2538
  %2799 = vmatpush.msra.mxu0 %v2535
  %2800 = vmatpush.msra.mxu0 %v2532
  %2801 = vmatpush.msra.mxu0 %v2529
  %2802 = vmatpush.msra.mxu0 %v2526
  %2803 = vmatpush.msra.mxu0 %v2523
  %2804 = vmatpush.msra.mxu0 %v2520
  %2805 = vmatpush.msra.mxu0 %v2517
  %2806 = vmatpush.msra.mxu0 %v2514
  %2807 = vmatmul.f32.gmra.mxu0 %v2365
  %v2808 = vpop.f32.mrf.mxu0
  %v2809 = vadd.f32 %v2789, %v2808
  %2810 = vdwg.mxu0
  %2811 = vmatpush.msra.mxu0 %v2607
  %2812 = vmatpush.msra.mxu0 %v2604
  %2813 = vmatpush.msra.mxu0 %v2601
  %2814 = vmatpush.msra.mxu0 %v2598
  %2815 = vmatpush.msra.mxu0 %v2595
  %2816 = vmatpush.msra.mxu0 %v2592
  %2817 = vmatpush.msra.mxu0 %v2589
  %2818 = vmatpush.msra.mxu0 %v2586
  %2819 = vmatpush.msra.mxu0 %v2583
  %2820 = vmatpush.msra.mxu0 %v2580
  %2821 = vmatpush.msra.mxu0 %v2577
  %2822 = vmatpush.msra.mxu0 %v2574
  %2823 = vmatpush.msra.mxu0 %v2571
  %2824 = vmatpush.msra.mxu0 %v2568
  %2825 = vmatpush.msra.mxu0 %v2565
  %2826 = vmatpush.msra.mxu0 %v2562
  %2827 = vmatmul.f32.gmra.mxu0 %v2366
  %v2828 = vpop.f32.mrf.mxu0
  %v2829 = vadd.f32 %v2809, %v2828
  %2830 = vdwg.mxu0
  %2831 = vmatpush.msra.mxu0 %v2655
  %2832 = vmatpush.msra.mxu0 %v2652
  %2833 = vmatpush.msra.mxu0 %v2649
  %2834 = vmatpush.msra.mxu0 %v2646
  %2835 = vmatpush.msra.mxu0 %v2643
  %2836 = vmatpush.msra.mxu0 %v2640
  %2837 = vmatpush.msra.mxu0 %v2637
  %2838 = vmatpush.msra.mxu0 %v2634
  %2839 = vmatpush.msra.mxu0 %v2631
  %2840 = vmatpush.msra.mxu0 %v2628
  %2841 = vmatpush.msra.mxu0 %v2625
  %2842 = vmatpush.msra.mxu0 %v2622
  %2843 = vmatpush.msra.mxu0 %v2619
  %2844 = vmatpush.msra.mxu0 %v2616
  %2845 = vmatpush.msra.mxu0 %v2613
  %2846 = vmatpush.msra.mxu0 %v2610
  %2847 = vmatmul.f32.gmra.mxu0 %v2367
  %v2848 = vpop.f32.mrf.mxu0
  %v2849 = vadd.f32 %v2829, %v2848
  %2850 = vdwg.mxu0
  %2851 = vmatpush.msra.mxu0 %v2703
  %2852 = vmatpush.msra.mxu0 %v2700
  %2853 = vmatpush.msra.mxu0 %v2697
  %2854 = vmatpush.msra.mxu0 %v2694
  %2855 = vmatpush.msra.mxu0 %v2691
  %2856 = vmatpush.msra.mxu0 %v2688
  %2857 = vmatpush.msra.mxu0 %v2685
  %2858 = vmatpush.msra.mxu0 %v2682
  %2859 = vmatpush.msra.mxu0 %v2679
  %2860 = vmatpush.msra.mxu0 %v2676
  %2861 = vmatpush.msra.mxu0 %v2673
  %2862 = vmatpush.msra.mxu0 %v2670
  %2863 = vmatpush.msra.mxu0 %v2667
  %2864 = vmatpush.msra.mxu0 %v2664
  %2865 = vmatpush.msra.mxu0 %v2661
  %2866 = vmatpush.msra.mxu0 %v2658
  %2867 = vmatmul.f32.gmra.mxu0 %v2368
  %v2868 = vpop.f32.mrf.mxu0
  %v2869 = vadd.f32 %v2849, %v2868
  %2870 = vdwg.mxu0
  %2871 = vmatpush.msra.mxu0 0.0
  %2872 = vmatpush.msra.mxu0 0.0
  %2873 = vmatpush.msra.mxu0 0.0
  %2874 = vmatpush.msra.mxu0 0.0
  %2875 = vmatpush.msra.mxu0 0.0
  %2876 = vmatpush.msra.mxu0 0.0
  %2877 = vmatpush.msra.mxu0 0.0
  %2878 = vmatpush.msra.mxu0 0.0
  %2879 = vmatpush.msra.mxu0 0.0
  %2880 = vmatpush.msra.mxu0 0.0
  %2881 = vmatpush.msra.mxu0 0.0
  %2882 = vmatpush.msra.mxu0 0.0
  %2883 = vmatpush.msra.mxu0 0.0
  %2884 = vmatpush.msra.mxu0 0.0
  %2885 = vmatpush.msra.mxu0 0.0
  %2886 = vmatpush.msra.mxu0 %v2723
  %2887 = vmatmul.f32.gmra.mxu0 %v2719
  %v2888 = vpop.f32.mrf.mxu0
  %v2889 = vadd.f32 %v2869, %v2888
  %2890 = vdwg.mxu0
  %2891 = vmatpush.msra.mxu0 %v2416
  %2892 = vmatpush.msra.mxu0 %v2413
  %2893 = vmatpush.msra.mxu0 %v2410
  %2894 = vmatpush.msra.mxu0 %v2407
  %2895 = vmatpush.msra.mxu0 %v2404
  %2896 = vmatpush.msra.mxu0 %v2401
  %2897 = vmatpush.msra.mxu0 %v2398
  %2898 = vmatpush.msra.mxu0 %v2395
  %2899 = vmatpush.msra.mxu0 %v2392
  %2900 = vmatpush.msra.mxu0 %v2389
  %2901 = vmatpush.msra.mxu0 %v2386
  %2902 = vmatpush.msra.mxu0 %v2383
  %2903 = vmatpush.msra.mxu0 %v2380
  %2904 = vmatpush.msra.mxu0 %v2377
  %2905 = vmatpush.msra.mxu0 %v2374
  %2906 = vmatpush.msra.mxu0 %v2371
  %2907 = vmatmul.f32.gmra.mxu0 %v2362
  %v2908 = vpop.f32.mrf.mxu0
  %v2909 = vadd.f32 %v2712, %v2908
  %2910 = vdwg.mxu0
  %2911 = vmatpush.msra.mxu0 %v2464
  %2912 = vmatpush.msra.mxu0 %v2461
  %2913 = vmatpush.msra.mxu0 %v2458
  %2914 = vmatpush.msra.mxu0 %v2455
  %2915 = vmatpush.msra.mxu0 %v2452
  %2916 = vmatpush.msra.mxu0 %v2449
  %2917 = vmatpush.msra.mxu0 %v2446
  %2918 = vmatpush.msra.mxu0 %v2443
  %2919 = vmatpush.msra.mxu0 %v2440
  %2920 = vmatpush.msra.mxu0 %v2437
  %2921 = vmatpush.msra.mxu0 %v2434
  %2922 = vmatpush.msra.mxu0 %v2431
  %2923 = vmatpush.msra.mxu0 %v2428
  %2924 = vmatpush.msra.mxu0 %v2425
  %2925 = vmatpush.msra.mxu0 %v2422
  %2926 = vmatpush.msra.mxu0 %v2419
  %2927 = vmatmul.f32.gmra.mxu0 %v2363
  %v2928 = vpop.f32.mrf.mxu0
  %v2929 = vadd.f32 %v2909, %v2928
  %2930 = vdwg.mxu0
  %2931 = vmatpush.msra.mxu0 %v2512
  %2932 = vmatpush.msra.mxu0 %v2509
  %2933 = vmatpush.msra.mxu0 %v2506
  %2934 = vmatpush.msra.mxu0 %v2503
  %2935 = vmatpush.msra.mxu0 %v2500
  %2936 = vmatpush.msra.mxu0 %v2497
  %2937 = vmatpush.msra.mxu0 %v2494
  %2938 = vmatpush.msra.mxu0 %v2491
  %2939 = vmatpush.msra.mxu0 %v2488
  %2940 = vmatpush.msra.mxu0 %v2485
  %2941 = vmatpush.msra.mxu0 %v2482
  %2942 = vmatpush.msra.mxu0 %v2479
  %2943 = vmatpush.msra.mxu0 %v2476
  %2944 = vmatpush.msra.mxu0 %v2473
  %2945 = vmatpush.msra.mxu0 %v2470
  %2946 = vmatpush.msra.mxu0 %v2467
  %2947 = vmatmul.f32.gmra.mxu0 %v2364
  %v2948 = vpop.f32.mrf.mxu0
  %v2949 = vadd.f32 %v2929, %v2948
  %2950 = vdwg.mxu0
  %2951 = vmatpush.msra.mxu0 %v2560
  %2952 = vmatpush.msra.mxu0 %v2557
  %2953 = vmatpush.msra.mxu0 %v2554
  %2954 = vmatpush.msra.mxu0 %v2551
  %2955 = vmatpush.msra.mxu0 %v2548
  %2956 = vmatpush.msra.mxu0 %v2545
  %2957 = vmatpush.msra.mxu0 %v2542
  %2958 = vmatpush.msra.mxu0 %v2539
  %2959 = vmatpush.msra.mxu0 %v2536
  %2960 = vmatpush.msra.mxu0 %v2533
  %2961 = vmatpush.msra.mxu0 %v2530
  %2962 = vmatpush.msra.mxu0 %v2527
  %2963 = vmatpush.msra.mxu0 %v2524
  %2964 = vmatpush.msra.mxu0 %v2521
  %2965 = vmatpush.msra.mxu0 %v2518
  %2966 = vmatpush.msra.mxu0 %v2515
  %2967 = vmatmul.f32.gmra.mxu0 %v2365
  %v2968 = vpop.f32.mrf.mxu0
  %v2969 = vadd.f32 %v2949, %v2968
  %2970 = vdwg.mxu0
  %2971 = vmatpush.msra.mxu0 %v2608
  %2972 = vmatpush.msra.mxu0 %v2605
  %2973 = vmatpush.msra.mxu0 %v2602
  %2974 = vmatpush.msra.mxu0 %v2599
  %2975 = vmatpush.msra.mxu0 %v2596
  %2976 = vmatpush.msra.mxu0 %v2593
  %2977 = vmatpush.msra.mxu0 %v2590
  %2978 = vmatpush.msra.mxu0 %v2587
  %2979 = vmatpush.msra.mxu0 %v2584
  %2980 = vmatpush.msra.mxu0 %v2581
  %2981 = vmatpush.msra.mxu0 %v2578
  %2982 = vmatpush.msra.mxu0 %v2575
  %2983 = vmatpush.msra.mxu0 %v2572
  %2984 = vmatpush.msra.mxu0 %v2569
  %2985 = vmatpush.msra.mxu0 %v2566
  %2986 = vmatpush.msra.mxu0 %v2563
  %2987 = vmatmul.f32.gmra.mxu0 %v2366
  %v2988 = vpop.f32.mrf.mxu0
  %v2989 = vadd.f32 %v2969, %v2988
  %2990 = vdwg.mxu0
  %2991 = vmatpush.msra.mxu0 %v2656
  %2992 = vmatpush.msra.mxu0 %v2653
  %2993 = vmatpush.msra.mxu0 %v2650
  %2994 = vmatpush.msra.mxu0 %v2647
  %2995 = vmatpush.msra.mxu0 %v2644
  %2996 = vmatpush.msra.mxu0 %v2641
  %2997 = vmatpush.msra.mxu0 %v2638
  %2998 = vmatpush.msra.mxu0 %v2635
  %2999 = vmatpush.msra.mxu0 %v2632
  %3000 = vmatpush.msra.mxu0 %v2629
  %3001 = vmatpush.msra.mxu0 %v2626
  %3002 = vmatpush.msra.mxu0 %v2623
  %3003 = vmatpush.msra.mxu0 %v2620
  %3004 = vmatpush.msra.mxu0 %v2617
  %3005 = vmatpush.msra.mxu0 %v2614
  %3006 = vmatpush.msra.mxu0 %v2611
  %3007 = vmatmul.f32.gmra.mxu0 %v2367
  %v3008 = vpop.f32.mrf.mxu0
  %v3009 = vadd.f32 %v2989, %v3008
  %3010 = vdwg.mxu0
  %3011 = vmatpush.msra.mxu0 %v2704
  %3012 = vmatpush.msra.mxu0 %v2701
  %3013 = vmatpush.msra.mxu0 %v2698
  %3014 = vmatpush.msra.mxu0 %v2695
  %3015 = vmatpush.msra.mxu0 %v2692
  %3016 = vmatpush.msra.mxu0 %v2689
  %3017 = vmatpush.msra.mxu0 %v2686
  %3018 = vmatpush.msra.mxu0 %v2683
  %3019 = vmatpush.msra.mxu0 %v2680
  %3020 = vmatpush.msra.mxu0 %v2677
  %3021 = vmatpush.msra.mxu0 %v2674
  %3022 = vmatpush.msra.mxu0 %v2671
  %3023 = vmatpush.msra.mxu0 %v2668
  %3024 = vmatpush.msra.mxu0 %v2665
  %3025 = vmatpush.msra.mxu0 %v2662
  %3026 = vmatpush.msra.mxu0 %v2659
  %3027 = vmatmul.f32.gmra.mxu0 %v2368
  %v3028 = vpop.f32.mrf.mxu0
  %v3029 = vadd.f32 %v3009, %v3028
  %3030 = vdwg.mxu0
  %3031 = vmatpush.msra.mxu0 0.0
  %3032 = vmatpush.msra.mxu0 0.0
  %3033 = vmatpush.msra.mxu0 0.0
  %3034 = vmatpush.msra.mxu0 0.0
  %3035 = vmatpush.msra.mxu0 0.0
  %3036 = vmatpush.msra.mxu0 0.0
  %3037 = vmatpush.msra.mxu0 0.0
  %3038 = vmatpush.msra.mxu0 0.0
  %3039 = vmatpush.msra.mxu0 0.0
  %3040 = vmatpush.msra.mxu0 0.0
  %3041 = vmatpush.msra.mxu0 0.0
  %3042 = vmatpush.msra.mxu0 0.0
  %3043 = vmatpush.msra.mxu0 0.0
  %3044 = vmatpush.msra.mxu0 0.0
  %3045 = vmatpush.msra.mxu0 0.0
  %3046 = vmatpush.msra.mxu0 %v2726
  %3047 = vmatmul.f32.gmra.mxu0 %v2719
  %v3048 = vpop.f32.mrf.mxu0
  %v3049 = vadd.f32 %v3029, %v3048
  %3050 = vdwg.mxu0
  %3051 = vmatpush.msra.mxu0 %v2417
  %3052 = vmatpush.msra.mxu0 %v2414
  %3053 = vmatpush.msra.mxu0 %v2411
  %3054 = vmatpush.msra.mxu0 %v2408
  %3055 = vmatpush.msra.mxu0 %v2405
  %3056 = vmatpush.msra.mxu0 %v2402
  %3057 = vmatpush.msra.mxu0 %v2399
  %3058 = vmatpush.msra.mxu0 %v2396
  %3059 = vmatpush.msra.mxu0 %v2393
  %3060 = vmatpush.msra.mxu0 %v2390
  %3061 = vmatpush.msra.mxu0 %v2387
  %3062 = vmatpush.msra.mxu0 %v2384
  %3063 = vmatpush.msra.mxu0 %v2381
  %3064 = vmatpush.msra.mxu0 %v2378
  %3065 = vmatpush.msra.mxu0 %v2375
  %3066 = vmatpush.msra.mxu0 %v2372
  %3067 = vmatmul.f32.gmra.mxu0 %v2362
  %v3068 = vpop.f32.mrf.mxu0
  %v3069 = vadd.f32 %v2713, %v3068
  %3070 = vdwg.mxu0
  %3071 = vmatpush.msra.mxu0 %v2465
  %3072 = vmatpush.msra.mxu0 %v2462
  %3073 = vmatpush.msra.mxu0 %v2459
  %3074 = vmatpush.msra.mxu0 %v2456
  %3075 = vmatpush.msra.mxu0 %v2453
  %3076 = vmatpush.msra.mxu0 %v2450
  %3077 = vmatpush.msra.mxu0 %v2447
  %3078 = vmatpush.msra.mxu0 %v2444
  %3079 = vmatpush.msra.mxu0 %v2441
  %3080 = vmatpush.msra.mxu0 %v2438
  %3081 = vmatpush.msra.mxu0 %v2435
  %3082 = vmatpush.msra.mxu0 %v2432
  %3083 = vmatpush.msra.mxu0 %v2429
  %3084 = vmatpush.msra.mxu0 %v2426
  %3085 = vmatpush.msra.mxu0 %v2423
  %3086 = vmatpush.msra.mxu0 %v2420
  %3087 = vmatmul.f32.gmra.mxu0 %v2363
  %v3088 = vpop.f32.mrf.mxu0
  %v3089 = vadd.f32 %v3069, %v3088
  %3090 = vdwg.mxu0
  %3091 = vmatpush.msra.mxu0 %v2513
  %3092 = vmatpush.msra.mxu0 %v2510
  %3093 = vmatpush.msra.mxu0 %v2507
  %3094 = vmatpush.msra.mxu0 %v2504
  %3095 = vmatpush.msra.mxu0 %v2501
  %3096 = vmatpush.msra.mxu0 %v2498
  %3097 = vmatpush.msra.mxu0 %v2495
  %3098 = vmatpush.msra.mxu0 %v2492
  %3099 = vmatpush.msra.mxu0 %v2489
  %3100 = vmatpush.msra.mxu0 %v2486
  %3101 = vmatpush.msra.mxu0 %v2483
  %3102 = vmatpush.msra.mxu0 %v2480
  %3103 = vmatpush.msra.mxu0 %v2477
  %3104 = vmatpush.msra.mxu0 %v2474
  %3105 = vmatpush.msra.mxu0 %v2471
  %3106 = vmatpush.msra.mxu0 %v2468
  %3107 = vmatmul.f32.gmra.mxu0 %v2364
  %v3108 = vpop.f32.mrf.mxu0
  %v3109 = vadd.f32 %v3089, %v3108
  %3110 = vdwg.mxu0
  %3111 = vmatpush.msra.mxu0 %v2561
  %3112 = vmatpush.msra.mxu0 %v2558
  %3113 = vmatpush.msra.mxu0 %v2555
  %3114 = vmatpush.msra.mxu0 %v2552
  %3115 = vmatpush.msra.mxu0 %v2549
  %3116 = vmatpush.msra.mxu0 %v2546
  %3117 = vmatpush.msra.mxu0 %v2543
  %3118 = vmatpush.msra.mxu0 %v2540
  %3119 = vmatpush.msra.mxu0 %v2537
  %3120 = vmatpush.msra.mxu0 %v2534
  %3121 = vmatpush.msra.mxu0 %v2531
  %3122 = vmatpush.msra.mxu0 %v2528
  %3123 = vmatpush.msra.mxu0 %v2525
  %3124 = vmatpush.msra.mxu0 %v2522
  %3125 = vmatpush.msra.mxu0 %v2519
  %3126 = vmatpush.msra.mxu0 %v2516
  %3127 = vmatmul.f32.gmra.mxu0 %v2365
  %v3128 = vpop.f32.mrf.mxu0
  %v3129 = vadd.f32 %v3109, %v3128
  %3130 = vdwg.mxu0
  %3131 = vmatpush.msra.mxu0 %v2609
  %3132 = vmatpush.msra.mxu0 %v2606
  %3133 = vmatpush.msra.mxu0 %v2603
  %3134 = vmatpush.msra.mxu0 %v2600
  %3135 = vmatpush.msra.mxu0 %v2597
  %3136 = vmatpush.msra.mxu0 %v2594
  %3137 = vmatpush.msra.mxu0 %v2591
  %3138 = vmatpush.msra.mxu0 %v2588
  %3139 = vmatpush.msra.mxu0 %v2585
  %3140 = vmatpush.msra.mxu0 %v2582
  %3141 = vmatpush.msra.mxu0 %v2579
  %3142 = vmatpush.msra.mxu0 %v2576
  %3143 = vmatpush.msra.mxu0 %v2573
  %3144 = vmatpush.msra.mxu0 %v2570
  %3145 = vmatpush.msra.mxu0 %v2567
  %3146 = vmatpush.msra.mxu0 %v2564
  %3147 = vmatmul.f32.gmra.mxu0 %v2366
  %v3148 = vpop.f32.mrf.mxu0
  %v3149 = vadd.f32 %v3129, %v3148
  %3150 = vdwg.mxu0
  %3151 = vmatpush.msra.mxu0 %v2657
  %3152 = vmatpush.msra.mxu0 %v2654
  %3153 = vmatpush.msra.mxu0 %v2651
  %3154 = vmatpush.msra.mxu0 %v2648
  %3155 = vmatpush.msra.mxu0 %v2645
  %3156 = vmatpush.msra.mxu0 %v2642
  %3157 = vmatpush.msra.mxu0 %v2639
  %3158 = vmatpush.msra.mxu0 %v2636
  %3159 = vmatpush.msra.mxu0 %v2633
  %3160 = vmatpush.msra.mxu0 %v2630
  %3161 = vmatpush.msra.mxu0 %v2627
  %3162 = vmatpush.msra.mxu0 %v2624
  %3163 = vmatpush.msra.mxu0 %v2621
  %3164 = vmatpush.msra.mxu0 %v2618
  %3165 = vmatpush.msra.mxu0 %v2615
  %3166 = vmatpush.msra.mxu0 %v2612
  %3167 = vmatmul.f32.gmra.mxu0 %v2367
  %v3168 = vpop.f32.mrf.mxu0
  %v3169 = vadd.f32 %v3149, %v3168
  %3170 = vdwg.mxu0
  %3171 = vmatpush.msra.mxu0 %v2705
  %3172 = vmatpush.msra.mxu0 %v2702
  %3173 = vmatpush.msra.mxu0 %v2699
  %3174 = vmatpush.msra.mxu0 %v2696
  %3175 = vmatpush.msra.mxu0 %v2693
  %3176 = vmatpush.msra.mxu0 %v2690
  %3177 = vmatpush.msra.mxu0 %v2687
  %3178 = vmatpush.msra.mxu0 %v2684
  %3179 = vmatpush.msra.mxu0 %v2681
  %3180 = vmatpush.msra.mxu0 %v2678
  %3181 = vmatpush.msra.mxu0 %v2675
  %3182 = vmatpush.msra.mxu0 %v2672
  %3183 = vmatpush.msra.mxu0 %v2669
  %3184 = vmatpush.msra.mxu0 %v2666
  %3185 = vmatpush.msra.mxu0 %v2663
  %3186 = vmatpush.msra.mxu0 %v2660
  %3187 = vmatmul.f32.gmra.mxu0 %v2368
  %v3188 = vpop.f32.mrf.mxu0
  %v3189 = vadd.f32 %v3169, %v3188
  %3190 = vdwg.mxu0
  %3191 = vmatpush.msra.mxu0 0.0
  %3192 = vmatpush.msra.mxu0 0.0
  %3193 = vmatpush.msra.mxu0 0.0
  %3194 = vmatpush.msra.mxu0 0.0
  %3195 = vmatpush.msra.mxu0 0.0
  %3196 = vmatpush.msra.mxu0 0.0
  %3197 = vmatpush.msra.mxu0 0.0
  %3198 = vmatpush.msra.mxu0 0.0
  %3199 = vmatpush.msra.mxu0 0.0
  %3200 = vmatpush.msra.mxu0 0.0
  %3201 = vmatpush.msra.mxu0 0.0
  %3202 = vmatpush.msra.mxu0 0.0
  %3203 = vmatpush.msra.mxu0 0.0
  %3204 = vmatpush.msra.mxu0 0.0
  %3205 = vmatpush.msra.mxu0 0.0
  %3206 = vmatpush.msra.mxu0 %v2729
  %3207 = vmatmul.f32.gmra.mxu0 %v2719
  %v3208 = vpop.f32.mrf.mxu0
  %v3209 = vadd.f32 %v3189, %v3208
  %3210 = vdwg.mxu0
  %v3211 = vmax.f32 %v2889, 0.0
  %v3212 = vmax.f32 %v3049, 0.0
  %v3213 = vmax.f32 %v3209, 0.0
  %v3214 = vld [vmem:[%s5] sm:$0xff]
  %v3215 = vld [vmem:[%s5 + $0x8] sm:$0xff]
  %v3216 = vld [vmem:[%s5 + $0x10] sm:$0xff]
  %v3217 = vld [vmem:[%s5 + $0x18] sm:$0xff]
  %v3218 = vld [vmem:[%s5 + $0x20] sm:$0xff]
  %v3219 = vld [vmem:[%s5 + $0x28] sm:$0xff]
  %v3220 = vld [vmem:[%s5 + $0x30] sm:$0xff]
  %v3221 = vld [vmem:[%s5 + $0x38] sm:$0xff]
  %v3222 = vld [vmem:[%s5 + $0x40] sm:$0xff]
  %v3223 = vld [vmem:[%s5 + $0x48] sm:$0xff]
  %v3224 = vld [vmem:[%s5 + $0x50] sm:$0xff]
  %v3225 = vld [vmem:[%s5 + $0x58] sm:$0xff]
  %v3226 = vld [vmem:[%s5 + $0x60] sm:$0xff]
  %v3227 = vld [vmem:[%s5 + $0x68] sm:$0xff]
  %v3228 = vld [vmem:[%s5 + $0x70] sm:$0xff]
  %v3229 = vld [vmem:[%s5 + $0x78] sm:$0xff]
  %v3230 = vld [vmem:[%s5 + $0x80] sm:$0xff]
  %v3231 = vld [vmem:[%s5 + $0x88] sm:$0xff]
  %v3232 = vld [vmem:[%s5 + $0x90] sm:$0xff]
  %v3233 = vld [vmem:[%s5 + $0x98] sm:$0xff]
  %v3234 = vld [vmem:[%s5 + $0xa0] sm:$0xff]
  %v3235 = vld [vmem:[%s5 + $0xa8] sm:$0xff]
  %v3236 = vld [vmem:[%s5 + $0xb0] sm:$0xff]
  %v3237 = vld [vmem:[%s5 + $0xb8] sm:$0xff]
  %v3238 = vld [vmem:[%s5 + $0xc0] sm:$0xff]
  %v3239 = vld [vmem:[%s5 + $0xc8] sm:$0xff]
  %v3240 = vld [vmem:[%s5 + $0xd0] sm:$0xff]
  %v3241 = vld [vmem:[%s5 + $0xd8] sm:$0xff]
  %v3242 = vld [vmem:[%s5 + $0xe0] sm:$0xff]
  %v3243 = vld [vmem:[%s5 + $0xe8] sm:$0xff]
  %v3244 = vld [vmem:[%s5 + $0xf0] sm:$0xff]
  %v3245 = vld [vmem:[%s5 + $0xf8] sm:$0xff]
  %v3246 = vld [vmem:[%s5 + $0x100] sm:$0xff]
  %v3247 = vld [vmem:[%s5 + $0x108] sm:$0xff]
  %v3248 = vld [vmem:[%s5 + $0x110] sm:$0xff]
  %v3249 = vld [vmem:[%s5 + $0x118] sm:$0xff]
  %v3250 = vld [vmem:[%s6] sm:$0x1]
  %v3252 = vperm.slane %v3250, 0
  %vm3254 = vcmask 261120
  %v3256 = vsel %vm3254, %v3213, 0
  %3258 = vmatpush.msra.mxu0 %v3229
  %3259 = vmatpush.msra.mxu0 %v3228
  %3260 = vmatpush.msra.mxu0 %v3227
  %3261 = vmatpush.msra.mxu0 %v3226
  %3262 = vmatpush.msra.mxu0 %v3225
  %3263 = vmatpush.msra.mxu0 %v3224
  %3264 = vmatpush.msra.mxu0 %v3223
  %3265 = vmatpush.msra.mxu0 %v3222
  %3266 = vmatpush.msra.mxu0 %v3221
  %3267 = vmatpush.msra.mxu0 %v3220
  %3268 = vmatpush.msra.mxu0 %v3219
  %3269 = vmatpush.msra.mxu0 %v3218
  %3270 = vmatpush.msra.mxu0 %v3217
  %3271 = vmatpush.msra.mxu0 %v3216
  %3272 = vmatpush.msra.mxu0 %v3215
  %3273 = vmatpush.msra.mxu0 %v3214
  %3274 = vmatmul.f32.gmra.mxu0 %v3211
  %v3275 = vpop.f32.mrf.mxu0
  %v3276 = vadd.f32 %v3252, %v3275
  %3277 = vdwg.mxu0
  %3278 = vmatpush.msra.mxu0 %v3245
  %3279 = vmatpush.msra.mxu0 %v3244
  %3280 = vmatpush.msra.mxu0 %v3243
  %3281 = vmatpush.msra.mxu0 %v3242
  %3282 = vmatpush.msra.mxu0 %v3241
  %3283 = vmatpush.msra.mxu0 %v3240
  %3284 = vmatpush.msra.mxu0 %v3239
  %3285 = vmatpush.msra.mxu0 %v3238
  %3286 = vmatpush.msra.mxu0 %v3237
  %3287 = vmatpush.msra.mxu0 %v3236
  %3288 = vmatpush.msra.mxu0 %v3235
  %3289 = vmatpush.msra.mxu0 %v3234
  %3290 = vmatpush.msra.mxu0 %v3233
  %3291 = vmatpush.msra.mxu0 %v3232
  %3292 = vmatpush.msra.mxu0 %v3231
  %3293 = vmatpush.msra.mxu0 %v3230
  %3294 = vmatmul.f32.gmra.mxu0 %v3212
  %v3295 = vpop.f32.mrf.mxu0
  %v3296 = vadd.f32 %v3276, %v3295
  %3297 = vdwg.mxu0
  %3298 = vmatpush.msra.mxu0 0.0
  %3299 = vmatpush.msra.mxu0 0.0
  %3300 = vmatpush.msra.mxu0 0.0
  %3301 = vmatpush.msra.mxu0 0.0
  %3302 = vmatpush.msra.mxu0 0.0
  %3303 = vmatpush.msra.mxu0 0.0
  %3304 = vmatpush.msra.mxu0 0.0
  %3305 = vmatpush.msra.mxu0 0.0
  %3306 = vmatpush.msra.mxu0 0.0
  %3307 = vmatpush.msra.mxu0 0.0
  %3308 = vmatpush.msra.mxu0 0.0
  %3309 = vmatpush.msra.mxu0 0.0
  %3310 = vmatpush.msra.mxu0 %v3249
  %3311 = vmatpush.msra.mxu0 %v3248
  %3312 = vmatpush.msra.mxu0 %v3247
  %3313 = vmatpush.msra.mxu0 %v3246
  %3314 = vmatmul.f32.gmra.mxu0 %v3256
  %v3315 = vpop.f32.mrf.mxu0
  %v3316 = vadd.f32 %v3296, %v3315
  %3317 = vdwg.mxu0
  %v3318 = vmax.f32 %v3316, 0.0
  %v3319 = vld [vmem:[%s7] sm:$0xff]
  %v3320 = vld [vmem:[%s7 + $0x8] sm:$0xff]
  %v3321 = vld [vmem:[%s7 + $0x10] sm:$0xff]
  %v3322 = vld [vmem:[%s7 + $0x18] sm:$0xff]
  %v3323 = vld [vmem:[%s7 + $0x20] sm:$0xff]
  %v3324 = vld [vmem:[%s7 + $0x28] sm:$0xff]
  %v3325 = vld [vmem:[%s7 + $0x30] sm:$0xff]
  %v3326 = vld [vmem:[%s7 + $0x38] sm:$0xff]
  %v3327 = vld [vmem:[%s8] sm:$0x1]
  %v3329 = vperm.slane %v3327, 0
  %vm3331 = vcmask 523264
  %v3333 = vsel %vm3331, %v3318, 0
  %3335 = vmatpush.msra.mxu0 0.0
  %3336 = vmatpush.msra.mxu0 0.0
  %3337 = vmatpush.msra.mxu0 0.0
  %3338 = vmatpush.msra.mxu0 0.0
  %3339 = vmatpush.msra.mxu0 0.0
  %3340 = vmatpush.msra.mxu0 0.0
  %3341 = vmatpush.msra.mxu0 0.0
  %3342 = vmatpush.msra.mxu0 0.0
  %3343 = vmatpush.msra.mxu0 %v3326
  %3344 = vmatpush.msra.mxu0 %v3325
  %3345 = vmatpush.msra.mxu0 %v3324
  %3346 = vmatpush.msra.mxu0 %v3323
  %3347 = vmatpush.msra.mxu0 %v3322
  %3348 = vmatpush.msra.mxu0 %v3321
  %3349 = vmatpush.msra.mxu0 %v3320
  %3350 = vmatpush.msra.mxu0 %v3319
  %3351 = vmatmul.f32.gmra.mxu0 %v3333
  %v3352 = vpop.f32.mrf.mxu0
  %v3353 = vadd.f32 %v3329, %v3352
  %3354 = vdwg.mxu0
  %3355 = vst [vmem:[%s9] sm:$0xff] %v3353
  // Predicated region
  $region38: #{atari_net_forward.1} parent=0 // pred_check
    _
  $region39: #{atari_net_forward.1} parent=0 // pred_check_branch
    %3357 = sbr.rel (0) target = $region41
  $region40: #{atari_net_forward.1} parent=0 // pred_region
    _
  $region41: #{atari_net_forward.1} parent=0 // pred_fallthru
    _
  // Predicated region
  $region42: #{atari_net_forward.1} parent=0 // pred_check
    _
  $region43: #{atari_net_forward.1} parent=0 // pred_check_branch
    %3359 = sbr.rel (0) target = $region45
  $region44: #{atari_net_forward.1} parent=0 // pred_region
    _
  $region45: #{atari_net_forward.1} parent=0 // pred_fallthru
    _

</llo_original>
